<compile_context>
chip_gen: v7x
topology: tpu7x:2x2x1
jax: 0.10.0
libtpu: 0.0.40
codegen_flags: <defaults>
</compile_context>

<pallas_src>
import jax
import jax.numpy as jnp
from jax import lax
from jax.experimental import pallas as pl
from jax.experimental.pallas import tpu as pltpu

# ---- small shapes consistent with the module's params dict ----
N = 2                 # batch
C = 8                 # num_channels == num_filters (decoder keeps channel count)
HI = WI = 8           # spatial size of low-res input x (pre-unpool)
POOL = 2              # params['pool'] == params['stride_pool']
HO, WO = HI * POOL, WI * POOL     # 16 x 16 after MaxUnpool2d
KH = KW = 5           # kernel_h, kernel_w
PAD = (KH - 1) // 2   # 'same' padding
EPS = 1e-5

NR = N * HO           # 32 rows (sublane axis)
NL = WO * C           # 128 lanes (== vreg lane width)
NR_LO = N * HI        # 16
NL_LO = WI * C        # 64
LOG2_C = C.bit_length() - 1   # C is a power of 2


def _decoder_block_kernel(xi_ref, skip_ref, er_ref, ec_ref, w_hbm, g_ref, b_ref,
                          alpha_ref, out_ref, wbuf, wsem):
    # Kick off all four conv-weight slab DMAs (HBM -> VMEM, bf16) immediately;
    # they overlap the unpool / maxout / activation prep below.
    for i in range(4):
        pltpu.make_async_copy(w_hbm.at[i], wbuf.at[i], wsem.at[i]).start()

    a = alpha_ref[0]                                    # PReLU weight (SMEM scalar)

    rows = lax.broadcasted_iota(jnp.int32, (NR, NL), 0)
    lanes = lax.broadcasted_iota(jnp.int32, (NR, NL), 1)
    h_idx = jnp.bitwise_and(rows, HO - 1)               # row within image (HO pow2)
    w_idx = jnp.right_shift(lanes, LOG2_C)              # W position of this lane

    # ---- fused MaxUnpool2d(2,2): NN-upsample [x | window offset] via exact
    # 0/1 matmuls, then recover the unpooled map with an offset compare ----
    t = jnp.dot(er_ref[...], xi_ref[...], preferred_element_type=jnp.float32)
    up = jnp.dot(t.astype(jnp.bfloat16), ec_ref[...],
                 preferred_element_type=jnp.float32)    # (NR, 2*NL)
    x_up, off_up = up[:, :NL], up[:, NL:]
    toff = ((h_idx & (POOL - 1)) * POOL + (w_idx & (POOL - 1))).astype(jnp.float32)
    unpool = jnp.where(off_up == toff, x_up, 0.0)

    # decoder maxout with the encoder skip connection
    cm = jnp.maximum(unpool, skip_ref[...])

    # per-kh row-validity masks: computed ONCE, reused by all four convs
    hmask = {dh: jnp.logical_and(h_idx + dh >= 0, h_idx + dh < HO)
             for dh in range(-PAD, PAD + 1) if dh != 0}

    def prelu(v):
        return jnp.where(v > 0, v, a * v)

    def conv_input(p):
        # Stack the 5 kh taps (sublane rolls + row mask) along lanes to
        # (NR, KH*NL); the kw taps and W-edge padding live in the banded
        # weight, so each conv is one K=640 MXU matmul.
        parts = []
        for kh in range(KH):
            dh = kh - PAD
            if dh == 0:
                parts.append(p)
            else:
                shifted = pltpu.roll(p, (-dh) % NR, 0)
                parts.append(jnp.where(hmask[dh], shifted, 0.0))
        return jnp.concatenate(parts, axis=1).astype(jnp.bfloat16)

    inv_m = 1.0 / float(N * HO * WO)

    def bn(v, i):
        # training-mode BatchNorm2d, single-pass stats (biased variance);
        # sum and sum-of-squares share one stacked (2, NL) lane roll-fold.
        st = jnp.concatenate([jnp.sum(v, axis=0, keepdims=True),
                              jnp.sum(v * v, axis=0, keepdims=True)], axis=0)
        g = WO // 2
        while g >= 1:                                   # exact per-channel lane fold
            st = st + pltpu.roll(st, C * g, 1)
            g //= 2
        mu = st[0:1] * inv_m
        var = st[1:2] * inv_m - mu * mu
        scale = g_ref[i] * lax.rsqrt(var + EPS)
        return (v - mu) * scale + b_ref[i]

    # CompetitiveDenseBlock (outblock=False).  Conv bias omitted: it is
    # cancelled exactly by the BN mean subtraction.
    prev = cm
    for i in range(4):
        pltpu.make_async_copy(w_hbm.at[i], wbuf.at[i], wsem.at[i]).wait()
        y = jnp.dot(conv_input(prelu(prev)), wbuf[i],
                    preferred_element_type=jnp.float32)
        yn = bn(y, i)
        prev = yn if i == 3 else jnp.maximum(prev, yn)
    out_ref[...] = prev


def _pack_conv_weights(w):
    # (4, Cout, Cin, KH, KW) -> (4, KH*W*Cin, W*Cout) stacked banded matrices:
    #   entry [conv, kh*NL + w_in*C+ci, w_out*C+co] = w[conv, co, ci, kh, w_in-w_out+PAD]
    # with zeros where the kw offset falls outside the kernel support (this also
    # implements the W-edge zero padding of the 'same' convolution).
    wt = jnp.transpose(w, (0, 3, 4, 2, 1))                       # (4, KH, KW, Cin, Cout)
    kw_idx = jnp.arange(WO)[:, None] - jnp.arange(WO)[None, :] + PAD
    kw_ok = (kw_idx >= 0) & (kw_idx < KW)
    wg = wt[:, :, jnp.clip(kw_idx, 0, KW - 1)]                   # (4, KH, W, W, Cin, Cout)
    wg = jnp.where(kw_ok[None, None, :, :, None, None], wg, 0.0)
    return jnp.transpose(wg, (0, 1, 2, 4, 3, 5)).reshape(4, KH * NL, NL)


def _upsample_operators():
    # 0/1 nearest-neighbour upsample matrices (exact under bf16 MXU rounding):
    #   er (N*HO, N*HI): row r = n*HO+ho picks input row n*HI + ho//POOL
    #   ec (WI*C, WO*C): lane wo*C+c picks input lane (wo//POOL)*C + c
    # ec_blk is block-diagonal so x and the window offset upsample in one matmul.
    r = jnp.arange(NR)
    j = jnp.arange(NR_LO)
    er = ((r[:, None] // HO == j[None, :] // HI) &
          ((r[:, None] % HO) // POOL == j[None, :] % HI)).astype(jnp.float32)
    li = jnp.arange(NL_LO)
    lo = jnp.arange(NL)
    ec = ((li[:, None] % C == lo[None, :] % C) &
          (li[:, None] // C == (lo[None, :] // C) // POOL)).astype(jnp.float32)
    ec_blk = jnp.zeros((2 * NL_LO, 2 * NL), jnp.float32)
    ec_blk = ec_blk.at[:NL_LO, :NL].set(ec).at[NL_LO:, NL:].set(ec)
    return er.astype(jnp.bfloat16), ec_blk.astype(jnp.bfloat16)


def prepare_params(params):
    # One-time packing (off the per-call path): banded bf16 conv weights,
    # upsample operators, and per-lane gamma/beta tiles.  Conv bias is dropped
    # here because training-mode BN cancels it exactly.
    er, ec_blk = _upsample_operators()
    tile = lambda v: jnp.tile(v, (1, WO)).reshape(4, 1, NL)      # (4,C) -> (4,1,W*C)
    return {
        "wfull": _pack_conv_weights(params["w"]).astype(jnp.bfloat16),
        "er": er,
        "ec": ec_blk,
        "gamma": tile(params["gamma"]),
        "beta": tile(params["beta"]),
        "alpha": params["alpha"],
    }


@jax.jit
def competitive_decoder_block(x, out_block, indices, packed):
    # x:        (N, C, HI, WI)  NCHW, low-res feature map from lower block
    # out_block:(N, C, HO, WO)  NCHW, encoder skip connection
    # indices:  (N, C, HI, WI)  int32 flat indices into the HO*WO plane
    # packed:   output of prepare_params(params)

    # lane-dense layout: rows = N*H on sublanes, lanes = W*C (== 128 here)
    x_l = jnp.transpose(x, (0, 2, 3, 1)).reshape(NR_LO, NL_LO)
    # within-window (2x2) offset of the pooled max: exact in bf16 at any size
    row_off = (indices // WO) % POOL
    col_off = (indices % WO) % POOL
    off_l = jnp.transpose((row_off * POOL + col_off).astype(jnp.float32),
                          (0, 2, 3, 1)).reshape(NR_LO, NL_LO)
    xi = jnp.concatenate([x_l, off_l], axis=1).astype(jnp.bfloat16)   # (16, 128)
    skip = jnp.transpose(out_block, (0, 2, 3, 1)).reshape(NR, NL)

    vmem = pl.BlockSpec(memory_space=pltpu.MemorySpace.VMEM)
    # TODO(synk): at production FastSurfer sizes (C~64-71, H=W up to 256) the
    # banded kw weights must become roll+mask (O((W*C)^2) won't fit VMEM), the
    # kernel needs a grid over batch/row tiles with
    # dimension_semantics=("parallel", ...) sized against v7x's 64 MiB VMEM /
    # 2 TensorCores, and the decoder should stay lane-dense between blocks.
    out_flat = pl.pallas_call(
        _decoder_block_kernel,
        out_shape=jax.ShapeDtypeStruct((NR, NL), jnp.float32),
        in_specs=[vmem, vmem, vmem, vmem,
                  pl.BlockSpec(memory_space=pl.ANY),                # weights stay in HBM
                  vmem, vmem,
                  pl.BlockSpec(memory_space=pltpu.MemorySpace.SMEM)],
        out_specs=vmem,
        scratch_shapes=[pltpu.VMEM((4, KH * NL, NL), jnp.bfloat16),  # weight slabs
                        pltpu.SemaphoreType.DMA((4,))],
    )(xi, skip, packed["er"], packed["ec"], packed["wfull"],
      packed["gamma"], packed["beta"], packed["alpha"])

    return jnp.transpose(out_flat.reshape(N, HO, WO, C), (0, 3, 1, 2))   # back to NCHW


# ----------------------------- reference (pure JAX, NCHW) -----------------------------
def max_unpool2d_nchw(x, indices, ho, wo):
    # nn.MaxUnpool2d(2, 2): scatter x into a zero plane at the recorded indices.
    n, c, hi, wi = x.shape
    flat = jnp.zeros((n, c, ho * wo), x.dtype)
    idx = indices.reshape(n, c, hi * wi)
    vals = x.reshape(n, c, hi * wi)
    nn_ = jnp.arange(n)[:, None, None]
    cc = jnp.arange(c)[None, :, None]
    flat = flat.at[nn_, cc, idx].set(vals)
    return flat.reshape(n, c, ho, wo)


def reference_forward(x, out_block, indices, params):
    """Pure-JAX NCHW reference mirroring the PyTorch forward (f32 convs, with bias)."""
    w, cb, gamma, beta, alpha = (params[k] for k in ("w", "cb", "gamma", "beta", "alpha"))
    a = alpha[0]
    prelu = lambda v: jnp.where(v > 0, v, a * v)

    def conv(v, i):
        y = lax.conv_general_dilated(v, w[i], (1, 1), [(PAD, PAD), (PAD, PAD)],
                                     dimension_numbers=("NCHW", "OIHW", "NCHW"),
                                     precision=lax.Precision.HIGHEST)
        return y + cb[i][None, :, None, None]

    def bn(v, i):
        mu = jnp.mean(v, axis=(0, 2, 3), keepdims=True)
        var = jnp.mean((v - mu) ** 2, axis=(0, 2, 3), keepdims=True)
        return ((v - mu) / jnp.sqrt(var + EPS) * gamma[i][None, :, None, None]
                + beta[i][None, :, None, None])

    up = max_unpool2d_nchw(x, indices, HO, WO)
    cm = jnp.maximum(up, out_block)
    x0 = conv(prelu(cm), 0); x1m = jnp.maximum(cm, bn(x0, 0))
    x1 = conv(prelu(x1m), 1); x2m = jnp.maximum(bn(x1, 1), x1m)
    x2 = conv(prelu(x2m), 2); x3m = jnp.maximum(bn(x2, 2), x2m)
    out = conv(prelu(x3m), 3)
    return bn(out, 3)


if __name__ == "__main__":
    key = jax.random.PRNGKey(0)
    ks = jax.random.split(key, 8)

    # Deterministic synthetic parameters (shapes follow the module __init__).
    params = {
        "w": jax.random.normal(ks[0], (4, C, C, KH, KW), jnp.float32)
             * (1.0 / (C * KH * KW) ** 0.5),
        "cb": 0.1 * jax.random.normal(ks[1], (4, C), jnp.float32),
        "gamma": 1.0 + 0.1 * jax.random.normal(ks[2], (4, C), jnp.float32),
        "beta": 0.1 * jax.random.normal(ks[3], (4, C), jnp.float32),
        "alpha": jnp.array([0.25], jnp.float32),    # nn.PReLU() default init
    }
    packed = prepare_params(params)                 # one-time, off the per-call path

    # Inputs.
    x = jax.random.normal(ks[4], (N, C, HI, WI), jnp.float32)
    out_block = jax.random.normal(ks[5], (N, C, HO, WO), jnp.float32)

    # Valid MaxPool2d(2,2) indices: one winner per 2x2 window of the HOxWO plane.
    r = jax.random.randint(ks[6], (N, C, HI, WI), 0, POOL * POOL)
    hh = jnp.arange(HI)[None, None, :, None]
    ww = jnp.arange(WI)[None, None, None, :]
    indices = ((POOL * hh + r // POOL) * WO + (POOL * ww + r % POOL)).astype(jnp.int32)

    out = competitive_decoder_block(x, out_block, indices, packed)
    out = jax.block_until_ready(out)
    assert out.shape == (N, C, HO, WO) and out.dtype == jnp.float32

    ref = reference_forward(x, out_block, indices, params)
    max_err = float(jnp.max(jnp.abs(out - ref)))
    # bf16 MXU inputs in the kernel vs f32 reference convs: expected deviation
    # is a fraction of a percent of the ~unit-scale outputs.
    if not (max_err < 5e-2):
        raise SystemExit(f"Pallas kernel mismatch vs reference: max abs err={max_err}")

    print("KERNEL_OK")
</pallas_src>

<mosaic_0001>
module attributes {stable_mosaic.version = 11 : i64} {
  func.func @_decoder_block_kernel(%arg0: memref<16x128xbf16, #tpu.memory_space<vmem>>, %arg1: memref<32x128xf32, #tpu.memory_space<vmem>>, %arg2: memref<32x16xbf16, #tpu.memory_space<vmem>>, %arg3: memref<128x256xbf16, #tpu.memory_space<vmem>>, %arg4: memref<4x640x128xbf16, #tpu.memory_space<any>>, %arg5: memref<4x1x128xf32, #tpu.memory_space<vmem>>, %arg6: memref<4x1x128xf32, #tpu.memory_space<vmem>>, %arg7: memref<1xf32, #tpu.memory_space<smem>>, %arg8: memref<32x128xf32, #tpu.memory_space<vmem>>, %arg9: memref<4x640x128xbf16, #tpu.memory_space<vmem>>, %arg10: memref<4x!tpu.dma_semaphore, #tpu.memory_space<semaphore_mem>>) attributes {dimension_semantics = [], scalar_prefetch = 0 : i64, scratch_operands = 2 : i64, tpu.core_type = #tpu.core_type<tc>} {
    %c0_i32 = arith.constant 0 : i32
    %c0_i32_0 = arith.constant 0 : i32
    %c0_i32_1 = arith.constant 0 : i32
    %c0_i32_2 = arith.constant 0 : i32
    %c0_i32_3 = arith.constant 0 : i32
    %0 = tpu.memref_slice %arg4[%c0_i32, %c0_i32_2, %c0_i32_3] : memref<4x640x128xbf16, #tpu.memory_space<any>> -> memref<1x640x128xbf16, #tpu.memory_space<any>>
    %1 = tpu.memref_squeeze %0 : memref<1x640x128xbf16, #tpu.memory_space<any>> -> memref<640x128xbf16, #tpu.memory_space<any>>
    %c0_i32_4 = arith.constant 0 : i32
    %c0_i32_5 = arith.constant 0 : i32
    %2 = tpu.memref_slice %arg9[%c0_i32_0, %c0_i32_4, %c0_i32_5] : memref<4x640x128xbf16, #tpu.memory_space<vmem>> -> memref<1x640x128xbf16, #tpu.memory_space<vmem>>
    %3 = tpu.memref_squeeze %2 : memref<1x640x128xbf16, #tpu.memory_space<vmem>> -> memref<640x128xbf16, #tpu.memory_space<vmem>>
    %4 = tpu.memref_slice %arg10[%c0_i32_1] : memref<4x!tpu.dma_semaphore, #tpu.memory_space<semaphore_mem>> -> memref<1x!tpu.dma_semaphore, #tpu.memory_space<semaphore_mem>>
    %5 = tpu.memref_squeeze %4 : memref<1x!tpu.dma_semaphore, #tpu.memory_space<semaphore_mem>> -> memref<!tpu.dma_semaphore, #tpu.memory_space<semaphore_mem>>
    tpu.enqueue_dma source(%1 : memref<640x128xbf16, #tpu.memory_space<any>>) target(%3 : memref<640x128xbf16, #tpu.memory_space<vmem>>) target_semaphore(%5 : memref<!tpu.dma_semaphore, #tpu.memory_space<semaphore_mem>>)
    %c1_i32 = arith.constant 1 : i32
    %c1_i32_6 = arith.constant 1 : i32
    %c1_i32_7 = arith.constant 1 : i32
    %c0_i32_8 = arith.constant 0 : i32
    %c0_i32_9 = arith.constant 0 : i32
    %6 = tpu.memref_slice %arg4[%c1_i32, %c0_i32_8, %c0_i32_9] : memref<4x640x128xbf16, #tpu.memory_space<any>> -> memref<1x640x128xbf16, #tpu.memory_space<any>>
    %7 = tpu.memref_squeeze %6 : memref<1x640x128xbf16, #tpu.memory_space<any>> -> memref<640x128xbf16, #tpu.memory_space<any>>
    %c0_i32_10 = arith.constant 0 : i32
    %c0_i32_11 = arith.constant 0 : i32
    %8 = tpu.memref_slice %arg9[%c1_i32_6, %c0_i32_10, %c0_i32_11] : memref<4x640x128xbf16, #tpu.memory_space<vmem>> -> memref<1x640x128xbf16, #tpu.memory_space<vmem>>
    %9 = tpu.memref_squeeze %8 : memref<1x640x128xbf16, #tpu.memory_space<vmem>> -> memref<640x128xbf16, #tpu.memory_space<vmem>>
    %10 = tpu.memref_slice %arg10[%c1_i32_7] : memref<4x!tpu.dma_semaphore, #tpu.memory_space<semaphore_mem>> -> memref<1x!tpu.dma_semaphore, #tpu.memory_space<semaphore_mem>>
    %11 = tpu.memref_squeeze %10 : memref<1x!tpu.dma_semaphore, #tpu.memory_space<semaphore_mem>> -> memref<!tpu.dma_semaphore, #tpu.memory_space<semaphore_mem>>
    tpu.enqueue_dma source(%7 : memref<640x128xbf16, #tpu.memory_space<any>>) target(%9 : memref<640x128xbf16, #tpu.memory_space<vmem>>) target_semaphore(%11 : memref<!tpu.dma_semaphore, #tpu.memory_space<semaphore_mem>>)
    %c2_i32 = arith.constant 2 : i32
    %c2_i32_12 = arith.constant 2 : i32
    %c2_i32_13 = arith.constant 2 : i32
    %c0_i32_14 = arith.constant 0 : i32
    %c0_i32_15 = arith.constant 0 : i32
    %12 = tpu.memref_slice %arg4[%c2_i32, %c0_i32_14, %c0_i32_15] : memref<4x640x128xbf16, #tpu.memory_space<any>> -> memref<1x640x128xbf16, #tpu.memory_space<any>>
    %13 = tpu.memref_squeeze %12 : memref<1x640x128xbf16, #tpu.memory_space<any>> -> memref<640x128xbf16, #tpu.memory_space<any>>
    %c0_i32_16 = arith.constant 0 : i32
    %c0_i32_17 = arith.constant 0 : i32
    %14 = tpu.memref_slice %arg9[%c2_i32_12, %c0_i32_16, %c0_i32_17] : memref<4x640x128xbf16, #tpu.memory_space<vmem>> -> memref<1x640x128xbf16, #tpu.memory_space<vmem>>
    %15 = tpu.memref_squeeze %14 : memref<1x640x128xbf16, #tpu.memory_space<vmem>> -> memref<640x128xbf16, #tpu.memory_space<vmem>>
    %16 = tpu.memref_slice %arg10[%c2_i32_13] : memref<4x!tpu.dma_semaphore, #tpu.memory_space<semaphore_mem>> -> memref<1x!tpu.dma_semaphore, #tpu.memory_space<semaphore_mem>>
    %17 = tpu.memref_squeeze %16 : memref<1x!tpu.dma_semaphore, #tpu.memory_space<semaphore_mem>> -> memref<!tpu.dma_semaphore, #tpu.memory_space<semaphore_mem>>
    tpu.enqueue_dma source(%13 : memref<640x128xbf16, #tpu.memory_space<any>>) target(%15 : memref<640x128xbf16, #tpu.memory_space<vmem>>) target_semaphore(%17 : memref<!tpu.dma_semaphore, #tpu.memory_space<semaphore_mem>>)
    %c3_i32 = arith.constant 3 : i32
    %c3_i32_18 = arith.constant 3 : i32
    %c3_i32_19 = arith.constant 3 : i32
    %c0_i32_20 = arith.constant 0 : i32
    %c0_i32_21 = arith.constant 0 : i32
    %18 = tpu.memref_slice %arg4[%c3_i32, %c0_i32_20, %c0_i32_21] : memref<4x640x128xbf16, #tpu.memory_space<any>> -> memref<1x640x128xbf16, #tpu.memory_space<any>>
    %19 = tpu.memref_squeeze %18 : memref<1x640x128xbf16, #tpu.memory_space<any>> -> memref<640x128xbf16, #tpu.memory_space<any>>
    %c0_i32_22 = arith.constant 0 : i32
    %c0_i32_23 = arith.constant 0 : i32
    %20 = tpu.memref_slice %arg9[%c3_i32_18, %c0_i32_22, %c0_i32_23] : memref<4x640x128xbf16, #tpu.memory_space<vmem>> -> memref<1x640x128xbf16, #tpu.memory_space<vmem>>
    %21 = tpu.memref_squeeze %20 : memref<1x640x128xbf16, #tpu.memory_space<vmem>> -> memref<640x128xbf16, #tpu.memory_space<vmem>>
    %22 = tpu.memref_slice %arg10[%c3_i32_19] : memref<4x!tpu.dma_semaphore, #tpu.memory_space<semaphore_mem>> -> memref<1x!tpu.dma_semaphore, #tpu.memory_space<semaphore_mem>>
    %23 = tpu.memref_squeeze %22 : memref<1x!tpu.dma_semaphore, #tpu.memory_space<semaphore_mem>> -> memref<!tpu.dma_semaphore, #tpu.memory_space<semaphore_mem>>
    tpu.enqueue_dma source(%19 : memref<640x128xbf16, #tpu.memory_space<any>>) target(%21 : memref<640x128xbf16, #tpu.memory_space<vmem>>) target_semaphore(%23 : memref<!tpu.dma_semaphore, #tpu.memory_space<semaphore_mem>>)
    %c0 = arith.constant 0 : index
    %24 = memref.load %arg7[%c0] : memref<1xf32, #tpu.memory_space<smem>>
    %25 = tpu.iota {dimensions = array<i32: 0>} : vector<32x128xi32>
    %26 = tpu.iota {dimensions = array<i32: 1>} : vector<32x128xi32>
    %c15_i32 = arith.constant 15 : i32
    %27 = vector.broadcast %c15_i32 : i32 to vector<32x128xi32>
    %28 = arith.andi %25, %27 : vector<32x128xi32>
    %c3_i32_24 = arith.constant 3 : i32
    %29 = vector.broadcast %c3_i32_24 : i32 to vector<32x128xi32>
    %30 = arith.shrsi %26, %29 : vector<32x128xi32>
    %c0_25 = arith.constant 0 : index
    %c0_26 = arith.constant 0 : index
    %31 = vector.load %arg2[%c0_25, %c0_26] : memref<32x16xbf16, #tpu.memory_space<vmem>>, vector<32x16xbf16>
    %c0_27 = arith.constant 0 : index
    %c0_28 = arith.constant 0 : index
    %32 = vector.load %arg0[%c0_27, %c0_28] : memref<16x128xbf16, #tpu.memory_space<vmem>>, vector<16x128xbf16>
    %cst = arith.constant dense<0.000000e+00> : vector<32x128xf32>
    %33 = tpu.matmul %31, %32, %cst {dimension_numbers = #tpu.dot_dimension_numbers<[1], [0], [0], [1], [0, 0, 1, 1], [], []>} : vector<32x16xbf16>, vector<16x128xbf16>, vector<32x128xf32> -> vector<32x128xf32>
    %34 = arith.truncf %33 : vector<32x128xf32> to vector<32x128xbf16>
    %c0_29 = arith.constant 0 : index
    %c0_30 = arith.constant 0 : index
    %35 = vector.load %arg3[%c0_29, %c0_30] : memref<128x256xbf16, #tpu.memory_space<vmem>>, vector<128x256xbf16>
    %cst_31 = arith.constant dense<0.000000e+00> : vector<32x256xf32>
    %36 = tpu.matmul %34, %35, %cst_31 {dimension_numbers = #tpu.dot_dimension_numbers<[1], [0], [0], [1], [0, 0, 1, 1], [], []>} : vector<32x128xbf16>, vector<128x256xbf16>, vector<32x256xf32> -> vector<32x256xf32>
    %37 = vector.extract_strided_slice %36 {offsets = [0, 0], sizes = [32, 128], strides = [1, 1]} : vector<32x256xf32> to vector<32x128xf32>
    %38 = vector.extract_strided_slice %36 {offsets = [0, 128], sizes = [32, 128], strides = [1, 1]} : vector<32x256xf32> to vector<32x128xf32>
    %c1_i32_32 = arith.constant 1 : i32
    %39 = vector.broadcast %c1_i32_32 : i32 to vector<32x128xi32>
    %40 = arith.andi %28, %39 : vector<32x128xi32>
    %c2_i32_33 = arith.constant 2 : i32
    %41 = vector.broadcast %c2_i32_33 : i32 to vector<32x128xi32>
    %42 = arith.muli %40, %41 : vector<32x128xi32>
    %c1_i32_34 = arith.constant 1 : i32
    %43 = vector.broadcast %c1_i32_34 : i32 to vector<32x128xi32>
    %44 = arith.andi %30, %43 : vector<32x128xi32>
    %45 = arith.addi %42, %44 : vector<32x128xi32>
    %46 = arith.sitofp %45 : vector<32x128xi32> to vector<32x128xf32>
    %47 = arith.cmpf oeq, %38, %46 : vector<32x128xf32>
    %cst_35 = arith.constant 0.000000e+00 : f32
    %48 = vector.broadcast %cst_35 : f32 to vector<32x128xf32>
    %49 = arith.select %47, %37, %48 : vector<32x128xi1>, vector<32x128xf32>
    %c0_36 = arith.constant 0 : index
    %c0_37 = arith.constant 0 : index
    %50 = vector.load %arg1[%c0_36, %c0_37] : memref<32x128xf32, #tpu.memory_space<vmem>>, vector<32x128xf32>
    %51 = arith.maximumf %49, %50 : vector<32x128xf32>
    %c-2_i32 = arith.constant -2 : i32
    %52 = vector.broadcast %c-2_i32 : i32 to vector<32x128xi32>
    %53 = arith.addi %28, %52 : vector<32x128xi32>
    %c0_i32_38 = arith.constant 0 : i32
    %54 = vector.broadcast %c0_i32_38 : i32 to vector<32x128xi32>
    %55 = arith.cmpi sge, %53, %54 : vector<32x128xi32>
    %c-2_i32_39 = arith.constant -2 : i32
    %56 = vector.broadcast %c-2_i32_39 : i32 to vector<32x128xi32>
    %57 = arith.addi %28, %56 : vector<32x128xi32>
    %c16_i32 = arith.constant 16 : i32
    %58 = vector.broadcast %c16_i32 : i32 to vector<32x128xi32>
    %59 = arith.cmpi slt, %57, %58 : vector<32x128xi32>
    %60 = arith.andi %55, %59 : vector<32x128xi1>
    %c-1_i32 = arith.constant -1 : i32
    %61 = vector.broadcast %c-1_i32 : i32 to vector<32x128xi32>
    %62 = arith.addi %28, %61 : vector<32x128xi32>
    %c0_i32_40 = arith.constant 0 : i32
    %63 = vector.broadcast %c0_i32_40 : i32 to vector<32x128xi32>
    %64 = arith.cmpi sge, %62, %63 : vector<32x128xi32>
    %c-1_i32_41 = arith.constant -1 : i32
    %65 = vector.broadcast %c-1_i32_41 : i32 to vector<32x128xi32>
    %66 = arith.addi %28, %65 : vector<32x128xi32>
    %c16_i32_42 = arith.constant 16 : i32
    %67 = vector.broadcast %c16_i32_42 : i32 to vector<32x128xi32>
    %68 = arith.cmpi slt, %66, %67 : vector<32x128xi32>
    %69 = arith.andi %64, %68 : vector<32x128xi1>
    %c1_i32_43 = arith.constant 1 : i32
    %70 = vector.broadcast %c1_i32_43 : i32 to vector<32x128xi32>
    %71 = arith.addi %28, %70 : vector<32x128xi32>
    %c0_i32_44 = arith.constant 0 : i32
    %72 = vector.broadcast %c0_i32_44 : i32 to vector<32x128xi32>
    %73 = arith.cmpi sge, %71, %72 : vector<32x128xi32>
    %c1_i32_45 = arith.constant 1 : i32
    %74 = vector.broadcast %c1_i32_45 : i32 to vector<32x128xi32>
    %75 = arith.addi %28, %74 : vector<32x128xi32>
    %c16_i32_46 = arith.constant 16 : i32
    %76 = vector.broadcast %c16_i32_46 : i32 to vector<32x128xi32>
    %77 = arith.cmpi slt, %75, %76 : vector<32x128xi32>
    %78 = arith.andi %73, %77 : vector<32x128xi1>
    %c2_i32_47 = arith.constant 2 : i32
    %79 = vector.broadcast %c2_i32_47 : i32 to vector<32x128xi32>
    %80 = arith.addi %28, %79 : vector<32x128xi32>
    %c0_i32_48 = arith.constant 0 : i32
    %81 = vector.broadcast %c0_i32_48 : i32 to vector<32x128xi32>
    %82 = arith.cmpi sge, %80, %81 : vector<32x128xi32>
    %c2_i32_49 = arith.constant 2 : i32
    %83 = vector.broadcast %c2_i32_49 : i32 to vector<32x128xi32>
    %84 = arith.addi %28, %83 : vector<32x128xi32>
    %c16_i32_50 = arith.constant 16 : i32
    %85 = vector.broadcast %c16_i32_50 : i32 to vector<32x128xi32>
    %86 = arith.cmpi slt, %84, %85 : vector<32x128xi32>
    %87 = arith.andi %82, %86 : vector<32x128xi1>
    %c0_i32_51 = arith.constant 0 : i32
    %c0_i32_52 = arith.constant 0 : i32
    %c0_i32_53 = arith.constant 0 : i32
    %c0_i32_54 = arith.constant 0 : i32
    %c0_i32_55 = arith.constant 0 : i32
    %88 = tpu.memref_slice %arg4[%c0_i32_51, %c0_i32_54, %c0_i32_55] : memref<4x640x128xbf16, #tpu.memory_space<any>> -> memref<1x640x128xbf16, #tpu.memory_space<any>>
    %89 = tpu.memref_squeeze %88 : memref<1x640x128xbf16, #tpu.memory_space<any>> -> memref<640x128xbf16, #tpu.memory_space<any>>
    %c0_i32_56 = arith.constant 0 : i32
    %c0_i32_57 = arith.constant 0 : i32
    %90 = tpu.memref_slice %arg9[%c0_i32_52, %c0_i32_56, %c0_i32_57] : memref<4x640x128xbf16, #tpu.memory_space<vmem>> -> memref<1x640x128xbf16, #tpu.memory_space<vmem>>
    %91 = tpu.memref_squeeze %90 : memref<1x640x128xbf16, #tpu.memory_space<vmem>> -> memref<640x128xbf16, #tpu.memory_space<vmem>>
    %92 = tpu.memref_slice %arg10[%c0_i32_53] : memref<4x!tpu.dma_semaphore, #tpu.memory_space<semaphore_mem>> -> memref<1x!tpu.dma_semaphore, #tpu.memory_space<semaphore_mem>>
    %93 = tpu.memref_squeeze %92 : memref<1x!tpu.dma_semaphore, #tpu.memory_space<semaphore_mem>> -> memref<!tpu.dma_semaphore, #tpu.memory_space<semaphore_mem>>
    tpu.wait_dma2 semaphore(%93 : memref<!tpu.dma_semaphore, #tpu.memory_space<semaphore_mem>>) src(%89 : memref<640x128xbf16, #tpu.memory_space<any>>) dst(%91 : memref<640x128xbf16, #tpu.memory_space<vmem>>)
    %cst_58 = arith.constant 0.000000e+00 : f32
    %94 = vector.broadcast %cst_58 : f32 to vector<32x128xf32>
    %95 = arith.cmpf ogt, %51, %94 : vector<32x128xf32>
    %96 = vector.broadcast %24 : f32 to vector<32x128xf32>
    %97 = arith.mulf %96, %51 : vector<32x128xf32>
    %98 = arith.select %95, %51, %97 : vector<32x128xi1>, vector<32x128xf32>
    %c2_i32_59 = arith.constant 2 : i32
    %99 = tpu.dynamic_rotate %98 by %c2_i32_59 dim 0 : vector<32x128xf32>, i32 -> vector<32x128xf32>
    %cst_60 = arith.constant 0.000000e+00 : f32
    %100 = vector.broadcast %cst_60 : f32 to vector<32x128xf32>
    %101 = arith.select %60, %99, %100 : vector<32x128xi1>, vector<32x128xf32>
    %c1_i32_61 = arith.constant 1 : i32
    %102 = tpu.dynamic_rotate %98 by %c1_i32_61 dim 0 : vector<32x128xf32>, i32 -> vector<32x128xf32>
    %cst_62 = arith.constant 0.000000e+00 : f32
    %103 = vector.broadcast %cst_62 : f32 to vector<32x128xf32>
    %104 = arith.select %69, %102, %103 : vector<32x128xi1>, vector<32x128xf32>
    %c31_i32 = arith.constant 31 : i32
    %105 = tpu.dynamic_rotate %98 by %c31_i32 dim 0 : vector<32x128xf32>, i32 -> vector<32x128xf32>
    %cst_63 = arith.constant 0.000000e+00 : f32
    %106 = vector.broadcast %cst_63 : f32 to vector<32x128xf32>
    %107 = arith.select %78, %105, %106 : vector<32x128xi1>, vector<32x128xf32>
    %c30_i32 = arith.constant 30 : i32
    %108 = tpu.dynamic_rotate %98 by %c30_i32 dim 0 : vector<32x128xf32>, i32 -> vector<32x128xf32>
    %cst_64 = arith.constant 0.000000e+00 : f32
    %109 = vector.broadcast %cst_64 : f32 to vector<32x128xf32>
    %110 = arith.select %87, %108, %109 : vector<32x128xi1>, vector<32x128xf32>
    %111 = tpu.concatenate %101, %104, %98, %107, %110 in 1 : vector<32x128xf32>, vector<32x128xf32>, vector<32x128xf32>, vector<32x128xf32>, vector<32x128xf32> -> vector<32x640xf32>
    %112 = arith.truncf %111 : vector<32x640xf32> to vector<32x640xbf16>
    %c0_65 = arith.constant 0 : index
    %c0_66 = arith.constant 0 : index
    %c0_67 = arith.constant 0 : index
    %113 = vector.load %arg9[%c0_65, %c0_66, %c0_67] : memref<4x640x128xbf16, #tpu.memory_space<vmem>>, vector<1x640x128xbf16>
    %114 = vector.shape_cast %113 : vector<1x640x128xbf16> to vector<640x128xbf16>
    %cst_68 = arith.constant dense<0.000000e+00> : vector<32x128xf32>
    %115 = tpu.matmul %112, %114, %cst_68 {dimension_numbers = #tpu.dot_dimension_numbers<[1], [0], [0], [1], [0, 0, 1, 1], [], []>} : vector<32x640xbf16>, vector<640x128xbf16>, vector<32x128xf32> -> vector<32x128xf32>
    %cst_69 = arith.constant dense<0.000000e+00> : vector<128xf32>
    %116 = vector.multi_reduction <add>, %115, %cst_69 [0] : vector<32x128xf32> to vector<128xf32>
    %117 = vector.shape_cast %116 : vector<128xf32> to vector<1x128xf32>
    %118 = arith.mulf %115, %115 : vector<32x128xf32>
    %cst_70 = arith.constant dense<0.000000e+00> : vector<128xf32>
    %119 = vector.multi_reduction <add>, %118, %cst_70 [0] : vector<32x128xf32> to vector<128xf32>
    %120 = vector.shape_cast %119 : vector<128xf32> to vector<1x128xf32>
    %121 = tpu.concatenate %117, %120 in 0 : vector<1x128xf32>, vector<1x128xf32> -> vector<2x128xf32>
    %c64_i32 = arith.constant 64 : i32
    %122 = tpu.dynamic_rotate %121 by %c64_i32 dim 1 : vector<2x128xf32>, i32 -> vector<2x128xf32>
    %123 = arith.addf %121, %122 : vector<2x128xf32>
    %c32_i32 = arith.constant 32 : i32
    %124 = tpu.dynamic_rotate %123 by %c32_i32 dim 1 : vector<2x128xf32>, i32 -> vector<2x128xf32>
    %125 = arith.addf %123, %124 : vector<2x128xf32>
    %c16_i32_71 = arith.constant 16 : i32
    %126 = tpu.dynamic_rotate %125 by %c16_i32_71 dim 1 : vector<2x128xf32>, i32 -> vector<2x128xf32>
    %127 = arith.addf %125, %126 : vector<2x128xf32>
    %c8_i32 = arith.constant 8 : i32
    %128 = tpu.dynamic_rotate %127 by %c8_i32 dim 1 : vector<2x128xf32>, i32 -> vector<2x128xf32>
    %129 = arith.addf %127, %128 : vector<2x128xf32>
    %130 = vector.extract_strided_slice %129 {offsets = [0, 0], sizes = [1, 128], strides = [1, 1]} : vector<2x128xf32> to vector<1x128xf32>
    %cst_72 = arith.constant 0.001953125 : f32
    %131 = vector.broadcast %cst_72 : f32 to vector<1x128xf32>
    %132 = arith.mulf %130, %131 : vector<1x128xf32>
    %133 = vector.extract_strided_slice %129 {offsets = [1, 0], sizes = [1, 128], strides = [1, 1]} : vector<2x128xf32> to vector<1x128xf32>
    %cst_73 = arith.constant 0.001953125 : f32
    %134 = vector.broadcast %cst_73 : f32 to vector<1x128xf32>
    %135 = arith.mulf %133, %134 : vector<1x128xf32>
    %136 = arith.mulf %132, %132 : vector<1x128xf32>
    %137 = arith.subf %135, %136 : vector<1x128xf32>
    %c0_74 = arith.constant 0 : index
    %c0_75 = arith.constant 0 : index
    %c0_76 = arith.constant 0 : index
    %138 = vector.load %arg5[%c0_74, %c0_75, %c0_76] : memref<4x1x128xf32, #tpu.memory_space<vmem>>, vector<1x1x128xf32>
    %139 = vector.shape_cast %138 : vector<1x1x128xf32> to vector<1x128xf32>
    %cst_77 = arith.constant 9.99999974E-6 : f32
    %140 = vector.broadcast %cst_77 : f32 to vector<1x128xf32>
    %141 = arith.addf %137, %140 : vector<1x128xf32>
    %142 = math.rsqrt %141 : vector<1x128xf32>
    %143 = arith.mulf %139, %142 : vector<1x128xf32>
    %144 = vector.broadcast %132 : vector<1x128xf32> to vector<32x128xf32>
    %145 = arith.subf %115, %144 : vector<32x128xf32>
    %146 = vector.broadcast %143 : vector<1x128xf32> to vector<32x128xf32>
    %147 = arith.mulf %145, %146 : vector<32x128xf32>
    %c0_78 = arith.constant 0 : index
    %c0_79 = arith.constant 0 : index
    %c0_80 = arith.constant 0 : index
    %148 = vector.load %arg6[%c0_78, %c0_79, %c0_80] : memref<4x1x128xf32, #tpu.memory_space<vmem>>, vector<1x1x128xf32>
    %149 = vector.shape_cast %148 : vector<1x1x128xf32> to vector<1x128xf32>
    %150 = vector.broadcast %149 : vector<1x128xf32> to vector<32x128xf32>
    %151 = arith.addf %147, %150 : vector<32x128xf32>
    %152 = arith.maximumf %51, %151 : vector<32x128xf32>
    %c1_i32_81 = arith.constant 1 : i32
    %c1_i32_82 = arith.constant 1 : i32
    %c1_i32_83 = arith.constant 1 : i32
    %c0_i32_84 = arith.constant 0 : i32
    %c0_i32_85 = arith.constant 0 : i32
    %153 = tpu.memref_slice %arg4[%c1_i32_81, %c0_i32_84, %c0_i32_85] : memref<4x640x128xbf16, #tpu.memory_space<any>> -> memref<1x640x128xbf16, #tpu.memory_space<any>>
    %154 = tpu.memref_squeeze %153 : memref<1x640x128xbf16, #tpu.memory_space<any>> -> memref<640x128xbf16, #tpu.memory_space<any>>
    %c0_i32_86 = arith.constant 0 : i32
    %c0_i32_87 = arith.constant 0 : i32
    %155 = tpu.memref_slice %arg9[%c1_i32_82, %c0_i32_86, %c0_i32_87] : memref<4x640x128xbf16, #tpu.memory_space<vmem>> -> memref<1x640x128xbf16, #tpu.memory_space<vmem>>
    %156 = tpu.memref_squeeze %155 : memref<1x640x128xbf16, #tpu.memory_space<vmem>> -> memref<640x128xbf16, #tpu.memory_space<vmem>>
    %157 = tpu.memref_slice %arg10[%c1_i32_83] : memref<4x!tpu.dma_semaphore, #tpu.memory_space<semaphore_mem>> -> memref<1x!tpu.dma_semaphore, #tpu.memory_space<semaphore_mem>>
    %158 = tpu.memref_squeeze %157 : memref<1x!tpu.dma_semaphore, #tpu.memory_space<semaphore_mem>> -> memref<!tpu.dma_semaphore, #tpu.memory_space<semaphore_mem>>
    tpu.wait_dma2 semaphore(%158 : memref<!tpu.dma_semaphore, #tpu.memory_space<semaphore_mem>>) src(%154 : memref<640x128xbf16, #tpu.memory_space<any>>) dst(%156 : memref<640x128xbf16, #tpu.memory_space<vmem>>)
    %cst_88 = arith.constant 0.000000e+00 : f32
    %159 = vector.broadcast %cst_88 : f32 to vector<32x128xf32>
    %160 = arith.cmpf ogt, %152, %159 : vector<32x128xf32>
    %161 = vector.broadcast %24 : f32 to vector<32x128xf32>
    %162 = arith.mulf %161, %152 : vector<32x128xf32>
    %163 = arith.select %160, %152, %162 : vector<32x128xi1>, vector<32x128xf32>
    %c2_i32_89 = arith.constant 2 : i32
    %164 = tpu.dynamic_rotate %163 by %c2_i32_89 dim 0 : vector<32x128xf32>, i32 -> vector<32x128xf32>
    %cst_90 = arith.constant 0.000000e+00 : f32
    %165 = vector.broadcast %cst_90 : f32 to vector<32x128xf32>
    %166 = arith.select %60, %164, %165 : vector<32x128xi1>, vector<32x128xf32>
    %c1_i32_91 = arith.constant 1 : i32
    %167 = tpu.dynamic_rotate %163 by %c1_i32_91 dim 0 : vector<32x128xf32>, i32 -> vector<32x128xf32>
    %cst_92 = arith.constant 0.000000e+00 : f32
    %168 = vector.broadcast %cst_92 : f32 to vector<32x128xf32>
    %169 = arith.select %69, %167, %168 : vector<32x128xi1>, vector<32x128xf32>
    %c31_i32_93 = arith.constant 31 : i32
    %170 = tpu.dynamic_rotate %163 by %c31_i32_93 dim 0 : vector<32x128xf32>, i32 -> vector<32x128xf32>
    %cst_94 = arith.constant 0.000000e+00 : f32
    %171 = vector.broadcast %cst_94 : f32 to vector<32x128xf32>
    %172 = arith.select %78, %170, %171 : vector<32x128xi1>, vector<32x128xf32>
    %c30_i32_95 = arith.constant 30 : i32
    %173 = tpu.dynamic_rotate %163 by %c30_i32_95 dim 0 : vector<32x128xf32>, i32 -> vector<32x128xf32>
    %cst_96 = arith.constant 0.000000e+00 : f32
    %174 = vector.broadcast %cst_96 : f32 to vector<32x128xf32>
    %175 = arith.select %87, %173, %174 : vector<32x128xi1>, vector<32x128xf32>
    %176 = tpu.concatenate %166, %169, %163, %172, %175 in 1 : vector<32x128xf32>, vector<32x128xf32>, vector<32x128xf32>, vector<32x128xf32>, vector<32x128xf32> -> vector<32x640xf32>
    %177 = arith.truncf %176 : vector<32x640xf32> to vector<32x640xbf16>
    %c1 = arith.constant 1 : index
    %c0_97 = arith.constant 0 : index
    %c0_98 = arith.constant 0 : index
    %178 = vector.load %arg9[%c1, %c0_97, %c0_98] : memref<4x640x128xbf16, #tpu.memory_space<vmem>>, vector<1x640x128xbf16>
    %179 = vector.shape_cast %178 : vector<1x640x128xbf16> to vector<640x128xbf16>
    %cst_99 = arith.constant dense<0.000000e+00> : vector<32x128xf32>
    %180 = tpu.matmul %177, %179, %cst_99 {dimension_numbers = #tpu.dot_dimension_numbers<[1], [0], [0], [1], [0, 0, 1, 1], [], []>} : vector<32x640xbf16>, vector<640x128xbf16>, vector<32x128xf32> -> vector<32x128xf32>
    %cst_100 = arith.constant dense<0.000000e+00> : vector<128xf32>
    %181 = vector.multi_reduction <add>, %180, %cst_100 [0] : vector<32x128xf32> to vector<128xf32>
    %182 = vector.shape_cast %181 : vector<128xf32> to vector<1x128xf32>
    %183 = arith.mulf %180, %180 : vector<32x128xf32>
    %cst_101 = arith.constant dense<0.000000e+00> : vector<128xf32>
    %184 = vector.multi_reduction <add>, %183, %cst_101 [0] : vector<32x128xf32> to vector<128xf32>
    %185 = vector.shape_cast %184 : vector<128xf32> to vector<1x128xf32>
    %186 = tpu.concatenate %182, %185 in 0 : vector<1x128xf32>, vector<1x128xf32> -> vector<2x128xf32>
    %c64_i32_102 = arith.constant 64 : i32
    %187 = tpu.dynamic_rotate %186 by %c64_i32_102 dim 1 : vector<2x128xf32>, i32 -> vector<2x128xf32>
    %188 = arith.addf %186, %187 : vector<2x128xf32>
    %c32_i32_103 = arith.constant 32 : i32
    %189 = tpu.dynamic_rotate %188 by %c32_i32_103 dim 1 : vector<2x128xf32>, i32 -> vector<2x128xf32>
    %190 = arith.addf %188, %189 : vector<2x128xf32>
    %c16_i32_104 = arith.constant 16 : i32
    %191 = tpu.dynamic_rotate %190 by %c16_i32_104 dim 1 : vector<2x128xf32>, i32 -> vector<2x128xf32>
    %192 = arith.addf %190, %191 : vector<2x128xf32>
    %c8_i32_105 = arith.constant 8 : i32
    %193 = tpu.dynamic_rotate %192 by %c8_i32_105 dim 1 : vector<2x128xf32>, i32 -> vector<2x128xf32>
    %194 = arith.addf %192, %193 : vector<2x128xf32>
    %195 = vector.extract_strided_slice %194 {offsets = [0, 0], sizes = [1, 128], strides = [1, 1]} : vector<2x128xf32> to vector<1x128xf32>
    %cst_106 = arith.constant 0.001953125 : f32
    %196 = vector.broadcast %cst_106 : f32 to vector<1x128xf32>
    %197 = arith.mulf %195, %196 : vector<1x128xf32>
    %198 = vector.extract_strided_slice %194 {offsets = [1, 0], sizes = [1, 128], strides = [1, 1]} : vector<2x128xf32> to vector<1x128xf32>
    %cst_107 = arith.constant 0.001953125 : f32
    %199 = vector.broadcast %cst_107 : f32 to vector<1x128xf32>
    %200 = arith.mulf %198, %199 : vector<1x128xf32>
    %201 = arith.mulf %197, %197 : vector<1x128xf32>
    %202 = arith.subf %200, %201 : vector<1x128xf32>
    %c1_108 = arith.constant 1 : index
    %c0_109 = arith.constant 0 : index
    %c0_110 = arith.constant 0 : index
    %203 = vector.load %arg5[%c1_108, %c0_109, %c0_110] : memref<4x1x128xf32, #tpu.memory_space<vmem>>, vector<1x1x128xf32>
    %204 = vector.shape_cast %203 : vector<1x1x128xf32> to vector<1x128xf32>
    %cst_111 = arith.constant 9.99999974E-6 : f32
    %205 = vector.broadcast %cst_111 : f32 to vector<1x128xf32>
    %206 = arith.addf %202, %205 : vector<1x128xf32>
    %207 = math.rsqrt %206 : vector<1x128xf32>
    %208 = arith.mulf %204, %207 : vector<1x128xf32>
    %209 = vector.broadcast %197 : vector<1x128xf32> to vector<32x128xf32>
    %210 = arith.subf %180, %209 : vector<32x128xf32>
    %211 = vector.broadcast %208 : vector<1x128xf32> to vector<32x128xf32>
    %212 = arith.mulf %210, %211 : vector<32x128xf32>
    %c1_112 = arith.constant 1 : index
    %c0_113 = arith.constant 0 : index
    %c0_114 = arith.constant 0 : index
    %213 = vector.load %arg6[%c1_112, %c0_113, %c0_114] : memref<4x1x128xf32, #tpu.memory_space<vmem>>, vector<1x1x128xf32>
    %214 = vector.shape_cast %213 : vector<1x1x128xf32> to vector<1x128xf32>
    %215 = vector.broadcast %214 : vector<1x128xf32> to vector<32x128xf32>
    %216 = arith.addf %212, %215 : vector<32x128xf32>
    %217 = arith.maximumf %152, %216 : vector<32x128xf32>
    %c2_i32_115 = arith.constant 2 : i32
    %c2_i32_116 = arith.constant 2 : i32
    %c2_i32_117 = arith.constant 2 : i32
    %c0_i32_118 = arith.constant 0 : i32
    %c0_i32_119 = arith.constant 0 : i32
    %218 = tpu.memref_slice %arg4[%c2_i32_115, %c0_i32_118, %c0_i32_119] : memref<4x640x128xbf16, #tpu.memory_space<any>> -> memref<1x640x128xbf16, #tpu.memory_space<any>>
    %219 = tpu.memref_squeeze %218 : memref<1x640x128xbf16, #tpu.memory_space<any>> -> memref<640x128xbf16, #tpu.memory_space<any>>
    %c0_i32_120 = arith.constant 0 : i32
    %c0_i32_121 = arith.constant 0 : i32
    %220 = tpu.memref_slice %arg9[%c2_i32_116, %c0_i32_120, %c0_i32_121] : memref<4x640x128xbf16, #tpu.memory_space<vmem>> -> memref<1x640x128xbf16, #tpu.memory_space<vmem>>
    %221 = tpu.memref_squeeze %220 : memref<1x640x128xbf16, #tpu.memory_space<vmem>> -> memref<640x128xbf16, #tpu.memory_space<vmem>>
    %222 = tpu.memref_slice %arg10[%c2_i32_117] : memref<4x!tpu.dma_semaphore, #tpu.memory_space<semaphore_mem>> -> memref<1x!tpu.dma_semaphore, #tpu.memory_space<semaphore_mem>>
    %223 = tpu.memref_squeeze %222 : memref<1x!tpu.dma_semaphore, #tpu.memory_space<semaphore_mem>> -> memref<!tpu.dma_semaphore, #tpu.memory_space<semaphore_mem>>
    tpu.wait_dma2 semaphore(%223 : memref<!tpu.dma_semaphore, #tpu.memory_space<semaphore_mem>>) src(%219 : memref<640x128xbf16, #tpu.memory_space<any>>) dst(%221 : memref<640x128xbf16, #tpu.memory_space<vmem>>)
    %cst_122 = arith.constant 0.000000e+00 : f32
    %224 = vector.broadcast %cst_122 : f32 to vector<32x128xf32>
    %225 = arith.cmpf ogt, %217, %224 : vector<32x128xf32>
    %226 = vector.broadcast %24 : f32 to vector<32x128xf32>
    %227 = arith.mulf %226, %217 : vector<32x128xf32>
    %228 = arith.select %225, %217, %227 : vector<32x128xi1>, vector<32x128xf32>
    %c2_i32_123 = arith.constant 2 : i32
    %229 = tpu.dynamic_rotate %228 by %c2_i32_123 dim 0 : vector<32x128xf32>, i32 -> vector<32x128xf32>
    %cst_124 = arith.constant 0.000000e+00 : f32
    %230 = vector.broadcast %cst_124 : f32 to vector<32x128xf32>
    %231 = arith.select %60, %229, %230 : vector<32x128xi1>, vector<32x128xf32>
    %c1_i32_125 = arith.constant 1 : i32
    %232 = tpu.dynamic_rotate %228 by %c1_i32_125 dim 0 : vector<32x128xf32>, i32 -> vector<32x128xf32>
    %cst_126 = arith.constant 0.000000e+00 : f32
    %233 = vector.broadcast %cst_126 : f32 to vector<32x128xf32>
    %234 = arith.select %69, %232, %233 : vector<32x128xi1>, vector<32x128xf32>
    %c31_i32_127 = arith.constant 31 : i32
    %235 = tpu.dynamic_rotate %228 by %c31_i32_127 dim 0 : vector<32x128xf32>, i32 -> vector<32x128xf32>
    %cst_128 = arith.constant 0.000000e+00 : f32
    %236 = vector.broadcast %cst_128 : f32 to vector<32x128xf32>
    %237 = arith.select %78, %235, %236 : vector<32x128xi1>, vector<32x128xf32>
    %c30_i32_129 = arith.constant 30 : i32
    %238 = tpu.dynamic_rotate %228 by %c30_i32_129 dim 0 : vector<32x128xf32>, i32 -> vector<32x128xf32>
    %cst_130 = arith.constant 0.000000e+00 : f32
    %239 = vector.broadcast %cst_130 : f32 to vector<32x128xf32>
    %240 = arith.select %87, %238, %239 : vector<32x128xi1>, vector<32x128xf32>
    %241 = tpu.concatenate %231, %234, %228, %237, %240 in 1 : vector<32x128xf32>, vector<32x128xf32>, vector<32x128xf32>, vector<32x128xf32>, vector<32x128xf32> -> vector<32x640xf32>
    %242 = arith.truncf %241 : vector<32x640xf32> to vector<32x640xbf16>
    %c2 = arith.constant 2 : index
    %c0_131 = arith.constant 0 : index
    %c0_132 = arith.constant 0 : index
    %243 = vector.load %arg9[%c2, %c0_131, %c0_132] : memref<4x640x128xbf16, #tpu.memory_space<vmem>>, vector<1x640x128xbf16>
    %244 = vector.shape_cast %243 : vector<1x640x128xbf16> to vector<640x128xbf16>
    %cst_133 = arith.constant dense<0.000000e+00> : vector<32x128xf32>
    %245 = tpu.matmul %242, %244, %cst_133 {dimension_numbers = #tpu.dot_dimension_numbers<[1], [0], [0], [1], [0, 0, 1, 1], [], []>} : vector<32x640xbf16>, vector<640x128xbf16>, vector<32x128xf32> -> vector<32x128xf32>
    %cst_134 = arith.constant dense<0.000000e+00> : vector<128xf32>
    %246 = vector.multi_reduction <add>, %245, %cst_134 [0] : vector<32x128xf32> to vector<128xf32>
    %247 = vector.shape_cast %246 : vector<128xf32> to vector<1x128xf32>
    %248 = arith.mulf %245, %245 : vector<32x128xf32>
    %cst_135 = arith.constant dense<0.000000e+00> : vector<128xf32>
    %249 = vector.multi_reduction <add>, %248, %cst_135 [0] : vector<32x128xf32> to vector<128xf32>
    %250 = vector.shape_cast %249 : vector<128xf32> to vector<1x128xf32>
    %251 = tpu.concatenate %247, %250 in 0 : vector<1x128xf32>, vector<1x128xf32> -> vector<2x128xf32>
    %c64_i32_136 = arith.constant 64 : i32
    %252 = tpu.dynamic_rotate %251 by %c64_i32_136 dim 1 : vector<2x128xf32>, i32 -> vector<2x128xf32>
    %253 = arith.addf %251, %252 : vector<2x128xf32>
    %c32_i32_137 = arith.constant 32 : i32
    %254 = tpu.dynamic_rotate %253 by %c32_i32_137 dim 1 : vector<2x128xf32>, i32 -> vector<2x128xf32>
    %255 = arith.addf %253, %254 : vector<2x128xf32>
    %c16_i32_138 = arith.constant 16 : i32
    %256 = tpu.dynamic_rotate %255 by %c16_i32_138 dim 1 : vector<2x128xf32>, i32 -> vector<2x128xf32>
    %257 = arith.addf %255, %256 : vector<2x128xf32>
    %c8_i32_139 = arith.constant 8 : i32
    %258 = tpu.dynamic_rotate %257 by %c8_i32_139 dim 1 : vector<2x128xf32>, i32 -> vector<2x128xf32>
    %259 = arith.addf %257, %258 : vector<2x128xf32>
    %260 = vector.extract_strided_slice %259 {offsets = [0, 0], sizes = [1, 128], strides = [1, 1]} : vector<2x128xf32> to vector<1x128xf32>
    %cst_140 = arith.constant 0.001953125 : f32
    %261 = vector.broadcast %cst_140 : f32 to vector<1x128xf32>
    %262 = arith.mulf %260, %261 : vector<1x128xf32>
    %263 = vector.extract_strided_slice %259 {offsets = [1, 0], sizes = [1, 128], strides = [1, 1]} : vector<2x128xf32> to vector<1x128xf32>
    %cst_141 = arith.constant 0.001953125 : f32
    %264 = vector.broadcast %cst_141 : f32 to vector<1x128xf32>
    %265 = arith.mulf %263, %264 : vector<1x128xf32>
    %266 = arith.mulf %262, %262 : vector<1x128xf32>
    %267 = arith.subf %265, %266 : vector<1x128xf32>
    %c2_142 = arith.constant 2 : index
    %c0_143 = arith.constant 0 : index
    %c0_144 = arith.constant 0 : index
    %268 = vector.load %arg5[%c2_142, %c0_143, %c0_144] : memref<4x1x128xf32, #tpu.memory_space<vmem>>, vector<1x1x128xf32>
    %269 = vector.shape_cast %268 : vector<1x1x128xf32> to vector<1x128xf32>
    %cst_145 = arith.constant 9.99999974E-6 : f32
    %270 = vector.broadcast %cst_145 : f32 to vector<1x128xf32>
    %271 = arith.addf %267, %270 : vector<1x128xf32>
    %272 = math.rsqrt %271 : vector<1x128xf32>
    %273 = arith.mulf %269, %272 : vector<1x128xf32>
    %274 = vector.broadcast %262 : vector<1x128xf32> to vector<32x128xf32>
    %275 = arith.subf %245, %274 : vector<32x128xf32>
    %276 = vector.broadcast %273 : vector<1x128xf32> to vector<32x128xf32>
    %277 = arith.mulf %275, %276 : vector<32x128xf32>
    %c2_146 = arith.constant 2 : index
    %c0_147 = arith.constant 0 : index
    %c0_148 = arith.constant 0 : index
    %278 = vector.load %arg6[%c2_146, %c0_147, %c0_148] : memref<4x1x128xf32, #tpu.memory_space<vmem>>, vector<1x1x128xf32>
    %279 = vector.shape_cast %278 : vector<1x1x128xf32> to vector<1x128xf32>
    %280 = vector.broadcast %279 : vector<1x128xf32> to vector<32x128xf32>
    %281 = arith.addf %277, %280 : vector<32x128xf32>
    %282 = arith.maximumf %217, %281 : vector<32x128xf32>
    %c3_i32_149 = arith.constant 3 : i32
    %c3_i32_150 = arith.constant 3 : i32
    %c3_i32_151 = arith.constant 3 : i32
    %c0_i32_152 = arith.constant 0 : i32
    %c0_i32_153 = arith.constant 0 : i32
    %283 = tpu.memref_slice %arg4[%c3_i32_149, %c0_i32_152, %c0_i32_153] : memref<4x640x128xbf16, #tpu.memory_space<any>> -> memref<1x640x128xbf16, #tpu.memory_space<any>>
    %284 = tpu.memref_squeeze %283 : memref<1x640x128xbf16, #tpu.memory_space<any>> -> memref<640x128xbf16, #tpu.memory_space<any>>
    %c0_i32_154 = arith.constant 0 : i32
    %c0_i32_155 = arith.constant 0 : i32
    %285 = tpu.memref_slice %arg9[%c3_i32_150, %c0_i32_154, %c0_i32_155] : memref<4x640x128xbf16, #tpu.memory_space<vmem>> -> memref<1x640x128xbf16, #tpu.memory_space<vmem>>
    %286 = tpu.memref_squeeze %285 : memref<1x640x128xbf16, #tpu.memory_space<vmem>> -> memref<640x128xbf16, #tpu.memory_space<vmem>>
    %287 = tpu.memref_slice %arg10[%c3_i32_151] : memref<4x!tpu.dma_semaphore, #tpu.memory_space<semaphore_mem>> -> memref<1x!tpu.dma_semaphore, #tpu.memory_space<semaphore_mem>>
    %288 = tpu.memref_squeeze %287 : memref<1x!tpu.dma_semaphore, #tpu.memory_space<semaphore_mem>> -> memref<!tpu.dma_semaphore, #tpu.memory_space<semaphore_mem>>
    tpu.wait_dma2 semaphore(%288 : memref<!tpu.dma_semaphore, #tpu.memory_space<semaphore_mem>>) src(%284 : memref<640x128xbf16, #tpu.memory_space<any>>) dst(%286 : memref<640x128xbf16, #tpu.memory_space<vmem>>)
    %cst_156 = arith.constant 0.000000e+00 : f32
    %289 = vector.broadcast %cst_156 : f32 to vector<32x128xf32>
    %290 = arith.cmpf ogt, %282, %289 : vector<32x128xf32>
    %291 = vector.broadcast %24 : f32 to vector<32x128xf32>
    %292 = arith.mulf %291, %282 : vector<32x128xf32>
    %293 = arith.select %290, %282, %292 : vector<32x128xi1>, vector<32x128xf32>
    %c2_i32_157 = arith.constant 2 : i32
    %294 = tpu.dynamic_rotate %293 by %c2_i32_157 dim 0 : vector<32x128xf32>, i32 -> vector<32x128xf32>
    %cst_158 = arith.constant 0.000000e+00 : f32
    %295 = vector.broadcast %cst_158 : f32 to vector<32x128xf32>
    %296 = arith.select %60, %294, %295 : vector<32x128xi1>, vector<32x128xf32>
    %c1_i32_159 = arith.constant 1 : i32
    %297 = tpu.dynamic_rotate %293 by %c1_i32_159 dim 0 : vector<32x128xf32>, i32 -> vector<32x128xf32>
    %cst_160 = arith.constant 0.000000e+00 : f32
    %298 = vector.broadcast %cst_160 : f32 to vector<32x128xf32>
    %299 = arith.select %69, %297, %298 : vector<32x128xi1>, vector<32x128xf32>
    %c31_i32_161 = arith.constant 31 : i32
    %300 = tpu.dynamic_rotate %293 by %c31_i32_161 dim 0 : vector<32x128xf32>, i32 -> vector<32x128xf32>
    %cst_162 = arith.constant 0.000000e+00 : f32
    %301 = vector.broadcast %cst_162 : f32 to vector<32x128xf32>
    %302 = arith.select %78, %300, %301 : vector<32x128xi1>, vector<32x128xf32>
    %c30_i32_163 = arith.constant 30 : i32
    %303 = tpu.dynamic_rotate %293 by %c30_i32_163 dim 0 : vector<32x128xf32>, i32 -> vector<32x128xf32>
    %cst_164 = arith.constant 0.000000e+00 : f32
    %304 = vector.broadcast %cst_164 : f32 to vector<32x128xf32>
    %305 = arith.select %87, %303, %304 : vector<32x128xi1>, vector<32x128xf32>
    %306 = tpu.concatenate %296, %299, %293, %302, %305 in 1 : vector<32x128xf32>, vector<32x128xf32>, vector<32x128xf32>, vector<32x128xf32>, vector<32x128xf32> -> vector<32x640xf32>
    %307 = arith.truncf %306 : vector<32x640xf32> to vector<32x640xbf16>
    %c3 = arith.constant 3 : index
    %c0_165 = arith.constant 0 : index
    %c0_166 = arith.constant 0 : index
    %308 = vector.load %arg9[%c3, %c0_165, %c0_166] : memref<4x640x128xbf16, #tpu.memory_space<vmem>>, vector<1x640x128xbf16>
    %309 = vector.shape_cast %308 : vector<1x640x128xbf16> to vector<640x128xbf16>
    %cst_167 = arith.constant dense<0.000000e+00> : vector<32x128xf32>
    %310 = tpu.matmul %307, %309, %cst_167 {dimension_numbers = #tpu.dot_dimension_numbers<[1], [0], [0], [1], [0, 0, 1, 1], [], []>} : vector<32x640xbf16>, vector<640x128xbf16>, vector<32x128xf32> -> vector<32x128xf32>
    %cst_168 = arith.constant dense<0.000000e+00> : vector<128xf32>
    %311 = vector.multi_reduction <add>, %310, %cst_168 [0] : vector<32x128xf32> to vector<128xf32>
    %312 = vector.shape_cast %311 : vector<128xf32> to vector<1x128xf32>
    %313 = arith.mulf %310, %310 : vector<32x128xf32>
    %cst_169 = arith.constant dense<0.000000e+00> : vector<128xf32>
    %314 = vector.multi_reduction <add>, %313, %cst_169 [0] : vector<32x128xf32> to vector<128xf32>
    %315 = vector.shape_cast %314 : vector<128xf32> to vector<1x128xf32>
    %316 = tpu.concatenate %312, %315 in 0 : vector<1x128xf32>, vector<1x128xf32> -> vector<2x128xf32>
    %c64_i32_170 = arith.constant 64 : i32
    %317 = tpu.dynamic_rotate %316 by %c64_i32_170 dim 1 : vector<2x128xf32>, i32 -> vector<2x128xf32>
    %318 = arith.addf %316, %317 : vector<2x128xf32>
    %c32_i32_171 = arith.constant 32 : i32
    %319 = tpu.dynamic_rotate %318 by %c32_i32_171 dim 1 : vector<2x128xf32>, i32 -> vector<2x128xf32>
    %320 = arith.addf %318, %319 : vector<2x128xf32>
    %c16_i32_172 = arith.constant 16 : i32
    %321 = tpu.dynamic_rotate %320 by %c16_i32_172 dim 1 : vector<2x128xf32>, i32 -> vector<2x128xf32>
    %322 = arith.addf %320, %321 : vector<2x128xf32>
    %c8_i32_173 = arith.constant 8 : i32
    %323 = tpu.dynamic_rotate %322 by %c8_i32_173 dim 1 : vector<2x128xf32>, i32 -> vector<2x128xf32>
    %324 = arith.addf %322, %323 : vector<2x128xf32>
    %325 = vector.extract_strided_slice %324 {offsets = [0, 0], sizes = [1, 128], strides = [1, 1]} : vector<2x128xf32> to vector<1x128xf32>
    %cst_174 = arith.constant 0.001953125 : f32
    %326 = vector.broadcast %cst_174 : f32 to vector<1x128xf32>
    %327 = arith.mulf %325, %326 : vector<1x128xf32>
    %328 = vector.extract_strided_slice %324 {offsets = [1, 0], sizes = [1, 128], strides = [1, 1]} : vector<2x128xf32> to vector<1x128xf32>
    %cst_175 = arith.constant 0.001953125 : f32
    %329 = vector.broadcast %cst_175 : f32 to vector<1x128xf32>
    %330 = arith.mulf %328, %329 : vector<1x128xf32>
    %331 = arith.mulf %327, %327 : vector<1x128xf32>
    %332 = arith.subf %330, %331 : vector<1x128xf32>
    %c3_176 = arith.constant 3 : index
    %c0_177 = arith.constant 0 : index
    %c0_178 = arith.constant 0 : index
    %333 = vector.load %arg5[%c3_176, %c0_177, %c0_178] : memref<4x1x128xf32, #tpu.memory_space<vmem>>, vector<1x1x128xf32>
    %334 = vector.shape_cast %333 : vector<1x1x128xf32> to vector<1x128xf32>
    %cst_179 = arith.constant 9.99999974E-6 : f32
    %335 = vector.broadcast %cst_179 : f32 to vector<1x128xf32>
    %336 = arith.addf %332, %335 : vector<1x128xf32>
    %337 = math.rsqrt %336 : vector<1x128xf32>
    %338 = arith.mulf %334, %337 : vector<1x128xf32>
    %339 = vector.broadcast %327 : vector<1x128xf32> to vector<32x128xf32>
    %340 = arith.subf %310, %339 : vector<32x128xf32>
    %341 = vector.broadcast %338 : vector<1x128xf32> to vector<32x128xf32>
    %342 = arith.mulf %340, %341 : vector<32x128xf32>
    %c3_180 = arith.constant 3 : index
    %c0_181 = arith.constant 0 : index
    %c0_182 = arith.constant 0 : index
    %343 = vector.load %arg6[%c3_180, %c0_181, %c0_182] : memref<4x1x128xf32, #tpu.memory_space<vmem>>, vector<1x1x128xf32>
    %344 = vector.shape_cast %343 : vector<1x1x128xf32> to vector<1x128xf32>
    %345 = vector.broadcast %344 : vector<1x128xf32> to vector<32x128xf32>
    %346 = arith.addf %342, %345 : vector<32x128xf32>
    %c0_183 = arith.constant 0 : index
    %c0_184 = arith.constant 0 : index
    %347 = vector.load %arg8[%c0_183, %c0_184] : memref<32x128xf32, #tpu.memory_space<vmem>>, vector<32x128xf32>
    tpu.vector_store %arg8[%c0_183, %c0_184], %346 {strides = array<i32>} : memref<32x128xf32, #tpu.memory_space<vmem>>, vector<32x128xf32>,
    return
  }
}

</mosaic_0001>

<llo_original>
// kernel: competitive_decoder_block.1
$region0: #{competitive_decoder_block.1}
  #allocation0 [shape = 'u32[]', space=smem, size = 0x4, offset = 0x4, fixed_abs, tag = 'smem constant byte address 0x4 - core index']
  #allocation1 [shape = 'u32[144,128]{1,0:T(1,128)}', space=vmem, size = 0x12000, scoped, tag = 'internal scratch']
  #allocation2 [shape = 'bf16[4,640,128]{2,1,0:T(16,128)(2,1)}', space=vmem, size = 0xa0000, scoped, tag = 'scratch operand']
  #allocation3 [shape = 's32[4]{0}', space=sflag, size = 0x10, scoped, tag = 'scratch operand']
  #allocation4 [shape = 'f32[1]{0:T(128)S(6)}', space=smem, size = 0x200, scoped, tag = 'scoped memory for competitive_decoder_block.1']
  #allocation5 [shape = 's32[]', space=sflag, size = 0x4, offset = 0, fixed_abs, tag = 'sflag constant byte address 0x0 - dummy sync flag']
  #allocation6 [shape = 's32[]', space=sflag, size = 0x4, offset = 0, fixed_abs, tag = 'sflag constant byte address 0x0 - dummy sync flag']
  #allocation7 [shape = 's32[]', space=sflag, size = 0x4, offset = 0, fixed_abs, tag = 'sflag constant byte address 0x0 - dummy sync flag']
  #allocation8 [shape = 's32[]', space=sflag, size = 0x4, offset = 0, fixed_abs, tag = 'sflag constant byte address 0x0 - dummy sync flag']
  %s0 = inlined_call_operand.vmem [shape: bf16[16,128], index: 0, kind: input, shape index: {}]
  %s1 = inlined_call_operand.vmem [shape: f32[32,128], index: 1, kind: input, shape index: {}]
  %s2 = inlined_call_operand.vmem [shape: bf16[32,16], index: 2, kind: input, shape index: {}]
  %s3 = inlined_call_operand.vmem [shape: bf16[128,256], index: 3, kind: input, shape index: {}]
  %s4 = inlined_call_operand.vmem [shape: bf16[4,640,128], index: 4, kind: input, shape index: {}]
  %s5 = inlined_call_operand.vmem [shape: f32[4,1,128], index: 5, kind: input, shape index: {}]
  %s6 = inlined_call_operand.vmem [shape: f32[4,1,128], index: 6, kind: input, shape index: {}]
  %s7 = inlined_call_operand.<no memory space> [shape: f32[1], index: 7, kind: input, shape index: {}]
  %s8 = inlined_call_operand.vmem [shape: f32[32,128], index: 8, kind: output, shape index: {}]
  %s9 = sld [smem:[#allocation0]]
  $region174: #{competitive_decoder_block.1} parent=0
    _
  %s11 = ssub.s32 1, %s9
  %s12 = scalar_select 0, %s11, %s9
  %13 = sst [smem:[#allocation4]] %s7
  // Predicated region
  $region2: #{competitive_decoder_block.1} parent=0 // pred_check
    _
  $region3: #{competitive_decoder_block.1} parent=0 // pred_check_branch
    %15 = sbr.rel (0) target = $region5
  $region4: #{competitive_decoder_block.1} parent=0 // pred_region
    _
  $region5: #{competitive_decoder_block.1} parent=0 // pred_fallthru
    _
  // Predicated region
  $region6: #{competitive_decoder_block.1} parent=0 // pred_check
    _
  $region7: #{competitive_decoder_block.1} parent=0 // pred_check_branch
    %17 = sbr.rel (0) target = $region9
  $region8: #{competitive_decoder_block.1} parent=0 // pred_region
    _
  $region9: #{competitive_decoder_block.1} parent=0 // pred_fallthru
    _
  // Predicated region
  $region10: #{competitive_decoder_block.1} parent=0 // pred_check
    _
  $region11: #{competitive_decoder_block.1} parent=0 // pred_check_branch
    %19 = sbr.rel (0) target = $region13
  $region12: #{competitive_decoder_block.1} parent=0 // pred_region
    _
  $region13: #{competitive_decoder_block.1} parent=0 // pred_fallthru
    _
  // Predicated region
  $region14: #{competitive_decoder_block.1} parent=0 // pred_check
    _
  $region15: #{competitive_decoder_block.1} parent=0 // pred_check_branch
    %21 = sbr.rel (0) target = $region17
  $region16: #{competitive_decoder_block.1} parent=0 // pred_region
    _
  $region17: #{competitive_decoder_block.1} parent=0 // pred_fallthru
    _
  // Predicated region
  $region18: #{competitive_decoder_block.1} parent=0 // pred_check
    _
  $region19: #{competitive_decoder_block.1} parent=0 // pred_check_branch
    %23 = sbr.rel (0) target = $region21
  $region20: #{competitive_decoder_block.1} parent=0 // pred_region
    _
  $region21: #{competitive_decoder_block.1} parent=0 // pred_fallthru
    _
  // Predicated region
  $region22: #{competitive_decoder_block.1} parent=0 // pred_check
    _
  $region23: #{competitive_decoder_block.1} parent=0 // pred_check_branch
    %25 = sbr.rel (0) target = $region25
  $region24: #{competitive_decoder_block.1} parent=0 // pred_region
    _
  $region25: #{competitive_decoder_block.1} parent=0 // pred_fallthru
    _
  // Predicated region
  $region26: #{competitive_decoder_block.1} parent=0 // pred_check
    _
  $region27: #{competitive_decoder_block.1} parent=0 // pred_check_branch
    %27 = sbr.rel (0) target = $region29
  $region28: #{competitive_decoder_block.1} parent=0 // pred_region
    _
  $region29: #{competitive_decoder_block.1} parent=0 // pred_fallthru
    _
  %p30 = scmp.lt.u32.totalorder 320, 8
  %p31 = pneg %p30
  // Predicated region
  $region30: #{competitive_decoder_block.1} parent=0 // pred_check
    _
  $region31: #{competitive_decoder_block.1} parent=0 // pred_check_branch
    %33 = sbr.rel (%p30) target = $region33
  $region32: #{competitive_decoder_block.1} parent=0 // pred_region
    %s48 = sand.u32 320, 7
    %p49 = scmp.eq.s32.totalorder %s48, 0
    // Predicated region
    $region45: #{competitive_decoder_block.1} parent=32 // pred_check
      %p50 = pneg %p49
    $region46: #{competitive_decoder_block.1} parent=32 // pred_check_branch
      %52 = sbr.rel (%p50) target = $region48
    $region47: #{competitive_decoder_block.1} parent=32 // pred_region
      loop: start=0, step=1, limit=1
      $region49: #{competitive_decoder_block.1} parent=47 // loop_pre_header
        _
      $region50: #{competitive_decoder_block.1} parent=47 // loop_header
        %s54 = sphi 0, %s58
        %p55 = scmp.ge.s32.totalorder %s54, 1
        %s59 = sphi %s4, %s4
        %s60 = sphi [#allocation2], [#allocation2]
      $region51: #{competitive_decoder_block.1} parent=47 // loop_header_branch
        %57 = sbr.rel (%p55) target = $region55
      $region52: #{competitive_decoder_block.1} parent=47 // loop_body
        %v61 = vld [vmem:[%s59] sm:$0xff]
        %62 = vst [vmem:[%s60] sm:$0xff] %v61
        %v63 = vld [vmem:[%s59 + $0x8] sm:$0xff]
        %64 = vst [vmem:[%s60 + $0x8] sm:$0xff] %v63
        %v65 = vld [vmem:[%s59 + $0x10] sm:$0xff]
        %66 = vst [vmem:[%s60 + $0x10] sm:$0xff] %v65
        %v67 = vld [vmem:[%s59 + $0x18] sm:$0xff]
        %68 = vst [vmem:[%s60 + $0x18] sm:$0xff] %v67
        %v69 = vld [vmem:[%s59 + $0x20] sm:$0xff]
        %70 = vst [vmem:[%s60 + $0x20] sm:$0xff] %v69
        %v71 = vld [vmem:[%s59 + $0x28] sm:$0xff]
        %72 = vst [vmem:[%s60 + $0x28] sm:$0xff] %v71
        %v73 = vld [vmem:[%s59 + $0x30] sm:$0xff]
        %74 = vst [vmem:[%s60 + $0x30] sm:$0xff] %v73
        %v75 = vld [vmem:[%s59 + $0x38] sm:$0xff]
        %76 = vst [vmem:[%s60 + $0x38] sm:$0xff] %v75
        %v77 = vld [vmem:[%s59 + $0x40] sm:$0xff]
        %78 = vst [vmem:[%s60 + $0x40] sm:$0xff] %v77
        %v79 = vld [vmem:[%s59 + $0x48] sm:$0xff]
        %80 = vst [vmem:[%s60 + $0x48] sm:$0xff] %v79
        %v81 = vld [vmem:[%s59 + $0x50] sm:$0xff]
        %82 = vst [vmem:[%s60 + $0x50] sm:$0xff] %v81
        %v83 = vld [vmem:[%s59 + $0x58] sm:$0xff]
        %84 = vst [vmem:[%s60 + $0x58] sm:$0xff] %v83
        %v85 = vld [vmem:[%s59 + $0x60] sm:$0xff]
        %86 = vst [vmem:[%s60 + $0x60] sm:$0xff] %v85
        %v87 = vld [vmem:[%s59 + $0x68] sm:$0xff]
        %88 = vst [vmem:[%s60 + $0x68] sm:$0xff] %v87
        %v89 = vld [vmem:[%s59 + $0x70] sm:$0xff]
        %90 = vst [vmem:[%s60 + $0x70] sm:$0xff] %v89
        %v91 = vld [vmem:[%s59 + $0x78] sm:$0xff]
        %92 = vst [vmem:[%s60 + $0x78] sm:$0xff] %v91
        %v93 = vld [vmem:[%s59 + $0x80] sm:$0xff]
        %94 = vst [vmem:[%s60 + $0x80] sm:$0xff] %v93
        %v95 = vld [vmem:[%s59 + $0x88] sm:$0xff]
        %96 = vst [vmem:[%s60 + $0x88] sm:$0xff] %v95
        %v97 = vld [vmem:[%s59 + $0x90] sm:$0xff]
        %98 = vst [vmem:[%s60 + $0x90] sm:$0xff] %v97
        %v99 = vld [vmem:[%s59 + $0x98] sm:$0xff]
        %100 = vst [vmem:[%s60 + $0x98] sm:$0xff] %v99
        %v101 = vld [vmem:[%s59 + $0xa0] sm:$0xff]
        %102 = vst [vmem:[%s60 + $0xa0] sm:$0xff] %v101
        %v103 = vld [vmem:[%s59 + $0xa8] sm:$0xff]
        %104 = vst [vmem:[%s60 + $0xa8] sm:$0xff] %v103
        %v105 = vld [vmem:[%s59 + $0xb0] sm:$0xff]
        %106 = vst [vmem:[%s60 + $0xb0] sm:$0xff] %v105
        %v107 = vld [vmem:[%s59 + $0xb8] sm:$0xff]
        %108 = vst [vmem:[%s60 + $0xb8] sm:$0xff] %v107
        %v109 = vld [vmem:[%s59 + $0xc0] sm:$0xff]
        %110 = vst [vmem:[%s60 + $0xc0] sm:$0xff] %v109
        %v111 = vld [vmem:[%s59 + $0xc8] sm:$0xff]
        %112 = vst [vmem:[%s60 + $0xc8] sm:$0xff] %v111
        %v113 = vld [vmem:[%s59 + $0xd0] sm:$0xff]
        %114 = vst [vmem:[%s60 + $0xd0] sm:$0xff] %v113
        %v115 = vld [vmem:[%s59 + $0xd8] sm:$0xff]
        %116 = vst [vmem:[%s60 + $0xd8] sm:$0xff] %v115
        %v117 = vld [vmem:[%s59 + $0xe0] sm:$0xff]
        %118 = vst [vmem:[%s60 + $0xe0] sm:$0xff] %v117
        %v119 = vld [vmem:[%s59 + $0xe8] sm:$0xff]
        %120 = vst [vmem:[%s60 + $0xe8] sm:$0xff] %v119
        %v121 = vld [vmem:[%s59 + $0xf0] sm:$0xff]
        %122 = vst [vmem:[%s60 + $0xf0] sm:$0xff] %v121
        %v123 = vld [vmem:[%s59 + $0xf8] sm:$0xff]
        %124 = vst [vmem:[%s60 + $0xf8] sm:$0xff] %v123
        %v125 = vld [vmem:[%s59 + $0x100] sm:$0xff]
        %126 = vst [vmem:[%s60 + $0x100] sm:$0xff] %v125
        %v127 = vld [vmem:[%s59 + $0x108] sm:$0xff]
        %128 = vst [vmem:[%s60 + $0x108] sm:$0xff] %v127
        %v129 = vld [vmem:[%s59 + $0x110] sm:$0xff]
        %130 = vst [vmem:[%s60 + $0x110] sm:$0xff] %v129
        %v131 = vld [vmem:[%s59 + $0x118] sm:$0xff]
        %132 = vst [vmem:[%s60 + $0x118] sm:$0xff] %v131
        %v133 = vld [vmem:[%s59 + $0x120] sm:$0xff]
        %134 = vst [vmem:[%s60 + $0x120] sm:$0xff] %v133
        %v135 = vld [vmem:[%s59 + $0x128] sm:$0xff]
        %136 = vst [vmem:[%s60 + $0x128] sm:$0xff] %v135
        %v137 = vld [vmem:[%s59 + $0x130] sm:$0xff]
        %138 = vst [vmem:[%s60 + $0x130] sm:$0xff] %v137
        %v139 = vld [vmem:[%s59 + $0x138] sm:$0xff]
        %140 = vst [vmem:[%s60 + $0x138] sm:$0xff] %v139
      $region53: #{competitive_decoder_block.1} parent=47 // loop_footer
        %s58 = sadd.s32 1, %s54
      $region54: #{competitive_decoder_block.1} parent=47 // loop_footer_branch
        %53 = sbr.rel target = $region50
      $region55: #{competitive_decoder_block.1} parent=47 // loop_exit
        _
    $region48: #{competitive_decoder_block.1} parent=32 // pred_fallthru
      _
    %p141 = pneg %p49
    // Predicated region
    $region56: #{competitive_decoder_block.1} parent=32 // pred_check
      _
    $region57: #{competitive_decoder_block.1} parent=32 // pred_check_branch
      %143 = sbr.rel (%p49) target = $region59
    $region58: #{competitive_decoder_block.1} parent=32 // pred_region
      %s144 = sand.u32 320, 7
    $region59: #{competitive_decoder_block.1} parent=32 // pred_fallthru
      _
  $region33: #{competitive_decoder_block.1} parent=0 // pred_fallthru
    _
  // Predicated region
  $region34: #{competitive_decoder_block.1} parent=0 // pred_check
    %p34 = pneg %p30
  $region35: #{competitive_decoder_block.1} parent=0 // pred_check_branch
    %36 = sbr.rel (%p34) target = $region37
  $region36: #{competitive_decoder_block.1} parent=0 // pred_region
    %s37 = sshllo.u32 0, 320
    loop: start=0, step=1, limit=1
    $region38: #{competitive_decoder_block.1} parent=36 // loop_pre_header
      _
    $region39: #{competitive_decoder_block.1} parent=36 // loop_header
      %s39 = sphi 0, %s43
      %p40 = scmp.ge.s32.totalorder %s39, 1
      %s44 = sphi %s4, %s4
      %s45 = sphi [#allocation2], [#allocation2]
    $region40: #{competitive_decoder_block.1} parent=36 // loop_header_branch
      %42 = sbr.rel (%p40) target = $region44
    $region41: #{competitive_decoder_block.1} parent=36 // loop_body
      %v46 = vld [vmem:[%s44] sm:%s37]
      %47 = vst [vmem:[%s45] sm:%s37] %v46
    $region42: #{competitive_decoder_block.1} parent=36 // loop_footer
      %s43 = sadd.s32 1, %s39
    $region43: #{competitive_decoder_block.1} parent=36 // loop_footer_branch
      %38 = sbr.rel target = $region39
    $region44: #{competitive_decoder_block.1} parent=36 // loop_exit
      _
  $region37: #{competitive_decoder_block.1} parent=0 // pred_fallthru
    _
  // Predicated region
  $region60: #{competitive_decoder_block.1} parent=0 // pred_check
    _
  $region61: #{competitive_decoder_block.1} parent=0 // pred_check_branch
    %147 = sbr.rel (0) target = $region63
  $region62: #{competitive_decoder_block.1} parent=0 // pred_region
    %148 = vsyncadd [#allocation3], 5120
  $region63: #{competitive_decoder_block.1} parent=0 // pred_fallthru
    _
  %s149 = scalar_lea.vmem %s4, 320
  %s150 = scalar_lea.vmem [#allocation2], 320
  %s151 = scalar_lea.sflag [#allocation3], 1
  %p153 = scmp.lt.u32.totalorder 320, 8
  %p154 = pneg %p153
  // Predicated region
  $region64: #{competitive_decoder_block.1} parent=0 // pred_check
    _
  $region65: #{competitive_decoder_block.1} parent=0 // pred_check_branch
    %156 = sbr.rel (%p153) target = $region67
  $region66: #{competitive_decoder_block.1} parent=0 // pred_region
    %s171 = sand.u32 320, 7
    %p172 = scmp.eq.s32.totalorder %s171, 0
    // Predicated region
    $region79: #{competitive_decoder_block.1} parent=66 // pred_check
      %p173 = pneg %p172
    $region80: #{competitive_decoder_block.1} parent=66 // pred_check_branch
      %175 = sbr.rel (%p173) target = $region82
    $region81: #{competitive_decoder_block.1} parent=66 // pred_region
      loop: start=0, step=1, limit=1
      $region83: #{competitive_decoder_block.1} parent=81 // loop_pre_header
        _
      $region84: #{competitive_decoder_block.1} parent=81 // loop_header
        %s177 = sphi 0, %s181
        %p178 = scmp.ge.s32.totalorder %s177, 1
        %s182 = sphi %s149, %s149
        %s183 = sphi %s150, %s150
      $region85: #{competitive_decoder_block.1} parent=81 // loop_header_branch
        %180 = sbr.rel (%p178) target = $region89
      $region86: #{competitive_decoder_block.1} parent=81 // loop_body
        %v184 = vld [vmem:[%s182] sm:$0xff]
        %185 = vst [vmem:[%s183] sm:$0xff] %v184
        %v186 = vld [vmem:[%s182 + $0x8] sm:$0xff]
        %187 = vst [vmem:[%s183 + $0x8] sm:$0xff] %v186
        %v188 = vld [vmem:[%s182 + $0x10] sm:$0xff]
        %189 = vst [vmem:[%s183 + $0x10] sm:$0xff] %v188
        %v190 = vld [vmem:[%s182 + $0x18] sm:$0xff]
        %191 = vst [vmem:[%s183 + $0x18] sm:$0xff] %v190
        %v192 = vld [vmem:[%s182 + $0x20] sm:$0xff]
        %193 = vst [vmem:[%s183 + $0x20] sm:$0xff] %v192
        %v194 = vld [vmem:[%s182 + $0x28] sm:$0xff]
        %195 = vst [vmem:[%s183 + $0x28] sm:$0xff] %v194
        %v196 = vld [vmem:[%s182 + $0x30] sm:$0xff]
        %197 = vst [vmem:[%s183 + $0x30] sm:$0xff] %v196
        %v198 = vld [vmem:[%s182 + $0x38] sm:$0xff]
        %199 = vst [vmem:[%s183 + $0x38] sm:$0xff] %v198
        %v200 = vld [vmem:[%s182 + $0x40] sm:$0xff]
        %201 = vst [vmem:[%s183 + $0x40] sm:$0xff] %v200
        %v202 = vld [vmem:[%s182 + $0x48] sm:$0xff]
        %203 = vst [vmem:[%s183 + $0x48] sm:$0xff] %v202
        %v204 = vld [vmem:[%s182 + $0x50] sm:$0xff]
        %205 = vst [vmem:[%s183 + $0x50] sm:$0xff] %v204
        %v206 = vld [vmem:[%s182 + $0x58] sm:$0xff]
        %207 = vst [vmem:[%s183 + $0x58] sm:$0xff] %v206
        %v208 = vld [vmem:[%s182 + $0x60] sm:$0xff]
        %209 = vst [vmem:[%s183 + $0x60] sm:$0xff] %v208
        %v210 = vld [vmem:[%s182 + $0x68] sm:$0xff]
        %211 = vst [vmem:[%s183 + $0x68] sm:$0xff] %v210
        %v212 = vld [vmem:[%s182 + $0x70] sm:$0xff]
        %213 = vst [vmem:[%s183 + $0x70] sm:$0xff] %v212
        %v214 = vld [vmem:[%s182 + $0x78] sm:$0xff]
        %215 = vst [vmem:[%s183 + $0x78] sm:$0xff] %v214
        %v216 = vld [vmem:[%s182 + $0x80] sm:$0xff]
        %217 = vst [vmem:[%s183 + $0x80] sm:$0xff] %v216
        %v218 = vld [vmem:[%s182 + $0x88] sm:$0xff]
        %219 = vst [vmem:[%s183 + $0x88] sm:$0xff] %v218
        %v220 = vld [vmem:[%s182 + $0x90] sm:$0xff]
        %221 = vst [vmem:[%s183 + $0x90] sm:$0xff] %v220
        %v222 = vld [vmem:[%s182 + $0x98] sm:$0xff]
        %223 = vst [vmem:[%s183 + $0x98] sm:$0xff] %v222
        %v224 = vld [vmem:[%s182 + $0xa0] sm:$0xff]
        %225 = vst [vmem:[%s183 + $0xa0] sm:$0xff] %v224
        %v226 = vld [vmem:[%s182 + $0xa8] sm:$0xff]
        %227 = vst [vmem:[%s183 + $0xa8] sm:$0xff] %v226
        %v228 = vld [vmem:[%s182 + $0xb0] sm:$0xff]
        %229 = vst [vmem:[%s183 + $0xb0] sm:$0xff] %v228
        %v230 = vld [vmem:[%s182 + $0xb8] sm:$0xff]
        %231 = vst [vmem:[%s183 + $0xb8] sm:$0xff] %v230
        %v232 = vld [vmem:[%s182 + $0xc0] sm:$0xff]
        %233 = vst [vmem:[%s183 + $0xc0] sm:$0xff] %v232
        %v234 = vld [vmem:[%s182 + $0xc8] sm:$0xff]
        %235 = vst [vmem:[%s183 + $0xc8] sm:$0xff] %v234
        %v236 = vld [vmem:[%s182 + $0xd0] sm:$0xff]
        %237 = vst [vmem:[%s183 + $0xd0] sm:$0xff] %v236
        %v238 = vld [vmem:[%s182 + $0xd8] sm:$0xff]
        %239 = vst [vmem:[%s183 + $0xd8] sm:$0xff] %v238
        %v240 = vld [vmem:[%s182 + $0xe0] sm:$0xff]
        %241 = vst [vmem:[%s183 + $0xe0] sm:$0xff] %v240
        %v242 = vld [vmem:[%s182 + $0xe8] sm:$0xff]
        %243 = vst [vmem:[%s183 + $0xe8] sm:$0xff] %v242
        %v244 = vld [vmem:[%s182 + $0xf0] sm:$0xff]
        %245 = vst [vmem:[%s183 + $0xf0] sm:$0xff] %v244
        %v246 = vld [vmem:[%s182 + $0xf8] sm:$0xff]
        %247 = vst [vmem:[%s183 + $0xf8] sm:$0xff] %v246
        %v248 = vld [vmem:[%s182 + $0x100] sm:$0xff]
        %249 = vst [vmem:[%s183 + $0x100] sm:$0xff] %v248
        %v250 = vld [vmem:[%s182 + $0x108] sm:$0xff]
        %251 = vst [vmem:[%s183 + $0x108] sm:$0xff] %v250
        %v252 = vld [vmem:[%s182 + $0x110] sm:$0xff]
        %253 = vst [vmem:[%s183 + $0x110] sm:$0xff] %v252
        %v254 = vld [vmem:[%s182 + $0x118] sm:$0xff]
        %255 = vst [vmem:[%s183 + $0x118] sm:$0xff] %v254
        %v256 = vld [vmem:[%s182 + $0x120] sm:$0xff]
        %257 = vst [vmem:[%s183 + $0x120] sm:$0xff] %v256
        %v258 = vld [vmem:[%s182 + $0x128] sm:$0xff]
        %259 = vst [vmem:[%s183 + $0x128] sm:$0xff] %v258
        %v260 = vld [vmem:[%s182 + $0x130] sm:$0xff]
        %261 = vst [vmem:[%s183 + $0x130] sm:$0xff] %v260
        %v262 = vld [vmem:[%s182 + $0x138] sm:$0xff]
        %263 = vst [vmem:[%s183 + $0x138] sm:$0xff] %v262
      $region87: #{competitive_decoder_block.1} parent=81 // loop_footer
        %s181 = sadd.s32 1, %s177
      $region88: #{competitive_decoder_block.1} parent=81 // loop_footer_branch
        %176 = sbr.rel target = $region84
      $region89: #{competitive_decoder_block.1} parent=81 // loop_exit
        _
    $region82: #{competitive_decoder_block.1} parent=66 // pred_fallthru
      _
    %p264 = pneg %p172
    // Predicated region
    $region90: #{competitive_decoder_block.1} parent=66 // pred_check
      _
    $region91: #{competitive_decoder_block.1} parent=66 // pred_check_branch
      %266 = sbr.rel (%p172) target = $region93
    $region92: #{competitive_decoder_block.1} parent=66 // pred_region
      %s267 = sand.u32 320, 7
    $region93: #{competitive_decoder_block.1} parent=66 // pred_fallthru
      _
  $region67: #{competitive_decoder_block.1} parent=0 // pred_fallthru
    _
  // Predicated region
  $region68: #{competitive_decoder_block.1} parent=0 // pred_check
    %p157 = pneg %p153
  $region69: #{competitive_decoder_block.1} parent=0 // pred_check_branch
    %159 = sbr.rel (%p157) target = $region71
  $region70: #{competitive_decoder_block.1} parent=0 // pred_region
    %s160 = sshllo.u32 0, 320
    loop: start=0, step=1, limit=1
    $region72: #{competitive_decoder_block.1} parent=70 // loop_pre_header
      _
    $region73: #{competitive_decoder_block.1} parent=70 // loop_header
      %s162 = sphi 0, %s166
      %p163 = scmp.ge.s32.totalorder %s162, 1
      %s167 = sphi %s149, %s149
      %s168 = sphi %s150, %s150
    $region74: #{competitive_decoder_block.1} parent=70 // loop_header_branch
      %165 = sbr.rel (%p163) target = $region78
    $region75: #{competitive_decoder_block.1} parent=70 // loop_body
      %v169 = vld [vmem:[%s167] sm:%s160]
      %170 = vst [vmem:[%s168] sm:%s160] %v169
    $region76: #{competitive_decoder_block.1} parent=70 // loop_footer
      %s166 = sadd.s32 1, %s162
    $region77: #{competitive_decoder_block.1} parent=70 // loop_footer_branch
      %161 = sbr.rel target = $region73
    $region78: #{competitive_decoder_block.1} parent=70 // loop_exit
      _
  $region71: #{competitive_decoder_block.1} parent=0 // pred_fallthru
    _
  // Predicated region
  $region94: #{competitive_decoder_block.1} parent=0 // pred_check
    _
  $region95: #{competitive_decoder_block.1} parent=0 // pred_check_branch
    %270 = sbr.rel (0) target = $region97
  $region96: #{competitive_decoder_block.1} parent=0 // pred_region
    %271 = vsyncadd %s151, 5120
  $region97: #{competitive_decoder_block.1} parent=0 // pred_fallthru
    _
  %s272 = scalar_lea.vmem %s4, 640
  %s273 = scalar_lea.vmem [#allocation2], 640
  %s274 = scalar_lea.sflag [#allocation3], 2
  %p276 = scmp.lt.u32.totalorder 320, 8
  %p277 = pneg %p276
  // Predicated region
  $region98: #{competitive_decoder_block.1} parent=0 // pred_check
    _
  $region99: #{competitive_decoder_block.1} parent=0 // pred_check_branch
    %279 = sbr.rel (%p276) target = $region101
  $region100: #{competitive_decoder_block.1} parent=0 // pred_region
    %s294 = sand.u32 320, 7
    %p295 = scmp.eq.s32.totalorder %s294, 0
    // Predicated region
    $region113: #{competitive_decoder_block.1} parent=100 // pred_check
      %p296 = pneg %p295
    $region114: #{competitive_decoder_block.1} parent=100 // pred_check_branch
      %298 = sbr.rel (%p296) target = $region116
    $region115: #{competitive_decoder_block.1} parent=100 // pred_region
      loop: start=0, step=1, limit=1
      $region117: #{competitive_decoder_block.1} parent=115 // loop_pre_header
        _
      $region118: #{competitive_decoder_block.1} parent=115 // loop_header
        %s300 = sphi 0, %s304
        %p301 = scmp.ge.s32.totalorder %s300, 1
        %s305 = sphi %s272, %s272
        %s306 = sphi %s273, %s273
      $region119: #{competitive_decoder_block.1} parent=115 // loop_header_branch
        %303 = sbr.rel (%p301) target = $region123
      $region120: #{competitive_decoder_block.1} parent=115 // loop_body
        %v307 = vld [vmem:[%s305] sm:$0xff]
        %308 = vst [vmem:[%s306] sm:$0xff] %v307
        %v309 = vld [vmem:[%s305 + $0x8] sm:$0xff]
        %310 = vst [vmem:[%s306 + $0x8] sm:$0xff] %v309
        %v311 = vld [vmem:[%s305 + $0x10] sm:$0xff]
        %312 = vst [vmem:[%s306 + $0x10] sm:$0xff] %v311
        %v313 = vld [vmem:[%s305 + $0x18] sm:$0xff]
        %314 = vst [vmem:[%s306 + $0x18] sm:$0xff] %v313
        %v315 = vld [vmem:[%s305 + $0x20] sm:$0xff]
        %316 = vst [vmem:[%s306 + $0x20] sm:$0xff] %v315
        %v317 = vld [vmem:[%s305 + $0x28] sm:$0xff]
        %318 = vst [vmem:[%s306 + $0x28] sm:$0xff] %v317
        %v319 = vld [vmem:[%s305 + $0x30] sm:$0xff]
        %320 = vst [vmem:[%s306 + $0x30] sm:$0xff] %v319
        %v321 = vld [vmem:[%s305 + $0x38] sm:$0xff]
        %322 = vst [vmem:[%s306 + $0x38] sm:$0xff] %v321
        %v323 = vld [vmem:[%s305 + $0x40] sm:$0xff]
        %324 = vst [vmem:[%s306 + $0x40] sm:$0xff] %v323
        %v325 = vld [vmem:[%s305 + $0x48] sm:$0xff]
        %326 = vst [vmem:[%s306 + $0x48] sm:$0xff] %v325
        %v327 = vld [vmem:[%s305 + $0x50] sm:$0xff]
        %328 = vst [vmem:[%s306 + $0x50] sm:$0xff] %v327
        %v329 = vld [vmem:[%s305 + $0x58] sm:$0xff]
        %330 = vst [vmem:[%s306 + $0x58] sm:$0xff] %v329
        %v331 = vld [vmem:[%s305 + $0x60] sm:$0xff]
        %332 = vst [vmem:[%s306 + $0x60] sm:$0xff] %v331
        %v333 = vld [vmem:[%s305 + $0x68] sm:$0xff]
        %334 = vst [vmem:[%s306 + $0x68] sm:$0xff] %v333
        %v335 = vld [vmem:[%s305 + $0x70] sm:$0xff]
        %336 = vst [vmem:[%s306 + $0x70] sm:$0xff] %v335
        %v337 = vld [vmem:[%s305 + $0x78] sm:$0xff]
        %338 = vst [vmem:[%s306 + $0x78] sm:$0xff] %v337
        %v339 = vld [vmem:[%s305 + $0x80] sm:$0xff]
        %340 = vst [vmem:[%s306 + $0x80] sm:$0xff] %v339
        %v341 = vld [vmem:[%s305 + $0x88] sm:$0xff]
        %342 = vst [vmem:[%s306 + $0x88] sm:$0xff] %v341
        %v343 = vld [vmem:[%s305 + $0x90] sm:$0xff]
        %344 = vst [vmem:[%s306 + $0x90] sm:$0xff] %v343
        %v345 = vld [vmem:[%s305 + $0x98] sm:$0xff]
        %346 = vst [vmem:[%s306 + $0x98] sm:$0xff] %v345
        %v347 = vld [vmem:[%s305 + $0xa0] sm:$0xff]
        %348 = vst [vmem:[%s306 + $0xa0] sm:$0xff] %v347
        %v349 = vld [vmem:[%s305 + $0xa8] sm:$0xff]
        %350 = vst [vmem:[%s306 + $0xa8] sm:$0xff] %v349
        %v351 = vld [vmem:[%s305 + $0xb0] sm:$0xff]
        %352 = vst [vmem:[%s306 + $0xb0] sm:$0xff] %v351
        %v353 = vld [vmem:[%s305 + $0xb8] sm:$0xff]
        %354 = vst [vmem:[%s306 + $0xb8] sm:$0xff] %v353
        %v355 = vld [vmem:[%s305 + $0xc0] sm:$0xff]
        %356 = vst [vmem:[%s306 + $0xc0] sm:$0xff] %v355
        %v357 = vld [vmem:[%s305 + $0xc8] sm:$0xff]
        %358 = vst [vmem:[%s306 + $0xc8] sm:$0xff] %v357
        %v359 = vld [vmem:[%s305 + $0xd0] sm:$0xff]
        %360 = vst [vmem:[%s306 + $0xd0] sm:$0xff] %v359
        %v361 = vld [vmem:[%s305 + $0xd8] sm:$0xff]
        %362 = vst [vmem:[%s306 + $0xd8] sm:$0xff] %v361
        %v363 = vld [vmem:[%s305 + $0xe0] sm:$0xff]
        %364 = vst [vmem:[%s306 + $0xe0] sm:$0xff] %v363
        %v365 = vld [vmem:[%s305 + $0xe8] sm:$0xff]
        %366 = vst [vmem:[%s306 + $0xe8] sm:$0xff] %v365
        %v367 = vld [vmem:[%s305 + $0xf0] sm:$0xff]
        %368 = vst [vmem:[%s306 + $0xf0] sm:$0xff] %v367
        %v369 = vld [vmem:[%s305 + $0xf8] sm:$0xff]
        %370 = vst [vmem:[%s306 + $0xf8] sm:$0xff] %v369
        %v371 = vld [vmem:[%s305 + $0x100] sm:$0xff]
        %372 = vst [vmem:[%s306 + $0x100] sm:$0xff] %v371
        %v373 = vld [vmem:[%s305 + $0x108] sm:$0xff]
        %374 = vst [vmem:[%s306 + $0x108] sm:$0xff] %v373
        %v375 = vld [vmem:[%s305 + $0x110] sm:$0xff]
        %376 = vst [vmem:[%s306 + $0x110] sm:$0xff] %v375
        %v377 = vld [vmem:[%s305 + $0x118] sm:$0xff]
        %378 = vst [vmem:[%s306 + $0x118] sm:$0xff] %v377
        %v379 = vld [vmem:[%s305 + $0x120] sm:$0xff]
        %380 = vst [vmem:[%s306 + $0x120] sm:$0xff] %v379
        %v381 = vld [vmem:[%s305 + $0x128] sm:$0xff]
        %382 = vst [vmem:[%s306 + $0x128] sm:$0xff] %v381
        %v383 = vld [vmem:[%s305 + $0x130] sm:$0xff]
        %384 = vst [vmem:[%s306 + $0x130] sm:$0xff] %v383
        %v385 = vld [vmem:[%s305 + $0x138] sm:$0xff]
        %386 = vst [vmem:[%s306 + $0x138] sm:$0xff] %v385
      $region121: #{competitive_decoder_block.1} parent=115 // loop_footer
        %s304 = sadd.s32 1, %s300
      $region122: #{competitive_decoder_block.1} parent=115 // loop_footer_branch
        %299 = sbr.rel target = $region118
      $region123: #{competitive_decoder_block.1} parent=115 // loop_exit
        _
    $region116: #{competitive_decoder_block.1} parent=100 // pred_fallthru
      _
    %p387 = pneg %p295
    // Predicated region
    $region124: #{competitive_decoder_block.1} parent=100 // pred_check
      _
    $region125: #{competitive_decoder_block.1} parent=100 // pred_check_branch
      %389 = sbr.rel (%p295) target = $region127
    $region126: #{competitive_decoder_block.1} parent=100 // pred_region
      %s390 = sand.u32 320, 7
    $region127: #{competitive_decoder_block.1} parent=100 // pred_fallthru
      _
  $region101: #{competitive_decoder_block.1} parent=0 // pred_fallthru
    _
  // Predicated region
  $region102: #{competitive_decoder_block.1} parent=0 // pred_check
    %p280 = pneg %p276
  $region103: #{competitive_decoder_block.1} parent=0 // pred_check_branch
    %282 = sbr.rel (%p280) target = $region105
  $region104: #{competitive_decoder_block.1} parent=0 // pred_region
    %s283 = sshllo.u32 0, 320
    loop: start=0, step=1, limit=1
    $region106: #{competitive_decoder_block.1} parent=104 // loop_pre_header
      _
    $region107: #{competitive_decoder_block.1} parent=104 // loop_header
      %s285 = sphi 0, %s289
      %p286 = scmp.ge.s32.totalorder %s285, 1
      %s290 = sphi %s272, %s272
      %s291 = sphi %s273, %s273
    $region108: #{competitive_decoder_block.1} parent=104 // loop_header_branch
      %288 = sbr.rel (%p286) target = $region112
    $region109: #{competitive_decoder_block.1} parent=104 // loop_body
      %v292 = vld [vmem:[%s290] sm:%s283]
      %293 = vst [vmem:[%s291] sm:%s283] %v292
    $region110: #{competitive_decoder_block.1} parent=104 // loop_footer
      %s289 = sadd.s32 1, %s285
    $region111: #{competitive_decoder_block.1} parent=104 // loop_footer_branch
      %284 = sbr.rel target = $region107
    $region112: #{competitive_decoder_block.1} parent=104 // loop_exit
      _
  $region105: #{competitive_decoder_block.1} parent=0 // pred_fallthru
    _
  // Predicated region
  $region128: #{competitive_decoder_block.1} parent=0 // pred_check
    _
  $region129: #{competitive_decoder_block.1} parent=0 // pred_check_branch
    %393 = sbr.rel (0) target = $region131
  $region130: #{competitive_decoder_block.1} parent=0 // pred_region
    %394 = vsyncadd %s274, 5120
  $region131: #{competitive_decoder_block.1} parent=0 // pred_fallthru
    _
  %s395 = scalar_lea.vmem %s4, 960
  %s396 = scalar_lea.vmem [#allocation2], 960
  %s397 = scalar_lea.sflag [#allocation3], 3
  %p399 = scmp.lt.u32.totalorder 320, 8
  %p400 = pneg %p399
  // Predicated region
  $region132: #{competitive_decoder_block.1} parent=0 // pred_check
    _
  $region133: #{competitive_decoder_block.1} parent=0 // pred_check_branch
    %402 = sbr.rel (%p399) target = $region135
  $region134: #{competitive_decoder_block.1} parent=0 // pred_region
    %s417 = sand.u32 320, 7
    %p418 = scmp.eq.s32.totalorder %s417, 0
    // Predicated region
    $region147: #{competitive_decoder_block.1} parent=134 // pred_check
      %p419 = pneg %p418
    $region148: #{competitive_decoder_block.1} parent=134 // pred_check_branch
      %421 = sbr.rel (%p419) target = $region150
    $region149: #{competitive_decoder_block.1} parent=134 // pred_region
      loop: start=0, step=1, limit=1
      $region151: #{competitive_decoder_block.1} parent=149 // loop_pre_header
        _
      $region152: #{competitive_decoder_block.1} parent=149 // loop_header
        %s423 = sphi 0, %s427
        %p424 = scmp.ge.s32.totalorder %s423, 1
        %s428 = sphi %s395, %s395
        %s429 = sphi %s396, %s396
      $region153: #{competitive_decoder_block.1} parent=149 // loop_header_branch
        %426 = sbr.rel (%p424) target = $region157
      $region154: #{competitive_decoder_block.1} parent=149 // loop_body
        %v430 = vld [vmem:[%s428] sm:$0xff]
        %431 = vst [vmem:[%s429] sm:$0xff] %v430
        %v432 = vld [vmem:[%s428 + $0x8] sm:$0xff]
        %433 = vst [vmem:[%s429 + $0x8] sm:$0xff] %v432
        %v434 = vld [vmem:[%s428 + $0x10] sm:$0xff]
        %435 = vst [vmem:[%s429 + $0x10] sm:$0xff] %v434
        %v436 = vld [vmem:[%s428 + $0x18] sm:$0xff]
        %437 = vst [vmem:[%s429 + $0x18] sm:$0xff] %v436
        %v438 = vld [vmem:[%s428 + $0x20] sm:$0xff]
        %439 = vst [vmem:[%s429 + $0x20] sm:$0xff] %v438
        %v440 = vld [vmem:[%s428 + $0x28] sm:$0xff]
        %441 = vst [vmem:[%s429 + $0x28] sm:$0xff] %v440
        %v442 = vld [vmem:[%s428 + $0x30] sm:$0xff]
        %443 = vst [vmem:[%s429 + $0x30] sm:$0xff] %v442
        %v444 = vld [vmem:[%s428 + $0x38] sm:$0xff]
        %445 = vst [vmem:[%s429 + $0x38] sm:$0xff] %v444
        %v446 = vld [vmem:[%s428 + $0x40] sm:$0xff]
        %447 = vst [vmem:[%s429 + $0x40] sm:$0xff] %v446
        %v448 = vld [vmem:[%s428 + $0x48] sm:$0xff]
        %449 = vst [vmem:[%s429 + $0x48] sm:$0xff] %v448
        %v450 = vld [vmem:[%s428 + $0x50] sm:$0xff]
        %451 = vst [vmem:[%s429 + $0x50] sm:$0xff] %v450
        %v452 = vld [vmem:[%s428 + $0x58] sm:$0xff]
        %453 = vst [vmem:[%s429 + $0x58] sm:$0xff] %v452
        %v454 = vld [vmem:[%s428 + $0x60] sm:$0xff]
        %455 = vst [vmem:[%s429 + $0x60] sm:$0xff] %v454
        %v456 = vld [vmem:[%s428 + $0x68] sm:$0xff]
        %457 = vst [vmem:[%s429 + $0x68] sm:$0xff] %v456
        %v458 = vld [vmem:[%s428 + $0x70] sm:$0xff]
        %459 = vst [vmem:[%s429 + $0x70] sm:$0xff] %v458
        %v460 = vld [vmem:[%s428 + $0x78] sm:$0xff]
        %461 = vst [vmem:[%s429 + $0x78] sm:$0xff] %v460
        %v462 = vld [vmem:[%s428 + $0x80] sm:$0xff]
        %463 = vst [vmem:[%s429 + $0x80] sm:$0xff] %v462
        %v464 = vld [vmem:[%s428 + $0x88] sm:$0xff]
        %465 = vst [vmem:[%s429 + $0x88] sm:$0xff] %v464
        %v466 = vld [vmem:[%s428 + $0x90] sm:$0xff]
        %467 = vst [vmem:[%s429 + $0x90] sm:$0xff] %v466
        %v468 = vld [vmem:[%s428 + $0x98] sm:$0xff]
        %469 = vst [vmem:[%s429 + $0x98] sm:$0xff] %v468
        %v470 = vld [vmem:[%s428 + $0xa0] sm:$0xff]
        %471 = vst [vmem:[%s429 + $0xa0] sm:$0xff] %v470
        %v472 = vld [vmem:[%s428 + $0xa8] sm:$0xff]
        %473 = vst [vmem:[%s429 + $0xa8] sm:$0xff] %v472
        %v474 = vld [vmem:[%s428 + $0xb0] sm:$0xff]
        %475 = vst [vmem:[%s429 + $0xb0] sm:$0xff] %v474
        %v476 = vld [vmem:[%s428 + $0xb8] sm:$0xff]
        %477 = vst [vmem:[%s429 + $0xb8] sm:$0xff] %v476
        %v478 = vld [vmem:[%s428 + $0xc0] sm:$0xff]
        %479 = vst [vmem:[%s429 + $0xc0] sm:$0xff] %v478
        %v480 = vld [vmem:[%s428 + $0xc8] sm:$0xff]
        %481 = vst [vmem:[%s429 + $0xc8] sm:$0xff] %v480
        %v482 = vld [vmem:[%s428 + $0xd0] sm:$0xff]
        %483 = vst [vmem:[%s429 + $0xd0] sm:$0xff] %v482
        %v484 = vld [vmem:[%s428 + $0xd8] sm:$0xff]
        %485 = vst [vmem:[%s429 + $0xd8] sm:$0xff] %v484
        %v486 = vld [vmem:[%s428 + $0xe0] sm:$0xff]
        %487 = vst [vmem:[%s429 + $0xe0] sm:$0xff] %v486
        %v488 = vld [vmem:[%s428 + $0xe8] sm:$0xff]
        %489 = vst [vmem:[%s429 + $0xe8] sm:$0xff] %v488
        %v490 = vld [vmem:[%s428 + $0xf0] sm:$0xff]
        %491 = vst [vmem:[%s429 + $0xf0] sm:$0xff] %v490
        %v492 = vld [vmem:[%s428 + $0xf8] sm:$0xff]
        %493 = vst [vmem:[%s429 + $0xf8] sm:$0xff] %v492
        %v494 = vld [vmem:[%s428 + $0x100] sm:$0xff]
        %495 = vst [vmem:[%s429 + $0x100] sm:$0xff] %v494
        %v496 = vld [vmem:[%s428 + $0x108] sm:$0xff]
        %497 = vst [vmem:[%s429 + $0x108] sm:$0xff] %v496
        %v498 = vld [vmem:[%s428 + $0x110] sm:$0xff]
        %499 = vst [vmem:[%s429 + $0x110] sm:$0xff] %v498
        %v500 = vld [vmem:[%s428 + $0x118] sm:$0xff]
        %501 = vst [vmem:[%s429 + $0x118] sm:$0xff] %v500
        %v502 = vld [vmem:[%s428 + $0x120] sm:$0xff]
        %503 = vst [vmem:[%s429 + $0x120] sm:$0xff] %v502
        %v504 = vld [vmem:[%s428 + $0x128] sm:$0xff]
        %505 = vst [vmem:[%s429 + $0x128] sm:$0xff] %v504
        %v506 = vld [vmem:[%s428 + $0x130] sm:$0xff]
        %507 = vst [vmem:[%s429 + $0x130] sm:$0xff] %v506
        %v508 = vld [vmem:[%s428 + $0x138] sm:$0xff]
        %509 = vst [vmem:[%s429 + $0x138] sm:$0xff] %v508
      $region155: #{competitive_decoder_block.1} parent=149 // loop_footer
        %s427 = sadd.s32 1, %s423
      $region156: #{competitive_decoder_block.1} parent=149 // loop_footer_branch
        %422 = sbr.rel target = $region152
      $region157: #{competitive_decoder_block.1} parent=149 // loop_exit
        _
    $region150: #{competitive_decoder_block.1} parent=134 // pred_fallthru
      _
    %p510 = pneg %p418
    // Predicated region
    $region158: #{competitive_decoder_block.1} parent=134 // pred_check
      _
    $region159: #{competitive_decoder_block.1} parent=134 // pred_check_branch
      %512 = sbr.rel (%p418) target = $region161
    $region160: #{competitive_decoder_block.1} parent=134 // pred_region
      %s513 = sand.u32 320, 7
    $region161: #{competitive_decoder_block.1} parent=134 // pred_fallthru
      _
  $region135: #{competitive_decoder_block.1} parent=0 // pred_fallthru
    _
  // Predicated region
  $region136: #{competitive_decoder_block.1} parent=0 // pred_check
    %p403 = pneg %p399
  $region137: #{competitive_decoder_block.1} parent=0 // pred_check_branch
    %405 = sbr.rel (%p403) target = $region139
  $region138: #{competitive_decoder_block.1} parent=0 // pred_region
    %s406 = sshllo.u32 0, 320
    loop: start=0, step=1, limit=1
    $region140: #{competitive_decoder_block.1} parent=138 // loop_pre_header
      _
    $region141: #{competitive_decoder_block.1} parent=138 // loop_header
      %s408 = sphi 0, %s412
      %p409 = scmp.ge.s32.totalorder %s408, 1
      %s413 = sphi %s395, %s395
      %s414 = sphi %s396, %s396
    $region142: #{competitive_decoder_block.1} parent=138 // loop_header_branch
      %411 = sbr.rel (%p409) target = $region146
    $region143: #{competitive_decoder_block.1} parent=138 // loop_body
      %v415 = vld [vmem:[%s413] sm:%s406]
      %416 = vst [vmem:[%s414] sm:%s406] %v415
    $region144: #{competitive_decoder_block.1} parent=138 // loop_footer
      %s412 = sadd.s32 1, %s408
    $region145: #{competitive_decoder_block.1} parent=138 // loop_footer_branch
      %407 = sbr.rel target = $region141
    $region146: #{competitive_decoder_block.1} parent=138 // loop_exit
      _
  $region139: #{competitive_decoder_block.1} parent=0 // pred_fallthru
    _
  // Predicated region
  $region162: #{competitive_decoder_block.1} parent=0 // pred_check
    _
  $region163: #{competitive_decoder_block.1} parent=0 // pred_check_branch
    %516 = sbr.rel (0) target = $region165
  $region164: #{competitive_decoder_block.1} parent=0 // pred_region
    %517 = vsyncadd %s397, 5120
  $region165: #{competitive_decoder_block.1} parent=0 // pred_fallthru
    _
  %s518 = sld [smem:[#allocation4]]
  %v519 = vlaneseq
  %v520 = vshrl.u32 %v519, 7
  %v521 = vadd.s32 %v520, 8
  %v522 = vadd.s32 %v520, 16
  %v523 = vadd.s32 %v520, 24
  %v524 = vlaneseq
  %v525 = vand.u32 %v524, 127
  %v526 = vand.u32 %v520, 15
  %v527 = vand.u32 %v521, 15
  %v528 = vand.u32 %v522, 15
  %v529 = vand.u32 %v523, 15
  %v530 = vshra.s32 %v525, 3
  %v531 = vld [vmem:[%s2] sm:$0xf]
  %v532 = vld [vmem:[%s2 + $0x4] sm:$0xf]
  %v533 = vld [vmem:[%s2 + $0x8] sm:$0xf]
  %v534 = vld [vmem:[%s2 + $0xc] sm:$0xf]
  %v535 = vld [vmem:[%s0] sm:$0xf]
  %v536 = vld [vmem:[%s0 + $0x4] sm:$0xf]
  %v541 = vunpack.c.l.b16 %v531
  %v542 = vunpack.c.l.b16 %v532
  %v543 = vunpack.c.l.b16 %v533
  %v544 = vunpack.c.l.b16 %v534
  %v545 = vpack.c.b16 %v542, %v541
  %v546 = vpack.c.b16 %v544, %v543
  %v549 = vunpack.c.l.b16 %v535
  %v550 = vunpack.c.l.b16 %v536
  %v551 = vpack.c.b16 %v550, %v549
  %vm553 = vcmask 130048
  %v555 = vsel %vm553, %v545, 0
  %v558 = vsel %vm553, %v546, 0
  %560 = vmatprep.subr.bf16.mxu0 0
  %561 = vmatpush1.bf16.msra.mxu0 %v551
  %562 = vmatprep.subr.bf16.mxu0 0
  %563 = vmatpush1.bf16.msra.mxu0 0
  %564 = vmatprep.subr.bf16.mxu0 0
  %565 = vmatpush1.bf16.msra.mxu0 0
  %566 = vmatprep.subr.bf16.mxu0 0
  %567 = vmatpush1.bf16.msra.mxu0 0
  %568 = vmatprep.subr.bf16.mxu0 0
  %569 = vmatpush1.bf16.msra.mxu0 0
  %570 = vmatprep.subr.bf16.mxu0 0
  %571 = vmatpush1.bf16.msra.mxu0 0
  %572 = vmatprep.subr.bf16.mxu0 0
  %573 = vmatpush1.bf16.msra.mxu0 0
  %574 = vmatprep.subr.bf16.mxu0 0
  %575 = vmatpush1.bf16.msra.mxu0 0
  %576 = vmatprep.subr.bf16.mxu0 0
  %577 = vmatpush1.bf16.msra.mxu0 0
  %578 = vmatprep.subr.bf16.mxu0 0
  %579 = vmatpush1.bf16.msra.mxu0 0
  %580 = vmatprep.subr.bf16.mxu0 0
  %581 = vmatpush1.bf16.msra.mxu0 0
  %582 = vmatprep.subr.bf16.mxu0 0
  %583 = vmatpush1.bf16.msra.mxu0 0
  %584 = vmatprep.subr.bf16.mxu0 0
  %585 = vmatpush1.bf16.msra.mxu0 0
  %586 = vmatprep.subr.bf16.mxu0 0
  %587 = vmatpush1.bf16.msra.mxu0 0
  %588 = vmatprep.subr.bf16.mxu0 0
  %589 = vmatpush1.bf16.msra.mxu0 0
  %590 = vmatprep.subr.bf16.mxu0 0
  %591 = vmatpush1.bf16.msra.mxu0 0
  %592 = vmatprep.mubr.bf16.mxu0 0
  %593 = vmatmul.mubr.bf16.gmra.mrb[0].mxu0 %v555
  %v594 = vpop.f32.mrb[0].mxu0
  %v595 = vadd.f32 0.0, %v594
  %v596 = vpop.f32.mrb[0].mxu0
  %v597 = vpop.f32.mrb[0].mxu0
  %v598 = vadd.f32 0.0, %v597
  %v599 = vpop.f32.mrb[0].mxu0
  %600 = vmatprep.mubr.bf16.mxu0 0
  %601 = vmatmul.mubr.bf16.gmra.mrb[0].mxu0 %v558
  %v602 = vpop.f32.mrb[0].mxu0
  %v603 = vadd.f32 0.0, %v602
  %v604 = vpop.f32.mrb[0].mxu0
  %v605 = vpop.f32.mrb[0].mxu0
  %v606 = vadd.f32 0.0, %v605
  %v607 = vpop.f32.mrb[0].mxu0
  %608 = vdwg.mxu0
  %v609 = vpack.c.bf16 %v598, %v595
  %v610 = vpack.c.bf16 %v606, %v603
  %v611 = vld [vmem:[%s3] sm:$0xff]
  %v612 = vld [vmem:[%s3 + $0x8] sm:$0xff]
  %v613 = vld [vmem:[%s3 + $0x10] sm:$0xff]
  %v614 = vld [vmem:[%s3 + $0x18] sm:$0xff]
  %v615 = vld [vmem:[%s3 + $0x20] sm:$0xff]
  %v616 = vld [vmem:[%s3 + $0x28] sm:$0xff]
  %v617 = vld [vmem:[%s3 + $0x30] sm:$0xff]
  %v618 = vld [vmem:[%s3 + $0x38] sm:$0xff]
  %v619 = vld [vmem:[%s3 + $0x40] sm:$0xff]
  %v620 = vld [vmem:[%s3 + $0x48] sm:$0xff]
  %v621 = vld [vmem:[%s3 + $0x50] sm:$0xff]
  %v622 = vld [vmem:[%s3 + $0x58] sm:$0xff]
  %v623 = vld [vmem:[%s3 + $0x60] sm:$0xff]
  %v624 = vld [vmem:[%s3 + $0x68] sm:$0xff]
  %v625 = vld [vmem:[%s3 + $0x70] sm:$0xff]
  %v626 = vld [vmem:[%s3 + $0x78] sm:$0xff]
  %v643 = vunpack.c.l.b16 %v611
  %v644 = vunpack.c.h.b16 %v611
  %v645 = vunpack.c.l.b16 %v612
  %v646 = vunpack.c.h.b16 %v612
  %v647 = vunpack.c.l.b16 %v613
  %v648 = vunpack.c.h.b16 %v613
  %v649 = vunpack.c.l.b16 %v614
  %v650 = vunpack.c.h.b16 %v614
  %v651 = vunpack.c.l.b16 %v615
  %v652 = vunpack.c.h.b16 %v615
  %v653 = vunpack.c.l.b16 %v616
  %v654 = vunpack.c.h.b16 %v616
  %v655 = vunpack.c.l.b16 %v617
  %v656 = vunpack.c.h.b16 %v617
  %v657 = vunpack.c.l.b16 %v618
  %v658 = vunpack.c.h.b16 %v618
  %v659 = vunpack.c.l.b16 %v619
  %v660 = vunpack.c.h.b16 %v619
  %v661 = vunpack.c.l.b16 %v620
  %v662 = vunpack.c.h.b16 %v620
  %v663 = vunpack.c.l.b16 %v621
  %v664 = vunpack.c.h.b16 %v621
  %v665 = vunpack.c.l.b16 %v622
  %v666 = vunpack.c.h.b16 %v622
  %v667 = vunpack.c.l.b16 %v623
  %v668 = vunpack.c.h.b16 %v623
  %v669 = vunpack.c.l.b16 %v624
  %v670 = vunpack.c.h.b16 %v624
  %v671 = vunpack.c.l.b16 %v625
  %v672 = vunpack.c.h.b16 %v625
  %v673 = vunpack.c.l.b16 %v626
  %v674 = vunpack.c.h.b16 %v626
  %v675 = vpack.c.b16 %v645, %v643
  %v676 = vpack.c.b16 %v646, %v644
  %v677 = vpack.c.b16 %v649, %v647
  %v678 = vpack.c.b16 %v650, %v648
  %v679 = vpack.c.b16 %v653, %v651
  %v680 = vpack.c.b16 %v654, %v652
  %v681 = vpack.c.b16 %v657, %v655
  %v682 = vpack.c.b16 %v658, %v656
  %v683 = vpack.c.b16 %v661, %v659
  %v684 = vpack.c.b16 %v662, %v660
  %v685 = vpack.c.b16 %v665, %v663
  %v686 = vpack.c.b16 %v666, %v664
  %v687 = vpack.c.b16 %v669, %v667
  %v688 = vpack.c.b16 %v670, %v668
  %v689 = vpack.c.b16 %v673, %v671
  %v690 = vpack.c.b16 %v674, %v672
  %707 = vmatprep.subr.bf16.mxu0 %v676
  %708 = vmatpush1.bf16.msra.mxu0 %v675
  %709 = vmatprep.subr.bf16.mxu0 %v678
  %710 = vmatpush1.bf16.msra.mxu0 %v677
  %711 = vmatprep.subr.bf16.mxu0 %v680
  %712 = vmatpush1.bf16.msra.mxu0 %v679
  %713 = vmatprep.subr.bf16.mxu0 %v682
  %714 = vmatpush1.bf16.msra.mxu0 %v681
  %715 = vmatprep.subr.bf16.mxu0 %v684
  %716 = vmatpush1.bf16.msra.mxu0 %v683
  %717 = vmatprep.subr.bf16.mxu0 %v686
  %718 = vmatpush1.bf16.msra.mxu0 %v685
  %719 = vmatprep.subr.bf16.mxu0 %v688
  %720 = vmatpush1.bf16.msra.mxu0 %v687
  %721 = vmatprep.subr.bf16.mxu0 %v690
  %722 = vmatpush1.bf16.msra.mxu0 %v689
  %723 = vmatprep.subr.bf16.mxu0 0
  %724 = vmatpush1.bf16.msra.mxu0 0
  %725 = vmatprep.subr.bf16.mxu0 0
  %726 = vmatpush1.bf16.msra.mxu0 0
  %727 = vmatprep.subr.bf16.mxu0 0
  %728 = vmatpush1.bf16.msra.mxu0 0
  %729 = vmatprep.subr.bf16.mxu0 0
  %730 = vmatpush1.bf16.msra.mxu0 0
  %731 = vmatprep.subr.bf16.mxu0 0
  %732 = vmatpush1.bf16.msra.mxu0 0
  %733 = vmatprep.subr.bf16.mxu0 0
  %734 = vmatpush1.bf16.msra.mxu0 0
  %735 = vmatprep.subr.bf16.mxu0 0
  %736 = vmatpush1.bf16.msra.mxu0 0
  %737 = vmatprep.subr.bf16.mxu0 0
  %738 = vmatpush1.bf16.msra.mxu0 0
  %739 = vmatprep.mubr.bf16.mxu0 0
  %740 = vmatmul.mubr.bf16.gmra.mrb[0].mxu0 %v609
  %v741 = vpop.f32.mrb[0].mxu0
  %v742 = vadd.f32 0.0, %v741
  %v743 = vpop.f32.mrb[0].mxu0
  %v744 = vadd.f32 0.0, %v743
  %v745 = vpop.f32.mrb[0].mxu0
  %v746 = vadd.f32 0.0, %v745
  %v747 = vpop.f32.mrb[0].mxu0
  %v748 = vadd.f32 0.0, %v747
  %749 = vmatprep.mubr.bf16.mxu0 0
  %750 = vmatmul.mubr.bf16.gmra.mrb[0].mxu0 %v610
  %v751 = vpop.f32.mrb[0].mxu0
  %v752 = vadd.f32 0.0, %v751
  %v753 = vpop.f32.mrb[0].mxu0
  %v754 = vadd.f32 0.0, %v753
  %v755 = vpop.f32.mrb[0].mxu0
  %v756 = vadd.f32 0.0, %v755
  %v757 = vpop.f32.mrb[0].mxu0
  %v758 = vadd.f32 0.0, %v757
  %759 = vdwg.mxu0
  %v760 = vand.u32 %v526, 1
  %v761 = vand.u32 %v527, 1
  %v762 = vand.u32 %v528, 1
  %v763 = vand.u32 %v529, 1
  %v764 = vmul.u32 %v760, 2
  %v765 = vmul.u32 %v761, 2
  %v766 = vmul.u32 %v762, 2
  %v767 = vmul.u32 %v763, 2
  %v768 = vand.u32 %v530, 1
  %v769 = vadd.s32 %v764, %v768
  %v770 = vadd.s32 %v765, %v768
  %v771 = vadd.s32 %v766, %v768
  %v772 = vadd.s32 %v767, %v768
  %v773 = vcvt.s32.f32 %v769
  %v774 = vcvt.s32.f32 %v770
  %v775 = vcvt.s32.f32 %v771
  %v776 = vcvt.s32.f32 %v772
  %vm777 = vcmp.eq.f32.partialorder %v744, %v773
  %vm778 = vcmp.eq.f32.partialorder %v748, %v774
  %vm779 = vcmp.eq.f32.partialorder %v754, %v775
  %vm780 = vcmp.eq.f32.partialorder %v758, %v776
  %v781 = vsel %vm777, %v742, 0.0
  %v782 = vsel %vm778, %v746, 0.0
  %v783 = vsel %vm779, %v752, 0.0
  %v784 = vsel %vm780, %v756, 0.0
  %v785 = vld [vmem:[%s1] sm:$0xff]
  %v786 = vld [vmem:[%s1 + $0x8] sm:$0xff]
  %v787 = vld [vmem:[%s1 + $0x10] sm:$0xff]
  %v788 = vld [vmem:[%s1 + $0x18] sm:$0xff]
  %v789 = vmax.f32 %v781, %v785
  %v790 = vmax.f32 %v782, %v786
  %v791 = vmax.f32 %v783, %v787
  %v792 = vmax.f32 %v784, %v788
  %v793 = vadd.s32 %v526, 4294967294
  %v794 = vadd.s32 %v527, 4294967294
  %v795 = vadd.s32 %v528, 4294967294
  %v796 = vadd.s32 %v529, 4294967294
  %vm797 = vcmp.ge.s32.totalorder %v793, 0
  %vm798 = vcmp.ge.s32.totalorder %v794, 0
  %vm799 = vcmp.ge.s32.totalorder %v795, 0
  %vm800 = vcmp.ge.s32.totalorder %v796, 0
  %vm801 = vcmp.lt.s32.totalorder %v793, 16
  %vm802 = vcmp.lt.s32.totalorder %v794, 16
  %vm803 = vcmp.lt.s32.totalorder %v795, 16
  %vm804 = vcmp.lt.s32.totalorder %v796, 16
  %vm805 = vmand %vm797, %vm801
  %vm806 = vmand %vm798, %vm802
  %vm807 = vmand %vm799, %vm803
  %vm808 = vmand %vm800, %vm804
  %v809 = vadd.s32 %v526, 4294967295
  %v810 = vadd.s32 %v527, 4294967295
  %v811 = vadd.s32 %v528, 4294967295
  %v812 = vadd.s32 %v529, 4294967295
  %vm813 = vcmp.ge.s32.totalorder %v809, 0
  %vm814 = vcmp.ge.s32.totalorder %v810, 0
  %vm815 = vcmp.ge.s32.totalorder %v811, 0
  %vm816 = vcmp.ge.s32.totalorder %v812, 0
  %vm817 = vcmp.lt.s32.totalorder %v809, 16
  %vm818 = vcmp.lt.s32.totalorder %v810, 16
  %vm819 = vcmp.lt.s32.totalorder %v811, 16
  %vm820 = vcmp.lt.s32.totalorder %v812, 16
  %vm821 = vmand %vm813, %vm817
  %vm822 = vmand %vm814, %vm818
  %vm823 = vmand %vm815, %vm819
  %vm824 = vmand %vm816, %vm820
  %v825 = vadd.s32 %v526, 1
  %v826 = vadd.s32 %v527, 1
  %v827 = vadd.s32 %v528, 1
  %v828 = vadd.s32 %v529, 1
  %vm829 = vcmp.ge.s32.totalorder %v825, 0
  %vm830 = vcmp.ge.s32.totalorder %v826, 0
  %vm831 = vcmp.ge.s32.totalorder %v827, 0
  %vm832 = vcmp.ge.s32.totalorder %v828, 0
  %vm833 = vcmp.lt.s32.totalorder %v825, 16
  %vm834 = vcmp.lt.s32.totalorder %v826, 16
  %vm835 = vcmp.lt.s32.totalorder %v827, 16
  %vm836 = vcmp.lt.s32.totalorder %v828, 16
  %vm837 = vmand %vm829, %vm833
  %vm838 = vmand %vm830, %vm834
  %vm839 = vmand %vm831, %vm835
  %vm840 = vmand %vm832, %vm836
  %v841 = vadd.s32 %v526, 2
  %v842 = vadd.s32 %v527, 2
  %v843 = vadd.s32 %v528, 2
  %v844 = vadd.s32 %v529, 2
  %vm845 = vcmp.ge.s32.totalorder %v841, 0
  %vm846 = vcmp.ge.s32.totalorder %v842, 0
  %vm847 = vcmp.ge.s32.totalorder %v843, 0
  %vm848 = vcmp.ge.s32.totalorder %v844, 0
  %vm849 = vcmp.lt.s32.totalorder %v841, 16
  %vm850 = vcmp.lt.s32.totalorder %v842, 16
  %vm851 = vcmp.lt.s32.totalorder %v843, 16
  %vm852 = vcmp.lt.s32.totalorder %v844, 16
  %vm853 = vmand %vm845, %vm849
  %vm854 = vmand %vm846, %vm850
  %vm855 = vmand %vm847, %vm851
  %vm856 = vmand %vm848, %vm852
  %s857 = smul.u32 4, 80
  %s858 = smul.u32 %s857, 1
  %s859 = sshll.u32 %s858, 4
  %860 = dma.done [#allocation3], %s859
  %vm861 = vcmp.gt.f32.partialorder %v789, 0.0
  %vm862 = vcmp.gt.f32.partialorder %v790, 0.0
  %vm863 = vcmp.gt.f32.partialorder %v791, 0.0
  %vm864 = vcmp.gt.f32.partialorder %v792, 0.0
  %v865 = vstv %s518
  %v866 = vmul.f32 %v865, %v789
  %v867 = vmul.f32 %v865, %v790
  %v868 = vmul.f32 %v865, %v791
  %v869 = vmul.f32 %v865, %v792
  %v870 = vsel %vm861, %v789, %v866
  %v871 = vsel %vm862, %v790, %v867
  %v872 = vsel %vm863, %v791, %v868
  %v873 = vsel %vm864, %v792, %v869
  %v874 = vrot.slane %v870, 6
  %v875 = vrot.slane %v871, 6
  %v876 = vrot.slane %v872, 6
  %v877 = vrot.slane %v873, 6
  %vm878 = vcmp.lt.s32.totalorder %v520, 2
  %v879 = vsel %vm878, %v876, %v877
  %v880 = vsel %vm878, %v875, %v876
  %v881 = vsel %vm878, %v874, %v875
  %v882 = vsel %vm878, %v877, %v874
  %v883 = vsel %vm805, %v882, 0.0
  %v884 = vsel %vm806, %v881, 0.0
  %v885 = vsel %vm807, %v880, 0.0
  %v886 = vsel %vm808, %v879, 0.0
  %v887 = vrot.slane %v870, 7
  %v888 = vrot.slane %v871, 7
  %v889 = vrot.slane %v872, 7
  %v890 = vrot.slane %v873, 7
  %vm891 = vcmp.lt.s32.totalorder %v520, 1
  %v892 = vsel %vm891, %v889, %v890
  %v893 = vsel %vm891, %v888, %v889
  %v894 = vsel %vm891, %v887, %v888
  %v895 = vsel %vm891, %v890, %v887
  %v896 = vsel %vm821, %v895, 0.0
  %v897 = vsel %vm822, %v894, 0.0
  %v898 = vsel %vm823, %v893, 0.0
  %v899 = vsel %vm824, %v892, 0.0
  %v900 = vrot.slane %v870, 1
  %v901 = vrot.slane %v871, 1
  %v902 = vrot.slane %v872, 1
  %v903 = vrot.slane %v873, 1
  %vm904 = vcmp.lt.s32.totalorder %v520, 7
  %v905 = vsel %vm904, %v902, %v903
  %v906 = vsel %vm904, %v901, %v902
  %v907 = vsel %vm904, %v900, %v901
  %v908 = vsel %vm904, %v903, %v900
  %v909 = vsel %vm837, %v907, 0.0
  %v910 = vsel %vm838, %v906, 0.0
  %v911 = vsel %vm839, %v905, 0.0
  %v912 = vsel %vm840, %v908, 0.0
  %v913 = vrot.slane %v870, 2
  %v914 = vrot.slane %v871, 2
  %v915 = vrot.slane %v872, 2
  %v916 = vrot.slane %v873, 2
  %vm917 = vcmp.lt.s32.totalorder %v520, 6
  %v918 = vsel %vm917, %v915, %v916
  %v919 = vsel %vm917, %v914, %v915
  %v920 = vsel %vm917, %v913, %v914
  %v921 = vsel %vm917, %v916, %v913
  %v922 = vsel %vm853, %v920, 0.0
  %v923 = vsel %vm854, %v919, 0.0
  %v924 = vsel %vm855, %v918, 0.0
  %v925 = vsel %vm856, %v921, 0.0
  %v926 = vpack.c.bf16 %v884, %v883
  %v927 = vpack.c.bf16 %v897, %v896
  %v928 = vpack.c.bf16 %v871, %v870
  %v929 = vpack.c.bf16 %v910, %v909
  %v930 = vpack.c.bf16 %v923, %v922
  %v931 = vpack.c.bf16 %v886, %v885
  %v932 = vpack.c.bf16 %v899, %v898
  %v933 = vpack.c.bf16 %v873, %v872
  %v934 = vpack.c.bf16 %v912, %v911
  %v935 = vpack.c.bf16 %v925, %v924
  %v936 = vld [vmem:[#allocation2] sm:$0xff]
  %v937 = vld [vmem:[#allocation2 + $0x8] sm:$0xff]
  %v938 = vld [vmem:[#allocation2 + $0x10] sm:$0xff]
  %v939 = vld [vmem:[#allocation2 + $0x18] sm:$0xff]
  %v940 = vld [vmem:[#allocation2 + $0x20] sm:$0xff]
  %v941 = vld [vmem:[#allocation2 + $0x28] sm:$0xff]
  %v942 = vld [vmem:[#allocation2 + $0x30] sm:$0xff]
  %v943 = vld [vmem:[#allocation2 + $0x38] sm:$0xff]
  %v944 = vld [vmem:[#allocation2 + $0x40] sm:$0xff]
  %v945 = vld [vmem:[#allocation2 + $0x48] sm:$0xff]
  %v946 = vld [vmem:[#allocation2 + $0x50] sm:$0xff]
  %v947 = vld [vmem:[#allocation2 + $0x58] sm:$0xff]
  %v948 = vld [vmem:[#allocation2 + $0x60] sm:$0xff]
  %v949 = vld [vmem:[#allocation2 + $0x68] sm:$0xff]
  %v950 = vld [vmem:[#allocation2 + $0x70] sm:$0xff]
  %v951 = vld [vmem:[#allocation2 + $0x78] sm:$0xff]
  %v952 = vld [vmem:[#allocation2 + $0x80] sm:$0xff]
  %v953 = vld [vmem:[#allocation2 + $0x88] sm:$0xff]
  %v954 = vld [vmem:[#allocation2 + $0x90] sm:$0xff]
  %v955 = vld [vmem:[#allocation2 + $0x98] sm:$0xff]
  %v956 = vld [vmem:[#allocation2 + $0xa0] sm:$0xff]
  %v957 = vld [vmem:[#allocation2 + $0xa8] sm:$0xff]
  %v958 = vld [vmem:[#allocation2 + $0xb0] sm:$0xff]
  %v959 = vld [vmem:[#allocation2 + $0xb8] sm:$0xff]
  %v960 = vld [vmem:[#allocation2 + $0xc0] sm:$0xff]
  %v961 = vld [vmem:[#allocation2 + $0xc8] sm:$0xff]
  %v962 = vld [vmem:[#allocation2 + $0xd0] sm:$0xff]
  %v963 = vld [vmem:[#allocation2 + $0xd8] sm:$0xff]
  %v964 = vld [vmem:[#allocation2 + $0xe0] sm:$0xff]
  %v965 = vld [vmem:[#allocation2 + $0xe8] sm:$0xff]
  %v966 = vld [vmem:[#allocation2 + $0xf0] sm:$0xff]
  %v967 = vld [vmem:[#allocation2 + $0xf8] sm:$0xff]
  %v968 = vld [vmem:[#allocation2 + $0x100] sm:$0xff]
  %v969 = vld [vmem:[#allocation2 + $0x108] sm:$0xff]
  %v970 = vld [vmem:[#allocation2 + $0x110] sm:$0xff]
  %v971 = vld [vmem:[#allocation2 + $0x118] sm:$0xff]
  %v972 = vld [vmem:[#allocation2 + $0x120] sm:$0xff]
  %v973 = vld [vmem:[#allocation2 + $0x128] sm:$0xff]
  %v974 = vld [vmem:[#allocation2 + $0x130] sm:$0xff]
  %v975 = vld [vmem:[#allocation2 + $0x138] sm:$0xff]
  %976 = vmatprep.subr.bf16.mxu0 0
  %977 = vmatpush1.bf16.msra.mxu0 %v936
  %978 = vmatprep.subr.bf16.mxu0 0
  %979 = vmatpush1.bf16.msra.mxu0 %v937
  %980 = vmatprep.subr.bf16.mxu0 0
  %981 = vmatpush1.bf16.msra.mxu0 %v938
  %982 = vmatprep.subr.bf16.mxu0 0
  %983 = vmatpush1.bf16.msra.mxu0 %v939
  %984 = vmatprep.subr.bf16.mxu0 0
  %985 = vmatpush1.bf16.msra.mxu0 %v940
  %986 = vmatprep.subr.bf16.mxu0 0
  %987 = vmatpush1.bf16.msra.mxu0 %v941
  %988 = vmatprep.subr.bf16.mxu0 0
  %989 = vmatpush1.bf16.msra.mxu0 %v942
  %990 = vmatprep.subr.bf16.mxu0 0
  %991 = vmatpush1.bf16.msra.mxu0 %v943
  %992 = vmatprep.subr.bf16.mxu0 0
  %993 = vmatpush1.bf16.msra.mxu0 %v944
  %994 = vmatprep.subr.bf16.mxu0 0
  %995 = vmatpush1.bf16.msra.mxu0 %v945
  %996 = vmatprep.subr.bf16.mxu0 0
  %997 = vmatpush1.bf16.msra.mxu0 %v946
  %998 = vmatprep.subr.bf16.mxu0 0
  %999 = vmatpush1.bf16.msra.mxu0 %v947
  %1000 = vmatprep.subr.bf16.mxu0 0
  %1001 = vmatpush1.bf16.msra.mxu0 %v948
  %1002 = vmatprep.subr.bf16.mxu0 0
  %1003 = vmatpush1.bf16.msra.mxu0 %v949
  %1004 = vmatprep.subr.bf16.mxu0 0
  %1005 = vmatpush1.bf16.msra.mxu0 %v950
  %1006 = vmatprep.subr.bf16.mxu0 0
  %1007 = vmatpush1.bf16.msra.mxu0 %v951
  %1008 = vmatprep.mubr.bf16.mxu0 %v927
  %1009 = vmatmul.mubr.bf16.gmra.mrb[0].mxu0 %v926
  %v1010 = vpop.f32.mrb[0].mxu0
  %v1011 = vadd.f32 0.0, %v1010
  %v1012 = vpop.f32.mrb[0].mxu0
  %v1013 = vpop.f32.mrb[0].mxu0
  %v1014 = vadd.f32 0.0, %v1013
  %v1015 = vpop.f32.mrb[0].mxu0
  %1016 = vmatprep.mubr.bf16.mxu0 %v932
  %1017 = vmatmul.mubr.bf16.gmra.mrb[0].mxu0 %v931
  %v1018 = vpop.f32.mrb[0].mxu0
  %v1019 = vadd.f32 0.0, %v1018
  %v1020 = vpop.f32.mrb[0].mxu0
  %v1021 = vpop.f32.mrb[0].mxu0
  %v1022 = vadd.f32 0.0, %v1021
  %v1023 = vpop.f32.mrb[0].mxu0
  %1024 = vdwg.mxu0
  %1025 = vmatprep.subr.bf16.mxu0 0
  %1026 = vmatpush1.bf16.msra.mxu0 %v952
  %1027 = vmatprep.subr.bf16.mxu0 0
  %1028 = vmatpush1.bf16.msra.mxu0 %v953
  %1029 = vmatprep.subr.bf16.mxu0 0
  %1030 = vmatpush1.bf16.msra.mxu0 %v954
  %1031 = vmatprep.subr.bf16.mxu0 0
  %1032 = vmatpush1.bf16.msra.mxu0 %v955
  %1033 = vmatprep.subr.bf16.mxu0 0
  %1034 = vmatpush1.bf16.msra.mxu0 %v956
  %1035 = vmatprep.subr.bf16.mxu0 0
  %1036 = vmatpush1.bf16.msra.mxu0 %v957
  %1037 = vmatprep.subr.bf16.mxu0 0
  %1038 = vmatpush1.bf16.msra.mxu0 %v958
  %1039 = vmatprep.subr.bf16.mxu0 0
  %1040 = vmatpush1.bf16.msra.mxu0 %v959
  %1041 = vmatprep.subr.bf16.mxu0 0
  %1042 = vmatpush1.bf16.msra.mxu0 %v960
  %1043 = vmatprep.subr.bf16.mxu0 0
  %1044 = vmatpush1.bf16.msra.mxu0 %v961
  %1045 = vmatprep.subr.bf16.mxu0 0
  %1046 = vmatpush1.bf16.msra.mxu0 %v962
  %1047 = vmatprep.subr.bf16.mxu0 0
  %1048 = vmatpush1.bf16.msra.mxu0 %v963
  %1049 = vmatprep.subr.bf16.mxu0 0
  %1050 = vmatpush1.bf16.msra.mxu0 %v964
  %1051 = vmatprep.subr.bf16.mxu0 0
  %1052 = vmatpush1.bf16.msra.mxu0 %v965
  %1053 = vmatprep.subr.bf16.mxu0 0
  %1054 = vmatpush1.bf16.msra.mxu0 %v966
  %1055 = vmatprep.subr.bf16.mxu0 0
  %1056 = vmatpush1.bf16.msra.mxu0 %v967
  %1057 = vmatprep.mubr.bf16.mxu0 %v929
  %1058 = vmatmul.mubr.bf16.gmra.mrb[0].mxu0 %v928
  %v1059 = vpop.f32.mrb[0].mxu0
  %v1060 = vadd.f32 %v1011, %v1059
  %v1061 = vpop.f32.mrb[0].mxu0
  %v1062 = vpop.f32.mrb[0].mxu0
  %v1063 = vadd.f32 %v1014, %v1062
  %v1064 = vpop.f32.mrb[0].mxu0
  %1065 = vmatprep.mubr.bf16.mxu0 %v934
  %1066 = vmatmul.mubr.bf16.gmra.mrb[0].mxu0 %v933
  %v1067 = vpop.f32.mrb[0].mxu0
  %v1068 = vadd.f32 %v1019, %v1067
  %v1069 = vpop.f32.mrb[0].mxu0
  %v1070 = vpop.f32.mrb[0].mxu0
  %v1071 = vadd.f32 %v1022, %v1070
  %v1072 = vpop.f32.mrb[0].mxu0
  %1073 = vdwg.mxu0
  %1074 = vmatprep.subr.bf16.mxu0 0
  %1075 = vmatpush1.bf16.msra.mxu0 %v968
  %1076 = vmatprep.subr.bf16.mxu0 0
  %1077 = vmatpush1.bf16.msra.mxu0 %v969
  %1078 = vmatprep.subr.bf16.mxu0 0
  %1079 = vmatpush1.bf16.msra.mxu0 %v970
  %1080 = vmatprep.subr.bf16.mxu0 0
  %1081 = vmatpush1.bf16.msra.mxu0 %v971
  %1082 = vmatprep.subr.bf16.mxu0 0
  %1083 = vmatpush1.bf16.msra.mxu0 %v972
  %1084 = vmatprep.subr.bf16.mxu0 0
  %1085 = vmatpush1.bf16.msra.mxu0 %v973
  %1086 = vmatprep.subr.bf16.mxu0 0
  %1087 = vmatpush1.bf16.msra.mxu0 %v974
  %1088 = vmatprep.subr.bf16.mxu0 0
  %1089 = vmatpush1.bf16.msra.mxu0 %v975
  %1090 = vmatprep.subr.bf16.mxu0 0
  %1091 = vmatpush1.bf16.msra.mxu0 0
  %1092 = vmatprep.subr.bf16.mxu0 0
  %1093 = vmatpush1.bf16.msra.mxu0 0
  %1094 = vmatprep.subr.bf16.mxu0 0
  %1095 = vmatpush1.bf16.msra.mxu0 0
  %1096 = vmatprep.subr.bf16.mxu0 0
  %1097 = vmatpush1.bf16.msra.mxu0 0
  %1098 = vmatprep.subr.bf16.mxu0 0
  %1099 = vmatpush1.bf16.msra.mxu0 0
  %1100 = vmatprep.subr.bf16.mxu0 0
  %1101 = vmatpush1.bf16.msra.mxu0 0
  %1102 = vmatprep.subr.bf16.mxu0 0
  %1103 = vmatpush1.bf16.msra.mxu0 0
  %1104 = vmatprep.subr.bf16.mxu0 0
  %1105 = vmatpush1.bf16.msra.mxu0 0
  %1106 = vmatprep.mubr.bf16.mxu0 0
  %1107 = vmatmul.mubr.bf16.gmra.mrb[0].mxu0 %v930
  %v1108 = vpop.f32.mrb[0].mxu0
  %v1109 = vadd.f32 %v1060, %v1108
  %v1110 = vpop.f32.mrb[0].mxu0
  %v1111 = vpop.f32.mrb[0].mxu0
  %v1112 = vadd.f32 %v1063, %v1111
  %v1113 = vpop.f32.mrb[0].mxu0
  %1114 = vmatprep.mubr.bf16.mxu0 0
  %1115 = vmatmul.mubr.bf16.gmra.mrb[0].mxu0 %v935
  %v1116 = vpop.f32.mrb[0].mxu0
  %v1117 = vadd.f32 %v1068, %v1116
  %v1118 = vpop.f32.mrb[0].mxu0
  %v1119 = vpop.f32.mrb[0].mxu0
  %v1120 = vadd.f32 %v1071, %v1119
  %v1121 = vpop.f32.mrb[0].mxu0
  %1122 = vdwg.mxu0
  %v1123 = vadd.f32 %v1109, %v1112
  %v1124 = vadd.f32 %v1123, %v1117
  %v1125 = vadd.f32 %v1124, %v1120
  %v1126 = vrot.slane %v1125, 4
  %v1127 = vadd.f32 %v1125, %v1126
  %v1128 = vrot.slane %v1127, 2
  %v1129 = vadd.f32 %v1127, %v1128
  %v1130 = vrot.slane %v1129, 1
  %v1131 = vadd.f32 %v1129, %v1130
  %v1132 = vmul.f32 %v1109, %v1109
  %v1133 = vmul.f32 %v1112, %v1112
  %v1134 = vmul.f32 %v1117, %v1117
  %v1135 = vmul.f32 %v1120, %v1120
  %v1136 = vadd.f32 %v1132, %v1133
  %v1137 = vadd.f32 %v1136, %v1134
  %v1138 = vadd.f32 %v1137, %v1135
  %v1139 = vrot.slane %v1138, 4
  %v1140 = vadd.f32 %v1138, %v1139
  %v1141 = vrot.slane %v1140, 2
  %v1142 = vadd.f32 %v1140, %v1141
  %v1143 = vrot.slane %v1142, 1
  %v1144 = vadd.f32 %v1142, %v1143
  %vm1145 = vcmask 1040384
  %v1146 = vsel %vm1145, %v1131, %v1144
  %1147 = vrot.lane.b32.xlu0 %v1146, 64
  %v1148 = vpop.permute.xlu0 %1147
  %v1149 = vadd.f32 %v1146, %v1148
  %1150 = vrot.lane.b32.xlu0 %v1149, 32
  %v1151 = vpop.permute.xlu0 %1150
  %v1152 = vadd.f32 %v1149, %v1151
  %1153 = vrot.lane.b32.xlu0 %v1152, 16
  %v1154 = vpop.permute.xlu0 %1153
  %v1155 = vadd.f32 %v1152, %v1154
  %1156 = vrot.lane.b32.xlu0 %v1155, 8
  %v1157 = vpop.permute.xlu0 %1156
  %v1158 = vadd.f32 %v1155, %v1157
  %v1159 = vmul.f32 %v1158, 0.001953125
  %v1160 = vmul.f32 %v1159, %v1159
  %v1162 = vrot.slane %v1160, 7
  %v1164 = vsub.f32 %v1159, %v1162
  %v1165 = vld [vmem:[%s5] sm:$0x1]
  %v1166 = vadd.f32 %v1164, 1e-05
  %v1167 = vrsqrt.pop %v1166
  %v1170 = vunpack.c.l.s4 1966171168
  %v1171 = vunpack.c.0.s8 %v1170
  %v1172 = vlaneseq
  %v1173 = vshrl.u32 %v1172, 7
  %v1174 = vsub.s32 %v1171, %v1173
  %v1175 = vrot.slane %v1167, %v1174
  %v1176 = vcombine.high %v1175, %v1175
  %v1178 = vunpack.c.l.s4 1966171168
  %v1179 = vunpack.c.0.s8 %v1178
  %v1180 = vlaneseq
  %v1181 = vshrl.u32 %v1180, 7
  %v1182 = vsub.s32 %v1179, %v1181
  %v1183 = vrot.slane %v1176, %v1182
  %v1185 = vmul.f32 %v1165, %v1183
  %v1186 = vlaneseq
  %v1187 = vshrl.u32 %v1186, 7
  %v1188 = vsub.s32 0, %v1187
  %v1189 = vrot.slane %v1159, %v1188
  %v1190 = vsub.f32 %v1109, %v1189
  %v1191 = vsub.f32 %v1112, %v1189
  %v1192 = vsub.f32 %v1117, %v1189
  %v1193 = vsub.f32 %v1120, %v1189
  %v1195 = vlaneseq
  %v1196 = vshrl.u32 %v1195, 7
  %v1197 = vsub.s32 0, %v1196
  %v1198 = vrot.slane %v1185, %v1197
  %v1200 = vmul.f32 %v1190, %v1198
  %v1201 = vmul.f32 %v1191, %v1198
  %v1202 = vmul.f32 %v1192, %v1198
  %v1203 = vmul.f32 %v1193, %v1198
  %v1204 = vld [vmem:[%s6] sm:$0x1]
  %v1206 = vlaneseq
  %v1207 = vshrl.u32 %v1206, 7
  %v1208 = vsub.s32 0, %v1207
  %v1209 = vrot.slane %v1204, %v1208
  %v1211 = vadd.f32 %v1200, %v1209
  %v1212 = vadd.f32 %v1201, %v1209
  %v1213 = vadd.f32 %v1202, %v1209
  %v1214 = vadd.f32 %v1203, %v1209
  %v1215 = vmax.f32 %v789, %v1211
  %v1216 = vmax.f32 %v790, %v1212
  %v1217 = vmax.f32 %v791, %v1213
  %v1218 = vmax.f32 %v792, %v1214
  %s1219 = sshll.u32 %s858, 4
  %1220 = dma.done %s151, %s1219
  %vm1221 = vcmp.gt.f32.partialorder %v1215, 0.0
  %vm1222 = vcmp.gt.f32.partialorder %v1216, 0.0
  %vm1223 = vcmp.gt.f32.partialorder %v1217, 0.0
  %vm1224 = vcmp.gt.f32.partialorder %v1218, 0.0
  %v1225 = vmul.f32 %v865, %v1215
  %v1226 = vmul.f32 %v865, %v1216
  %v1227 = vmul.f32 %v865, %v1217
  %v1228 = vmul.f32 %v865, %v1218
  %v1229 = vsel %vm1221, %v1215, %v1225
  %v1230 = vsel %vm1222, %v1216, %v1226
  %v1231 = vsel %vm1223, %v1217, %v1227
  %v1232 = vsel %vm1224, %v1218, %v1228
  %v1233 = vrot.slane %v1229, 6
  %v1234 = vrot.slane %v1230, 6
  %v1235 = vrot.slane %v1231, 6
  %v1236 = vrot.slane %v1232, 6
  %v1237 = vsel %vm878, %v1235, %v1236
  %v1238 = vsel %vm878, %v1234, %v1235
  %v1239 = vsel %vm878, %v1233, %v1234
  %v1240 = vsel %vm878, %v1236, %v1233
  %v1241 = vsel %vm805, %v1240, 0.0
  %v1242 = vsel %vm806, %v1239, 0.0
  %v1243 = vsel %vm807, %v1238, 0.0
  %v1244 = vsel %vm808, %v1237, 0.0
  %v1245 = vrot.slane %v1229, 7
  %v1246 = vrot.slane %v1230, 7
  %v1247 = vrot.slane %v1231, 7
  %v1248 = vrot.slane %v1232, 7
  %v1249 = vsel %vm891, %v1247, %v1248
  %v1250 = vsel %vm891, %v1246, %v1247
  %v1251 = vsel %vm891, %v1245, %v1246
  %v1252 = vsel %vm891, %v1248, %v1245
  %v1253 = vsel %vm821, %v1252, 0.0
  %v1254 = vsel %vm822, %v1251, 0.0
  %v1255 = vsel %vm823, %v1250, 0.0
  %v1256 = vsel %vm824, %v1249, 0.0
  %v1257 = vrot.slane %v1229, 1
  %v1258 = vrot.slane %v1230, 1
  %v1259 = vrot.slane %v1231, 1
  %v1260 = vrot.slane %v1232, 1
  %v1261 = vsel %vm904, %v1259, %v1260
  %v1262 = vsel %vm904, %v1258, %v1259
  %v1263 = vsel %vm904, %v1257, %v1258
  %v1264 = vsel %vm904, %v1260, %v1257
  %v1265 = vsel %vm837, %v1263, 0.0
  %v1266 = vsel %vm838, %v1262, 0.0
  %v1267 = vsel %vm839, %v1261, 0.0
  %v1268 = vsel %vm840, %v1264, 0.0
  %v1269 = vrot.slane %v1229, 2
  %v1270 = vrot.slane %v1230, 2
  %v1271 = vrot.slane %v1231, 2
  %v1272 = vrot.slane %v1232, 2
  %v1273 = vsel %vm917, %v1271, %v1272
  %v1274 = vsel %vm917, %v1270, %v1271
  %v1275 = vsel %vm917, %v1269, %v1270
  %v1276 = vsel %vm917, %v1272, %v1269
  %v1277 = vsel %vm853, %v1275, 0.0
  %v1278 = vsel %vm854, %v1274, 0.0
  %v1279 = vsel %vm855, %v1273, 0.0
  %v1280 = vsel %vm856, %v1276, 0.0
  %v1281 = vpack.c.bf16 %v1242, %v1241
  %v1282 = vpack.c.bf16 %v1254, %v1253
  %v1283 = vpack.c.bf16 %v1230, %v1229
  %v1284 = vpack.c.bf16 %v1266, %v1265
  %v1285 = vpack.c.bf16 %v1278, %v1277
  %v1286 = vpack.c.bf16 %v1244, %v1243
  %v1287 = vpack.c.bf16 %v1256, %v1255
  %v1288 = vpack.c.bf16 %v1232, %v1231
  %v1289 = vpack.c.bf16 %v1268, %v1267
  %v1290 = vpack.c.bf16 %v1280, %v1279
  %v1291 = vld [vmem:[%s150] sm:$0xff]
  %v1292 = vld [vmem:[%s150 + $0x8] sm:$0xff]
  %v1293 = vld [vmem:[%s150 + $0x10] sm:$0xff]
  %v1294 = vld [vmem:[%s150 + $0x18] sm:$0xff]
  %v1295 = vld [vmem:[%s150 + $0x20] sm:$0xff]
  %v1296 = vld [vmem:[%s150 + $0x28] sm:$0xff]
  %v1297 = vld [vmem:[%s150 + $0x30] sm:$0xff]
  %v1298 = vld [vmem:[%s150 + $0x38] sm:$0xff]
  %v1299 = vld [vmem:[%s150 + $0x40] sm:$0xff]
  %v1300 = vld [vmem:[%s150 + $0x48] sm:$0xff]
  %v1301 = vld [vmem:[%s150 + $0x50] sm:$0xff]
  %v1302 = vld [vmem:[%s150 + $0x58] sm:$0xff]
  %v1303 = vld [vmem:[%s150 + $0x60] sm:$0xff]
  %v1304 = vld [vmem:[%s150 + $0x68] sm:$0xff]
  %v1305 = vld [vmem:[%s150 + $0x70] sm:$0xff]
  %v1306 = vld [vmem:[%s150 + $0x78] sm:$0xff]
  %v1307 = vld [vmem:[%s150 + $0x80] sm:$0xff]
  %v1308 = vld [vmem:[%s150 + $0x88] sm:$0xff]
  %v1309 = vld [vmem:[%s150 + $0x90] sm:$0xff]
  %v1310 = vld [vmem:[%s150 + $0x98] sm:$0xff]
  %v1311 = vld [vmem:[%s150 + $0xa0] sm:$0xff]
  %v1312 = vld [vmem:[%s150 + $0xa8] sm:$0xff]
  %v1313 = vld [vmem:[%s150 + $0xb0] sm:$0xff]
  %v1314 = vld [vmem:[%s150 + $0xb8] sm:$0xff]
  %v1315 = vld [vmem:[%s150 + $0xc0] sm:$0xff]
  %v1316 = vld [vmem:[%s150 + $0xc8] sm:$0xff]
  %v1317 = vld [vmem:[%s150 + $0xd0] sm:$0xff]
  %v1318 = vld [vmem:[%s150 + $0xd8] sm:$0xff]
  %v1319 = vld [vmem:[%s150 + $0xe0] sm:$0xff]
  %v1320 = vld [vmem:[%s150 + $0xe8] sm:$0xff]
  %v1321 = vld [vmem:[%s150 + $0xf0] sm:$0xff]
  %v1322 = vld [vmem:[%s150 + $0xf8] sm:$0xff]
  %v1323 = vld [vmem:[%s150 + $0x100] sm:$0xff]
  %v1324 = vld [vmem:[%s150 + $0x108] sm:$0xff]
  %v1325 = vld [vmem:[%s150 + $0x110] sm:$0xff]
  %v1326 = vld [vmem:[%s150 + $0x118] sm:$0xff]
  %v1327 = vld [vmem:[%s150 + $0x120] sm:$0xff]
  %v1328 = vld [vmem:[%s150 + $0x128] sm:$0xff]
  %v1329 = vld [vmem:[%s150 + $0x130] sm:$0xff]
  %v1330 = vld [vmem:[%s150 + $0x138] sm:$0xff]
  %1331 = vmatprep.subr.bf16.mxu0 0
  %1332 = vmatpush1.bf16.msra.mxu0 %v1291
  %1333 = vmatprep.subr.bf16.mxu0 0
  %1334 = vmatpush1.bf16.msra.mxu0 %v1292
  %1335 = vmatprep.subr.bf16.mxu0 0
  %1336 = vmatpush1.bf16.msra.mxu0 %v1293
  %1337 = vmatprep.subr.bf16.mxu0 0
  %1338 = vmatpush1.bf16.msra.mxu0 %v1294
  %1339 = vmatprep.subr.bf16.mxu0 0
  %1340 = vmatpush1.bf16.msra.mxu0 %v1295
  %1341 = vmatprep.subr.bf16.mxu0 0
  %1342 = vmatpush1.bf16.msra.mxu0 %v1296
  %1343 = vmatprep.subr.bf16.mxu0 0
  %1344 = vmatpush1.bf16.msra.mxu0 %v1297
  %1345 = vmatprep.subr.bf16.mxu0 0
  %1346 = vmatpush1.bf16.msra.mxu0 %v1298
  %1347 = vmatprep.subr.bf16.mxu0 0
  %1348 = vmatpush1.bf16.msra.mxu0 %v1299
  %1349 = vmatprep.subr.bf16.mxu0 0
  %1350 = vmatpush1.bf16.msra.mxu0 %v1300
  %1351 = vmatprep.subr.bf16.mxu0 0
  %1352 = vmatpush1.bf16.msra.mxu0 %v1301
  %1353 = vmatprep.subr.bf16.mxu0 0
  %1354 = vmatpush1.bf16.msra.mxu0 %v1302
  %1355 = vmatprep.subr.bf16.mxu0 0
  %1356 = vmatpush1.bf16.msra.mxu0 %v1303
  %1357 = vmatprep.subr.bf16.mxu0 0
  %1358 = vmatpush1.bf16.msra.mxu0 %v1304
  %1359 = vmatprep.subr.bf16.mxu0 0
  %1360 = vmatpush1.bf16.msra.mxu0 %v1305
  %1361 = vmatprep.subr.bf16.mxu0 0
  %1362 = vmatpush1.bf16.msra.mxu0 %v1306
  %1363 = vmatprep.mubr.bf16.mxu0 %v1282
  %1364 = vmatmul.mubr.bf16.gmra.mrb[0].mxu0 %v1281
  %v1365 = vpop.f32.mrb[0].mxu0
  %v1366 = vadd.f32 0.0, %v1365
  %v1367 = vpop.f32.mrb[0].mxu0
  %v1368 = vpop.f32.mrb[0].mxu0
  %v1369 = vadd.f32 0.0, %v1368
  %v1370 = vpop.f32.mrb[0].mxu0
  %1371 = vmatprep.mubr.bf16.mxu0 %v1287
  %1372 = vmatmul.mubr.bf16.gmra.mrb[0].mxu0 %v1286
  %v1373 = vpop.f32.mrb[0].mxu0
  %v1374 = vadd.f32 0.0, %v1373
  %v1375 = vpop.f32.mrb[0].mxu0
  %v1376 = vpop.f32.mrb[0].mxu0
  %v1377 = vadd.f32 0.0, %v1376
  %v1378 = vpop.f32.mrb[0].mxu0
  %1379 = vdwg.mxu0
  %1380 = vmatprep.subr.bf16.mxu0 0
  %1381 = vmatpush1.bf16.msra.mxu0 %v1307
  %1382 = vmatprep.subr.bf16.mxu0 0
  %1383 = vmatpush1.bf16.msra.mxu0 %v1308
  %1384 = vmatprep.subr.bf16.mxu0 0
  %1385 = vmatpush1.bf16.msra.mxu0 %v1309
  %1386 = vmatprep.subr.bf16.mxu0 0
  %1387 = vmatpush1.bf16.msra.mxu0 %v1310
  %1388 = vmatprep.subr.bf16.mxu0 0
  %1389 = vmatpush1.bf16.msra.mxu0 %v1311
  %1390 = vmatprep.subr.bf16.mxu0 0
  %1391 = vmatpush1.bf16.msra.mxu0 %v1312
  %1392 = vmatprep.subr.bf16.mxu0 0
  %1393 = vmatpush1.bf16.msra.mxu0 %v1313
  %1394 = vmatprep.subr.bf16.mxu0 0
  %1395 = vmatpush1.bf16.msra.mxu0 %v1314
  %1396 = vmatprep.subr.bf16.mxu0 0
  %1397 = vmatpush1.bf16.msra.mxu0 %v1315
  %1398 = vmatprep.subr.bf16.mxu0 0
  %1399 = vmatpush1.bf16.msra.mxu0 %v1316
  %1400 = vmatprep.subr.bf16.mxu0 0
  %1401 = vmatpush1.bf16.msra.mxu0 %v1317
  %1402 = vmatprep.subr.bf16.mxu0 0
  %1403 = vmatpush1.bf16.msra.mxu0 %v1318
  %1404 = vmatprep.subr.bf16.mxu0 0
  %1405 = vmatpush1.bf16.msra.mxu0 %v1319
  %1406 = vmatprep.subr.bf16.mxu0 0
  %1407 = vmatpush1.bf16.msra.mxu0 %v1320
  %1408 = vmatprep.subr.bf16.mxu0 0
  %1409 = vmatpush1.bf16.msra.mxu0 %v1321
  %1410 = vmatprep.subr.bf16.mxu0 0
  %1411 = vmatpush1.bf16.msra.mxu0 %v1322
  %1412 = vmatprep.mubr.bf16.mxu0 %v1284
  %1413 = vmatmul.mubr.bf16.gmra.mrb[0].mxu0 %v1283
  %v1414 = vpop.f32.mrb[0].mxu0
  %v1415 = vadd.f32 %v1366, %v1414
  %v1416 = vpop.f32.mrb[0].mxu0
  %v1417 = vpop.f32.mrb[0].mxu0
  %v1418 = vadd.f32 %v1369, %v1417
  %v1419 = vpop.f32.mrb[0].mxu0
  %1420 = vmatprep.mubr.bf16.mxu0 %v1289
  %1421 = vmatmul.mubr.bf16.gmra.mrb[0].mxu0 %v1288
  %v1422 = vpop.f32.mrb[0].mxu0
  %v1423 = vadd.f32 %v1374, %v1422
  %v1424 = vpop.f32.mrb[0].mxu0
  %v1425 = vpop.f32.mrb[0].mxu0
  %v1426 = vadd.f32 %v1377, %v1425
  %v1427 = vpop.f32.mrb[0].mxu0
  %1428 = vdwg.mxu0
  %1429 = vmatprep.subr.bf16.mxu0 0
  %1430 = vmatpush1.bf16.msra.mxu0 %v1323
  %1431 = vmatprep.subr.bf16.mxu0 0
  %1432 = vmatpush1.bf16.msra.mxu0 %v1324
  %1433 = vmatprep.subr.bf16.mxu0 0
  %1434 = vmatpush1.bf16.msra.mxu0 %v1325
  %1435 = vmatprep.subr.bf16.mxu0 0
  %1436 = vmatpush1.bf16.msra.mxu0 %v1326
  %1437 = vmatprep.subr.bf16.mxu0 0
  %1438 = vmatpush1.bf16.msra.mxu0 %v1327
  %1439 = vmatprep.subr.bf16.mxu0 0
  %1440 = vmatpush1.bf16.msra.mxu0 %v1328
  %1441 = vmatprep.subr.bf16.mxu0 0
  %1442 = vmatpush1.bf16.msra.mxu0 %v1329
  %1443 = vmatprep.subr.bf16.mxu0 0
  %1444 = vmatpush1.bf16.msra.mxu0 %v1330
  %1445 = vmatprep.subr.bf16.mxu0 0
  %1446 = vmatpush1.bf16.msra.mxu0 0
  %1447 = vmatprep.subr.bf16.mxu0 0
  %1448 = vmatpush1.bf16.msra.mxu0 0
  %1449 = vmatprep.subr.bf16.mxu0 0
  %1450 = vmatpush1.bf16.msra.mxu0 0
  %1451 = vmatprep.subr.bf16.mxu0 0
  %1452 = vmatpush1.bf16.msra.mxu0 0
  %1453 = vmatprep.subr.bf16.mxu0 0
  %1454 = vmatpush1.bf16.msra.mxu0 0
  %1455 = vmatprep.subr.bf16.mxu0 0
  %1456 = vmatpush1.bf16.msra.mxu0 0
  %1457 = vmatprep.subr.bf16.mxu0 0
  %1458 = vmatpush1.bf16.msra.mxu0 0
  %1459 = vmatprep.subr.bf16.mxu0 0
  %1460 = vmatpush1.bf16.msra.mxu0 0
  %1461 = vmatprep.mubr.bf16.mxu0 0
  %1462 = vmatmul.mubr.bf16.gmra.mrb[0].mxu0 %v1285
  %v1463 = vpop.f32.mrb[0].mxu0
  %v1464 = vadd.f32 %v1415, %v1463
  %v1465 = vpop.f32.mrb[0].mxu0
  %v1466 = vpop.f32.mrb[0].mxu0
  %v1467 = vadd.f32 %v1418, %v1466
  %v1468 = vpop.f32.mrb[0].mxu0
  %1469 = vmatprep.mubr.bf16.mxu0 0
  %1470 = vmatmul.mubr.bf16.gmra.mrb[0].mxu0 %v1290
  %v1471 = vpop.f32.mrb[0].mxu0
  %v1472 = vadd.f32 %v1423, %v1471
  %v1473 = vpop.f32.mrb[0].mxu0
  %v1474 = vpop.f32.mrb[0].mxu0
  %v1475 = vadd.f32 %v1426, %v1474
  %v1476 = vpop.f32.mrb[0].mxu0
  %1477 = vdwg.mxu0
  %v1478 = vadd.f32 %v1464, %v1467
  %v1479 = vadd.f32 %v1478, %v1472
  %v1480 = vadd.f32 %v1479, %v1475
  %v1481 = vrot.slane %v1480, 4
  %v1482 = vadd.f32 %v1480, %v1481
  %v1483 = vrot.slane %v1482, 2
  %v1484 = vadd.f32 %v1482, %v1483
  %v1485 = vrot.slane %v1484, 1
  %v1486 = vadd.f32 %v1484, %v1485
  %v1487 = vmul.f32 %v1464, %v1464
  %v1488 = vmul.f32 %v1467, %v1467
  %v1489 = vmul.f32 %v1472, %v1472
  %v1490 = vmul.f32 %v1475, %v1475
  %v1491 = vadd.f32 %v1487, %v1488
  %v1492 = vadd.f32 %v1491, %v1489
  %v1493 = vadd.f32 %v1492, %v1490
  %v1494 = vrot.slane %v1493, 4
  %v1495 = vadd.f32 %v1493, %v1494
  %v1496 = vrot.slane %v1495, 2
  %v1497 = vadd.f32 %v1495, %v1496
  %v1498 = vrot.slane %v1497, 1
  %v1499 = vadd.f32 %v1497, %v1498
  %v1500 = vsel %vm1145, %v1486, %v1499
  %1501 = vrot.lane.b32.xlu0 %v1500, 64
  %v1502 = vpop.permute.xlu0 %1501
  %v1503 = vadd.f32 %v1500, %v1502
  %1504 = vrot.lane.b32.xlu0 %v1503, 32
  %v1505 = vpop.permute.xlu0 %1504
  %v1506 = vadd.f32 %v1503, %v1505
  %1507 = vrot.lane.b32.xlu0 %v1506, 16
  %v1508 = vpop.permute.xlu0 %1507
  %v1509 = vadd.f32 %v1506, %v1508
  %1510 = vrot.lane.b32.xlu0 %v1509, 8
  %v1511 = vpop.permute.xlu0 %1510
  %v1512 = vadd.f32 %v1509, %v1511
  %v1513 = vmul.f32 %v1512, 0.001953125
  %v1514 = vmul.f32 %v1513, %v1513
  %v1516 = vrot.slane %v1514, 7
  %v1518 = vsub.f32 %v1513, %v1516
  %s1519 = scalar_lea.vmem %s5, 1
  %v1520 = vld [vmem:[%s1519] sm:$0x1]
  %v1521 = vadd.f32 %v1518, 1e-05
  %v1522 = vrsqrt.pop %v1521
  %v1525 = vunpack.c.l.s4 1966171168
  %v1526 = vunpack.c.0.s8 %v1525
  %v1527 = vlaneseq
  %v1528 = vshrl.u32 %v1527, 7
  %v1529 = vsub.s32 %v1526, %v1528
  %v1530 = vrot.slane %v1522, %v1529
  %v1531 = vcombine.high %v1530, %v1530
  %v1533 = vunpack.c.l.s4 1966171168
  %v1534 = vunpack.c.0.s8 %v1533
  %v1535 = vlaneseq
  %v1536 = vshrl.u32 %v1535, 7
  %v1537 = vsub.s32 %v1534, %v1536
  %v1538 = vrot.slane %v1531, %v1537
  %v1540 = vmul.f32 %v1520, %v1538
  %v1541 = vlaneseq
  %v1542 = vshrl.u32 %v1541, 7
  %v1543 = vsub.s32 0, %v1542
  %v1544 = vrot.slane %v1513, %v1543
  %v1545 = vsub.f32 %v1464, %v1544
  %v1546 = vsub.f32 %v1467, %v1544
  %v1547 = vsub.f32 %v1472, %v1544
  %v1548 = vsub.f32 %v1475, %v1544
  %v1550 = vlaneseq
  %v1551 = vshrl.u32 %v1550, 7
  %v1552 = vsub.s32 0, %v1551
  %v1553 = vrot.slane %v1540, %v1552
  %v1555 = vmul.f32 %v1545, %v1553
  %v1556 = vmul.f32 %v1546, %v1553
  %v1557 = vmul.f32 %v1547, %v1553
  %v1558 = vmul.f32 %v1548, %v1553
  %s1559 = scalar_lea.vmem %s6, 1
  %v1560 = vld [vmem:[%s1559] sm:$0x1]
  %v1562 = vlaneseq
  %v1563 = vshrl.u32 %v1562, 7
  %v1564 = vsub.s32 0, %v1563
  %v1565 = vrot.slane %v1560, %v1564
  %v1567 = vadd.f32 %v1555, %v1565
  %v1568 = vadd.f32 %v1556, %v1565
  %v1569 = vadd.f32 %v1557, %v1565
  %v1570 = vadd.f32 %v1558, %v1565
  %v1571 = vmax.f32 %v1215, %v1567
  %v1572 = vmax.f32 %v1216, %v1568
  %v1573 = vmax.f32 %v1217, %v1569
  %v1574 = vmax.f32 %v1218, %v1570
  %s1575 = sshll.u32 %s858, 4
  %1576 = dma.done %s274, %s1575
  %vm1577 = vcmp.gt.f32.partialorder %v1571, 0.0
  %vm1578 = vcmp.gt.f32.partialorder %v1572, 0.0
  %vm1579 = vcmp.gt.f32.partialorder %v1573, 0.0
  %vm1580 = vcmp.gt.f32.partialorder %v1574, 0.0
  %v1581 = vmul.f32 %v865, %v1571
  %v1582 = vmul.f32 %v865, %v1572
  %v1583 = vmul.f32 %v865, %v1573
  %v1584 = vmul.f32 %v865, %v1574
  %v1585 = vsel %vm1577, %v1571, %v1581
  %v1586 = vsel %vm1578, %v1572, %v1582
  %v1587 = vsel %vm1579, %v1573, %v1583
  %v1588 = vsel %vm1580, %v1574, %v1584
  %v1589 = vrot.slane %v1585, 6
  %v1590 = vrot.slane %v1586, 6
  %v1591 = vrot.slane %v1587, 6
  %v1592 = vrot.slane %v1588, 6
  %v1593 = vsel %vm878, %v1591, %v1592
  %v1594 = vsel %vm878, %v1590, %v1591
  %v1595 = vsel %vm878, %v1589, %v1590
  %v1596 = vsel %vm878, %v1592, %v1589
  %v1597 = vsel %vm805, %v1596, 0.0
  %v1598 = vsel %vm806, %v1595, 0.0
  %v1599 = vsel %vm807, %v1594, 0.0
  %v1600 = vsel %vm808, %v1593, 0.0
  %v1601 = vrot.slane %v1585, 7
  %v1602 = vrot.slane %v1586, 7
  %v1603 = vrot.slane %v1587, 7
  %v1604 = vrot.slane %v1588, 7
  %v1605 = vsel %vm891, %v1603, %v1604
  %v1606 = vsel %vm891, %v1602, %v1603
  %v1607 = vsel %vm891, %v1601, %v1602
  %v1608 = vsel %vm891, %v1604, %v1601
  %v1609 = vsel %vm821, %v1608, 0.0
  %v1610 = vsel %vm822, %v1607, 0.0
  %v1611 = vsel %vm823, %v1606, 0.0
  %v1612 = vsel %vm824, %v1605, 0.0
  %v1613 = vrot.slane %v1585, 1
  %v1614 = vrot.slane %v1586, 1
  %v1615 = vrot.slane %v1587, 1
  %v1616 = vrot.slane %v1588, 1
  %v1617 = vsel %vm904, %v1615, %v1616
  %v1618 = vsel %vm904, %v1614, %v1615
  %v1619 = vsel %vm904, %v1613, %v1614
  %v1620 = vsel %vm904, %v1616, %v1613
  %v1621 = vsel %vm837, %v1619, 0.0
  %v1622 = vsel %vm838, %v1618, 0.0
  %v1623 = vsel %vm839, %v1617, 0.0
  %v1624 = vsel %vm840, %v1620, 0.0
  %v1625 = vrot.slane %v1585, 2
  %v1626 = vrot.slane %v1586, 2
  %v1627 = vrot.slane %v1587, 2
  %v1628 = vrot.slane %v1588, 2
  %v1629 = vsel %vm917, %v1627, %v1628
  %v1630 = vsel %vm917, %v1626, %v1627
  %v1631 = vsel %vm917, %v1625, %v1626
  %v1632 = vsel %vm917, %v1628, %v1625
  %v1633 = vsel %vm853, %v1631, 0.0
  %v1634 = vsel %vm854, %v1630, 0.0
  %v1635 = vsel %vm855, %v1629, 0.0
  %v1636 = vsel %vm856, %v1632, 0.0
  %v1637 = vpack.c.bf16 %v1598, %v1597
  %v1638 = vpack.c.bf16 %v1610, %v1609
  %v1639 = vpack.c.bf16 %v1586, %v1585
  %v1640 = vpack.c.bf16 %v1622, %v1621
  %v1641 = vpack.c.bf16 %v1634, %v1633
  %v1642 = vpack.c.bf16 %v1600, %v1599
  %v1643 = vpack.c.bf16 %v1612, %v1611
  %v1644 = vpack.c.bf16 %v1588, %v1587
  %v1645 = vpack.c.bf16 %v1624, %v1623
  %v1646 = vpack.c.bf16 %v1636, %v1635
  %v1647 = vld [vmem:[%s273] sm:$0xff]
  %v1648 = vld [vmem:[%s273 + $0x8] sm:$0xff]
  %v1649 = vld [vmem:[%s273 + $0x10] sm:$0xff]
  %v1650 = vld [vmem:[%s273 + $0x18] sm:$0xff]
  %v1651 = vld [vmem:[%s273 + $0x20] sm:$0xff]
  %v1652 = vld [vmem:[%s273 + $0x28] sm:$0xff]
  %v1653 = vld [vmem:[%s273 + $0x30] sm:$0xff]
  %v1654 = vld [vmem:[%s273 + $0x38] sm:$0xff]
  %v1655 = vld [vmem:[%s273 + $0x40] sm:$0xff]
  %v1656 = vld [vmem:[%s273 + $0x48] sm:$0xff]
  %v1657 = vld [vmem:[%s273 + $0x50] sm:$0xff]
  %v1658 = vld [vmem:[%s273 + $0x58] sm:$0xff]
  %v1659 = vld [vmem:[%s273 + $0x60] sm:$0xff]
  %v1660 = vld [vmem:[%s273 + $0x68] sm:$0xff]
  %v1661 = vld [vmem:[%s273 + $0x70] sm:$0xff]
  %v1662 = vld [vmem:[%s273 + $0x78] sm:$0xff]
  %v1663 = vld [vmem:[%s273 + $0x80] sm:$0xff]
  %v1664 = vld [vmem:[%s273 + $0x88] sm:$0xff]
  %v1665 = vld [vmem:[%s273 + $0x90] sm:$0xff]
  %v1666 = vld [vmem:[%s273 + $0x98] sm:$0xff]
  %v1667 = vld [vmem:[%s273 + $0xa0] sm:$0xff]
  %v1668 = vld [vmem:[%s273 + $0xa8] sm:$0xff]
  %v1669 = vld [vmem:[%s273 + $0xb0] sm:$0xff]
  %v1670 = vld [vmem:[%s273 + $0xb8] sm:$0xff]
  %v1671 = vld [vmem:[%s273 + $0xc0] sm:$0xff]
  %v1672 = vld [vmem:[%s273 + $0xc8] sm:$0xff]
  %v1673 = vld [vmem:[%s273 + $0xd0] sm:$0xff]
  %v1674 = vld [vmem:[%s273 + $0xd8] sm:$0xff]
  %v1675 = vld [vmem:[%s273 + $0xe0] sm:$0xff]
  %v1676 = vld [vmem:[%s273 + $0xe8] sm:$0xff]
  %v1677 = vld [vmem:[%s273 + $0xf0] sm:$0xff]
  %v1678 = vld [vmem:[%s273 + $0xf8] sm:$0xff]
  %v1679 = vld [vmem:[%s273 + $0x100] sm:$0xff]
  %v1680 = vld [vmem:[%s273 + $0x108] sm:$0xff]
  %v1681 = vld [vmem:[%s273 + $0x110] sm:$0xff]
  %v1682 = vld [vmem:[%s273 + $0x118] sm:$0xff]
  %v1683 = vld [vmem:[%s273 + $0x120] sm:$0xff]
  %v1684 = vld [vmem:[%s273 + $0x128] sm:$0xff]
  %v1685 = vld [vmem:[%s273 + $0x130] sm:$0xff]
  %v1686 = vld [vmem:[%s273 + $0x138] sm:$0xff]
  %1687 = vmatprep.subr.bf16.mxu0 0
  %1688 = vmatpush1.bf16.msra.mxu0 %v1647
  %1689 = vmatprep.subr.bf16.mxu0 0
  %1690 = vmatpush1.bf16.msra.mxu0 %v1648
  %1691 = vmatprep.subr.bf16.mxu0 0
  %1692 = vmatpush1.bf16.msra.mxu0 %v1649
  %1693 = vmatprep.subr.bf16.mxu0 0
  %1694 = vmatpush1.bf16.msra.mxu0 %v1650
  %1695 = vmatprep.subr.bf16.mxu0 0
  %1696 = vmatpush1.bf16.msra.mxu0 %v1651
  %1697 = vmatprep.subr.bf16.mxu0 0
  %1698 = vmatpush1.bf16.msra.mxu0 %v1652
  %1699 = vmatprep.subr.bf16.mxu0 0
  %1700 = vmatpush1.bf16.msra.mxu0 %v1653
  %1701 = vmatprep.subr.bf16.mxu0 0
  %1702 = vmatpush1.bf16.msra.mxu0 %v1654
  %1703 = vmatprep.subr.bf16.mxu0 0
  %1704 = vmatpush1.bf16.msra.mxu0 %v1655
  %1705 = vmatprep.subr.bf16.mxu0 0
  %1706 = vmatpush1.bf16.msra.mxu0 %v1656
  %1707 = vmatprep.subr.bf16.mxu0 0
  %1708 = vmatpush1.bf16.msra.mxu0 %v1657
  %1709 = vmatprep.subr.bf16.mxu0 0
  %1710 = vmatpush1.bf16.msra.mxu0 %v1658
  %1711 = vmatprep.subr.bf16.mxu0 0
  %1712 = vmatpush1.bf16.msra.mxu0 %v1659
  %1713 = vmatprep.subr.bf16.mxu0 0
  %1714 = vmatpush1.bf16.msra.mxu0 %v1660
  %1715 = vmatprep.subr.bf16.mxu0 0
  %1716 = vmatpush1.bf16.msra.mxu0 %v1661
  %1717 = vmatprep.subr.bf16.mxu0 0
  %1718 = vmatpush1.bf16.msra.mxu0 %v1662
  %1719 = vmatprep.mubr.bf16.mxu0 %v1638
  %1720 = vmatmul.mubr.bf16.gmra.mrb[0].mxu0 %v1637
  %v1721 = vpop.f32.mrb[0].mxu0
  %v1722 = vadd.f32 0.0, %v1721
  %v1723 = vpop.f32.mrb[0].mxu0
  %v1724 = vpop.f32.mrb[0].mxu0
  %v1725 = vadd.f32 0.0, %v1724
  %v1726 = vpop.f32.mrb[0].mxu0
  %1727 = vmatprep.mubr.bf16.mxu0 %v1643
  %1728 = vmatmul.mubr.bf16.gmra.mrb[0].mxu0 %v1642
  %v1729 = vpop.f32.mrb[0].mxu0
  %v1730 = vadd.f32 0.0, %v1729
  %v1731 = vpop.f32.mrb[0].mxu0
  %v1732 = vpop.f32.mrb[0].mxu0
  %v1733 = vadd.f32 0.0, %v1732
  %v1734 = vpop.f32.mrb[0].mxu0
  %1735 = vdwg.mxu0
  %1736 = vmatprep.subr.bf16.mxu0 0
  %1737 = vmatpush1.bf16.msra.mxu0 %v1663
  %1738 = vmatprep.subr.bf16.mxu0 0
  %1739 = vmatpush1.bf16.msra.mxu0 %v1664
  %1740 = vmatprep.subr.bf16.mxu0 0
  %1741 = vmatpush1.bf16.msra.mxu0 %v1665
  %1742 = vmatprep.subr.bf16.mxu0 0
  %1743 = vmatpush1.bf16.msra.mxu0 %v1666
  %1744 = vmatprep.subr.bf16.mxu0 0
  %1745 = vmatpush1.bf16.msra.mxu0 %v1667
  %1746 = vmatprep.subr.bf16.mxu0 0
  %1747 = vmatpush1.bf16.msra.mxu0 %v1668
  %1748 = vmatprep.subr.bf16.mxu0 0
  %1749 = vmatpush1.bf16.msra.mxu0 %v1669
  %1750 = vmatprep.subr.bf16.mxu0 0
  %1751 = vmatpush1.bf16.msra.mxu0 %v1670
  %1752 = vmatprep.subr.bf16.mxu0 0
  %1753 = vmatpush1.bf16.msra.mxu0 %v1671
  %1754 = vmatprep.subr.bf16.mxu0 0
  %1755 = vmatpush1.bf16.msra.mxu0 %v1672
  %1756 = vmatprep.subr.bf16.mxu0 0
  %1757 = vmatpush1.bf16.msra.mxu0 %v1673
  %1758 = vmatprep.subr.bf16.mxu0 0
  %1759 = vmatpush1.bf16.msra.mxu0 %v1674
  %1760 = vmatprep.subr.bf16.mxu0 0
  %1761 = vmatpush1.bf16.msra.mxu0 %v1675
  %1762 = vmatprep.subr.bf16.mxu0 0
  %1763 = vmatpush1.bf16.msra.mxu0 %v1676
  %1764 = vmatprep.subr.bf16.mxu0 0
  %1765 = vmatpush1.bf16.msra.mxu0 %v1677
  %1766 = vmatprep.subr.bf16.mxu0 0
  %1767 = vmatpush1.bf16.msra.mxu0 %v1678
  %1768 = vmatprep.mubr.bf16.mxu0 %v1640
  %1769 = vmatmul.mubr.bf16.gmra.mrb[0].mxu0 %v1639
  %v1770 = vpop.f32.mrb[0].mxu0
  %v1771 = vadd.f32 %v1722, %v1770
  %v1772 = vpop.f32.mrb[0].mxu0
  %v1773 = vpop.f32.mrb[0].mxu0
  %v1774 = vadd.f32 %v1725, %v1773
  %v1775 = vpop.f32.mrb[0].mxu0
  %1776 = vmatprep.mubr.bf16.mxu0 %v1645
  %1777 = vmatmul.mubr.bf16.gmra.mrb[0].mxu0 %v1644
  %v1778 = vpop.f32.mrb[0].mxu0
  %v1779 = vadd.f32 %v1730, %v1778
  %v1780 = vpop.f32.mrb[0].mxu0
  %v1781 = vpop.f32.mrb[0].mxu0
  %v1782 = vadd.f32 %v1733, %v1781
  %v1783 = vpop.f32.mrb[0].mxu0
  %1784 = vdwg.mxu0
  %1785 = vmatprep.subr.bf16.mxu0 0
  %1786 = vmatpush1.bf16.msra.mxu0 %v1679
  %1787 = vmatprep.subr.bf16.mxu0 0
  %1788 = vmatpush1.bf16.msra.mxu0 %v1680
  %1789 = vmatprep.subr.bf16.mxu0 0
  %1790 = vmatpush1.bf16.msra.mxu0 %v1681
  %1791 = vmatprep.subr.bf16.mxu0 0
  %1792 = vmatpush1.bf16.msra.mxu0 %v1682
  %1793 = vmatprep.subr.bf16.mxu0 0
  %1794 = vmatpush1.bf16.msra.mxu0 %v1683
  %1795 = vmatprep.subr.bf16.mxu0 0
  %1796 = vmatpush1.bf16.msra.mxu0 %v1684
  %1797 = vmatprep.subr.bf16.mxu0 0
  %1798 = vmatpush1.bf16.msra.mxu0 %v1685
  %1799 = vmatprep.subr.bf16.mxu0 0
  %1800 = vmatpush1.bf16.msra.mxu0 %v1686
  %1801 = vmatprep.subr.bf16.mxu0 0
  %1802 = vmatpush1.bf16.msra.mxu0 0
  %1803 = vmatprep.subr.bf16.mxu0 0
  %1804 = vmatpush1.bf16.msra.mxu0 0
  %1805 = vmatprep.subr.bf16.mxu0 0
  %1806 = vmatpush1.bf16.msra.mxu0 0
  %1807 = vmatprep.subr.bf16.mxu0 0
  %1808 = vmatpush1.bf16.msra.mxu0 0
  %1809 = vmatprep.subr.bf16.mxu0 0
  %1810 = vmatpush1.bf16.msra.mxu0 0
  %1811 = vmatprep.subr.bf16.mxu0 0
  %1812 = vmatpush1.bf16.msra.mxu0 0
  %1813 = vmatprep.subr.bf16.mxu0 0
  %1814 = vmatpush1.bf16.msra.mxu0 0
  %1815 = vmatprep.subr.bf16.mxu0 0
  %1816 = vmatpush1.bf16.msra.mxu0 0
  %1817 = vmatprep.mubr.bf16.mxu0 0
  %1818 = vmatmul.mubr.bf16.gmra.mrb[0].mxu0 %v1641
  %v1819 = vpop.f32.mrb[0].mxu0
  %v1820 = vadd.f32 %v1771, %v1819
  %v1821 = vpop.f32.mrb[0].mxu0
  %v1822 = vpop.f32.mrb[0].mxu0
  %v1823 = vadd.f32 %v1774, %v1822
  %v1824 = vpop.f32.mrb[0].mxu0
  %1825 = vmatprep.mubr.bf16.mxu0 0
  %1826 = vmatmul.mubr.bf16.gmra.mrb[0].mxu0 %v1646
  %v1827 = vpop.f32.mrb[0].mxu0
  %v1828 = vadd.f32 %v1779, %v1827
  %v1829 = vpop.f32.mrb[0].mxu0
  %v1830 = vpop.f32.mrb[0].mxu0
  %v1831 = vadd.f32 %v1782, %v1830
  %v1832 = vpop.f32.mrb[0].mxu0
  %1833 = vdwg.mxu0
  %v1834 = vadd.f32 %v1820, %v1823
  %v1835 = vadd.f32 %v1834, %v1828
  %v1836 = vadd.f32 %v1835, %v1831
  %v1837 = vrot.slane %v1836, 4
  %v1838 = vadd.f32 %v1836, %v1837
  %v1839 = vrot.slane %v1838, 2
  %v1840 = vadd.f32 %v1838, %v1839
  %v1841 = vrot.slane %v1840, 1
  %v1842 = vadd.f32 %v1840, %v1841
  %v1843 = vmul.f32 %v1820, %v1820
  %v1844 = vmul.f32 %v1823, %v1823
  %v1845 = vmul.f32 %v1828, %v1828
  %v1846 = vmul.f32 %v1831, %v1831
  %v1847 = vadd.f32 %v1843, %v1844
  %v1848 = vadd.f32 %v1847, %v1845
  %v1849 = vadd.f32 %v1848, %v1846
  %v1850 = vrot.slane %v1849, 4
  %v1851 = vadd.f32 %v1849, %v1850
  %v1852 = vrot.slane %v1851, 2
  %v1853 = vadd.f32 %v1851, %v1852
  %v1854 = vrot.slane %v1853, 1
  %v1855 = vadd.f32 %v1853, %v1854
  %v1856 = vsel %vm1145, %v1842, %v1855
  %1857 = vrot.lane.b32.xlu0 %v1856, 64
  %v1858 = vpop.permute.xlu0 %1857
  %v1859 = vadd.f32 %v1856, %v1858
  %1860 = vrot.lane.b32.xlu0 %v1859, 32
  %v1861 = vpop.permute.xlu0 %1860
  %v1862 = vadd.f32 %v1859, %v1861
  %1863 = vrot.lane.b32.xlu0 %v1862, 16
  %v1864 = vpop.permute.xlu0 %1863
  %v1865 = vadd.f32 %v1862, %v1864
  %1866 = vrot.lane.b32.xlu0 %v1865, 8
  %v1867 = vpop.permute.xlu0 %1866
  %v1868 = vadd.f32 %v1865, %v1867
  %v1869 = vmul.f32 %v1868, 0.001953125
  %v1870 = vmul.f32 %v1869, %v1869
  %v1872 = vrot.slane %v1870, 7
  %v1874 = vsub.f32 %v1869, %v1872
  %s1875 = scalar_lea.vmem %s5, 2
  %v1876 = vld [vmem:[%s1875] sm:$0x1]
  %v1877 = vadd.f32 %v1874, 1e-05
  %v1878 = vrsqrt.pop %v1877
  %v1881 = vunpack.c.l.s4 1966171168
  %v1882 = vunpack.c.0.s8 %v1881
  %v1883 = vlaneseq
  %v1884 = vshrl.u32 %v1883, 7
  %v1885 = vsub.s32 %v1882, %v1884
  %v1886 = vrot.slane %v1878, %v1885
  %v1887 = vcombine.high %v1886, %v1886
  %v1889 = vunpack.c.l.s4 1966171168
  %v1890 = vunpack.c.0.s8 %v1889
  %v1891 = vlaneseq
  %v1892 = vshrl.u32 %v1891, 7
  %v1893 = vsub.s32 %v1890, %v1892
  %v1894 = vrot.slane %v1887, %v1893
  %v1896 = vmul.f32 %v1876, %v1894
  %v1897 = vlaneseq
  %v1898 = vshrl.u32 %v1897, 7
  %v1899 = vsub.s32 0, %v1898
  %v1900 = vrot.slane %v1869, %v1899
  %v1901 = vsub.f32 %v1820, %v1900
  %v1902 = vsub.f32 %v1823, %v1900
  %v1903 = vsub.f32 %v1828, %v1900
  %v1904 = vsub.f32 %v1831, %v1900
  %v1906 = vlaneseq
  %v1907 = vshrl.u32 %v1906, 7
  %v1908 = vsub.s32 0, %v1907
  %v1909 = vrot.slane %v1896, %v1908
  %v1911 = vmul.f32 %v1901, %v1909
  %v1912 = vmul.f32 %v1902, %v1909
  %v1913 = vmul.f32 %v1903, %v1909
  %v1914 = vmul.f32 %v1904, %v1909
  %s1915 = scalar_lea.vmem %s6, 2
  %v1916 = vld [vmem:[%s1915] sm:$0x1]
  %v1918 = vlaneseq
  %v1919 = vshrl.u32 %v1918, 7
  %v1920 = vsub.s32 0, %v1919
  %v1921 = vrot.slane %v1916, %v1920
  %v1923 = vadd.f32 %v1911, %v1921
  %v1924 = vadd.f32 %v1912, %v1921
  %v1925 = vadd.f32 %v1913, %v1921
  %v1926 = vadd.f32 %v1914, %v1921
  %v1927 = vmax.f32 %v1571, %v1923
  %v1928 = vmax.f32 %v1572, %v1924
  %v1929 = vmax.f32 %v1573, %v1925
  %v1930 = vmax.f32 %v1574, %v1926
  %s1931 = sshll.u32 %s858, 4
  %1932 = dma.done %s397, %s1931
  %vm1933 = vcmp.gt.f32.partialorder %v1927, 0.0
  %vm1934 = vcmp.gt.f32.partialorder %v1928, 0.0
  %vm1935 = vcmp.gt.f32.partialorder %v1929, 0.0
  %vm1936 = vcmp.gt.f32.partialorder %v1930, 0.0
  %v1937 = vmul.f32 %v865, %v1927
  %v1938 = vmul.f32 %v865, %v1928
  %v1939 = vmul.f32 %v865, %v1929
  %v1940 = vmul.f32 %v865, %v1930
  %v1941 = vsel %vm1933, %v1927, %v1937
  %v1942 = vsel %vm1934, %v1928, %v1938
  %v1943 = vsel %vm1935, %v1929, %v1939
  %v1944 = vsel %vm1936, %v1930, %v1940
  %v1945 = vrot.slane %v1941, 6
  %v1946 = vrot.slane %v1942, 6
  %v1947 = vrot.slane %v1943, 6
  %v1948 = vrot.slane %v1944, 6
  %v1949 = vsel %vm878, %v1947, %v1948
  %v1950 = vsel %vm878, %v1946, %v1947
  %v1951 = vsel %vm878, %v1945, %v1946
  %v1952 = vsel %vm878, %v1948, %v1945
  %v1953 = vsel %vm805, %v1952, 0.0
  %v1954 = vsel %vm806, %v1951, 0.0
  %v1955 = vsel %vm807, %v1950, 0.0
  %v1956 = vsel %vm808, %v1949, 0.0
  %v1957 = vrot.slane %v1941, 7
  %v1958 = vrot.slane %v1942, 7
  %v1959 = vrot.slane %v1943, 7
  %v1960 = vrot.slane %v1944, 7
  %v1961 = vsel %vm891, %v1959, %v1960
  %v1962 = vsel %vm891, %v1958, %v1959
  %v1963 = vsel %vm891, %v1957, %v1958
  %v1964 = vsel %vm891, %v1960, %v1957
  %v1965 = vsel %vm821, %v1964, 0.0
  %v1966 = vsel %vm822, %v1963, 0.0
  %v1967 = vsel %vm823, %v1962, 0.0
  %v1968 = vsel %vm824, %v1961, 0.0
  %v1969 = vrot.slane %v1941, 1
  %v1970 = vrot.slane %v1942, 1
  %v1971 = vrot.slane %v1943, 1
  %v1972 = vrot.slane %v1944, 1
  %v1973 = vsel %vm904, %v1971, %v1972
  %v1974 = vsel %vm904, %v1970, %v1971
  %v1975 = vsel %vm904, %v1969, %v1970
  %v1976 = vsel %vm904, %v1972, %v1969
  %v1977 = vsel %vm837, %v1975, 0.0
  %v1978 = vsel %vm838, %v1974, 0.0
  %v1979 = vsel %vm839, %v1973, 0.0
  %v1980 = vsel %vm840, %v1976, 0.0
  %v1981 = vrot.slane %v1941, 2
  %v1982 = vrot.slane %v1942, 2
  %v1983 = vrot.slane %v1943, 2
  %v1984 = vrot.slane %v1944, 2
  %v1985 = vsel %vm917, %v1983, %v1984
  %v1986 = vsel %vm917, %v1982, %v1983
  %v1987 = vsel %vm917, %v1981, %v1982
  %v1988 = vsel %vm917, %v1984, %v1981
  %v1989 = vsel %vm853, %v1987, 0.0
  %v1990 = vsel %vm854, %v1986, 0.0
  %v1991 = vsel %vm855, %v1985, 0.0
  %v1992 = vsel %vm856, %v1988, 0.0
  %v1993 = vpack.c.bf16 %v1954, %v1953
  %v1994 = vpack.c.bf16 %v1966, %v1965
  %v1995 = vpack.c.bf16 %v1942, %v1941
  %v1996 = vpack.c.bf16 %v1978, %v1977
  %v1997 = vpack.c.bf16 %v1990, %v1989
  %v1998 = vpack.c.bf16 %v1956, %v1955
  %v1999 = vpack.c.bf16 %v1968, %v1967
  %v2000 = vpack.c.bf16 %v1944, %v1943
  %v2001 = vpack.c.bf16 %v1980, %v1979
  %v2002 = vpack.c.bf16 %v1992, %v1991
  %v2003 = vld [vmem:[%s396] sm:$0xff]
  %v2004 = vld [vmem:[%s396 + $0x8] sm:$0xff]
  %v2005 = vld [vmem:[%s396 + $0x10] sm:$0xff]
  %v2006 = vld [vmem:[%s396 + $0x18] sm:$0xff]
  %v2007 = vld [vmem:[%s396 + $0x20] sm:$0xff]
  %v2008 = vld [vmem:[%s396 + $0x28] sm:$0xff]
  %v2009 = vld [vmem:[%s396 + $0x30] sm:$0xff]
  %v2010 = vld [vmem:[%s396 + $0x38] sm:$0xff]
  %v2011 = vld [vmem:[%s396 + $0x40] sm:$0xff]
  %v2012 = vld [vmem:[%s396 + $0x48] sm:$0xff]
  %v2013 = vld [vmem:[%s396 + $0x50] sm:$0xff]
  %v2014 = vld [vmem:[%s396 + $0x58] sm:$0xff]
  %v2015 = vld [vmem:[%s396 + $0x60] sm:$0xff]
  %v2016 = vld [vmem:[%s396 + $0x68] sm:$0xff]
  %v2017 = vld [vmem:[%s396 + $0x70] sm:$0xff]
  %v2018 = vld [vmem:[%s396 + $0x78] sm:$0xff]
  %v2019 = vld [vmem:[%s396 + $0x80] sm:$0xff]
  %v2020 = vld [vmem:[%s396 + $0x88] sm:$0xff]
  %v2021 = vld [vmem:[%s396 + $0x90] sm:$0xff]
  %v2022 = vld [vmem:[%s396 + $0x98] sm:$0xff]
  %v2023 = vld [vmem:[%s396 + $0xa0] sm:$0xff]
  %v2024 = vld [vmem:[%s396 + $0xa8] sm:$0xff]
  %v2025 = vld [vmem:[%s396 + $0xb0] sm:$0xff]
  %v2026 = vld [vmem:[%s396 + $0xb8] sm:$0xff]
  %v2027 = vld [vmem:[%s396 + $0xc0] sm:$0xff]
  %v2028 = vld [vmem:[%s396 + $0xc8] sm:$0xff]
  %v2029 = vld [vmem:[%s396 + $0xd0] sm:$0xff]
  %v2030 = vld [vmem:[%s396 + $0xd8] sm:$0xff]
  %v2031 = vld [vmem:[%s396 + $0xe0] sm:$0xff]
  %v2032 = vld [vmem:[%s396 + $0xe8] sm:$0xff]
  %v2033 = vld [vmem:[%s396 + $0xf0] sm:$0xff]
  %v2034 = vld [vmem:[%s396 + $0xf8] sm:$0xff]
  %v2035 = vld [vmem:[%s396 + $0x100] sm:$0xff]
  %v2036 = vld [vmem:[%s396 + $0x108] sm:$0xff]
  %v2037 = vld [vmem:[%s396 + $0x110] sm:$0xff]
  %v2038 = vld [vmem:[%s396 + $0x118] sm:$0xff]
  %v2039 = vld [vmem:[%s396 + $0x120] sm:$0xff]
  %v2040 = vld [vmem:[%s396 + $0x128] sm:$0xff]
  %v2041 = vld [vmem:[%s396 + $0x130] sm:$0xff]
  %v2042 = vld [vmem:[%s396 + $0x138] sm:$0xff]
  %2043 = vmatprep.subr.bf16.mxu0 0
  %2044 = vmatpush1.bf16.msra.mxu0 %v2003
  %2045 = vmatprep.subr.bf16.mxu0 0
  %2046 = vmatpush1.bf16.msra.mxu0 %v2004
  %2047 = vmatprep.subr.bf16.mxu0 0
  %2048 = vmatpush1.bf16.msra.mxu0 %v2005
  %2049 = vmatprep.subr.bf16.mxu0 0
  %2050 = vmatpush1.bf16.msra.mxu0 %v2006
  %2051 = vmatprep.subr.bf16.mxu0 0
  %2052 = vmatpush1.bf16.msra.mxu0 %v2007
  %2053 = vmatprep.subr.bf16.mxu0 0
  %2054 = vmatpush1.bf16.msra.mxu0 %v2008
  %2055 = vmatprep.subr.bf16.mxu0 0
  %2056 = vmatpush1.bf16.msra.mxu0 %v2009
  %2057 = vmatprep.subr.bf16.mxu0 0
  %2058 = vmatpush1.bf16.msra.mxu0 %v2010
  %2059 = vmatprep.subr.bf16.mxu0 0
  %2060 = vmatpush1.bf16.msra.mxu0 %v2011
  %2061 = vmatprep.subr.bf16.mxu0 0
  %2062 = vmatpush1.bf16.msra.mxu0 %v2012
  %2063 = vmatprep.subr.bf16.mxu0 0
  %2064 = vmatpush1.bf16.msra.mxu0 %v2013
  %2065 = vmatprep.subr.bf16.mxu0 0
  %2066 = vmatpush1.bf16.msra.mxu0 %v2014
  %2067 = vmatprep.subr.bf16.mxu0 0
  %2068 = vmatpush1.bf16.msra.mxu0 %v2015
  %2069 = vmatprep.subr.bf16.mxu0 0
  %2070 = vmatpush1.bf16.msra.mxu0 %v2016
  %2071 = vmatprep.subr.bf16.mxu0 0
  %2072 = vmatpush1.bf16.msra.mxu0 %v2017
  %2073 = vmatprep.subr.bf16.mxu0 0
  %2074 = vmatpush1.bf16.msra.mxu0 %v2018
  %2075 = vmatprep.mubr.bf16.mxu0 %v1994
  %2076 = vmatmul.mubr.bf16.gmra.mrb[0].mxu0 %v1993
  %v2077 = vpop.f32.mrb[0].mxu0
  %v2078 = vadd.f32 0.0, %v2077
  %v2079 = vpop.f32.mrb[0].mxu0
  %v2080 = vpop.f32.mrb[0].mxu0
  %v2081 = vadd.f32 0.0, %v2080
  %v2082 = vpop.f32.mrb[0].mxu0
  %2083 = vmatprep.mubr.bf16.mxu0 %v1999
  %2084 = vmatmul.mubr.bf16.gmra.mrb[0].mxu0 %v1998
  %v2085 = vpop.f32.mrb[0].mxu0
  %v2086 = vadd.f32 0.0, %v2085
  %v2087 = vpop.f32.mrb[0].mxu0
  %v2088 = vpop.f32.mrb[0].mxu0
  %v2089 = vadd.f32 0.0, %v2088
  %v2090 = vpop.f32.mrb[0].mxu0
  %2091 = vdwg.mxu0
  %2092 = vmatprep.subr.bf16.mxu0 0
  %2093 = vmatpush1.bf16.msra.mxu0 %v2019
  %2094 = vmatprep.subr.bf16.mxu0 0
  %2095 = vmatpush1.bf16.msra.mxu0 %v2020
  %2096 = vmatprep.subr.bf16.mxu0 0
  %2097 = vmatpush1.bf16.msra.mxu0 %v2021
  %2098 = vmatprep.subr.bf16.mxu0 0
  %2099 = vmatpush1.bf16.msra.mxu0 %v2022
  %2100 = vmatprep.subr.bf16.mxu0 0
  %2101 = vmatpush1.bf16.msra.mxu0 %v2023
  %2102 = vmatprep.subr.bf16.mxu0 0
  %2103 = vmatpush1.bf16.msra.mxu0 %v2024
  %2104 = vmatprep.subr.bf16.mxu0 0
  %2105 = vmatpush1.bf16.msra.mxu0 %v2025
  %2106 = vmatprep.subr.bf16.mxu0 0
  %2107 = vmatpush1.bf16.msra.mxu0 %v2026
  %2108 = vmatprep.subr.bf16.mxu0 0
  %2109 = vmatpush1.bf16.msra.mxu0 %v2027
  %2110 = vmatprep.subr.bf16.mxu0 0
  %2111 = vmatpush1.bf16.msra.mxu0 %v2028
  %2112 = vmatprep.subr.bf16.mxu0 0
  %2113 = vmatpush1.bf16.msra.mxu0 %v2029
  %2114 = vmatprep.subr.bf16.mxu0 0
  %2115 = vmatpush1.bf16.msra.mxu0 %v2030
  %2116 = vmatprep.subr.bf16.mxu0 0
  %2117 = vmatpush1.bf16.msra.mxu0 %v2031
  %2118 = vmatprep.subr.bf16.mxu0 0
  %2119 = vmatpush1.bf16.msra.mxu0 %v2032
  %2120 = vmatprep.subr.bf16.mxu0 0
  %2121 = vmatpush1.bf16.msra.mxu0 %v2033
  %2122 = vmatprep.subr.bf16.mxu0 0
  %2123 = vmatpush1.bf16.msra.mxu0 %v2034
  %2124 = vmatprep.mubr.bf16.mxu0 %v1996
  %2125 = vmatmul.mubr.bf16.gmra.mrb[0].mxu0 %v1995
  %v2126 = vpop.f32.mrb[0].mxu0
  %v2127 = vadd.f32 %v2078, %v2126
  %v2128 = vpop.f32.mrb[0].mxu0
  %v2129 = vpop.f32.mrb[0].mxu0
  %v2130 = vadd.f32 %v2081, %v2129
  %v2131 = vpop.f32.mrb[0].mxu0
  %2132 = vmatprep.mubr.bf16.mxu0 %v2001
  %2133 = vmatmul.mubr.bf16.gmra.mrb[0].mxu0 %v2000
  %v2134 = vpop.f32.mrb[0].mxu0
  %v2135 = vadd.f32 %v2086, %v2134
  %v2136 = vpop.f32.mrb[0].mxu0
  %v2137 = vpop.f32.mrb[0].mxu0
  %v2138 = vadd.f32 %v2089, %v2137
  %v2139 = vpop.f32.mrb[0].mxu0
  %2140 = vdwg.mxu0
  %2141 = vmatprep.subr.bf16.mxu0 0
  %2142 = vmatpush1.bf16.msra.mxu0 %v2035
  %2143 = vmatprep.subr.bf16.mxu0 0
  %2144 = vmatpush1.bf16.msra.mxu0 %v2036
  %2145 = vmatprep.subr.bf16.mxu0 0
  %2146 = vmatpush1.bf16.msra.mxu0 %v2037
  %2147 = vmatprep.subr.bf16.mxu0 0
  %2148 = vmatpush1.bf16.msra.mxu0 %v2038
  %2149 = vmatprep.subr.bf16.mxu0 0
  %2150 = vmatpush1.bf16.msra.mxu0 %v2039
  %2151 = vmatprep.subr.bf16.mxu0 0
  %2152 = vmatpush1.bf16.msra.mxu0 %v2040
  %2153 = vmatprep.subr.bf16.mxu0 0
  %2154 = vmatpush1.bf16.msra.mxu0 %v2041
  %2155 = vmatprep.subr.bf16.mxu0 0
  %2156 = vmatpush1.bf16.msra.mxu0 %v2042
  %2157 = vmatprep.subr.bf16.mxu0 0
  %2158 = vmatpush1.bf16.msra.mxu0 0
  %2159 = vmatprep.subr.bf16.mxu0 0
  %2160 = vmatpush1.bf16.msra.mxu0 0
  %2161 = vmatprep.subr.bf16.mxu0 0
  %2162 = vmatpush1.bf16.msra.mxu0 0
  %2163 = vmatprep.subr.bf16.mxu0 0
  %2164 = vmatpush1.bf16.msra.mxu0 0
  %2165 = vmatprep.subr.bf16.mxu0 0
  %2166 = vmatpush1.bf16.msra.mxu0 0
  %2167 = vmatprep.subr.bf16.mxu0 0
  %2168 = vmatpush1.bf16.msra.mxu0 0
  %2169 = vmatprep.subr.bf16.mxu0 0
  %2170 = vmatpush1.bf16.msra.mxu0 0
  %2171 = vmatprep.subr.bf16.mxu0 0
  %2172 = vmatpush1.bf16.msra.mxu0 0
  %2173 = vmatprep.mubr.bf16.mxu0 0
  %2174 = vmatmul.mubr.bf16.gmra.mrb[0].mxu0 %v1997
  %v2175 = vpop.f32.mrb[0].mxu0
  %v2176 = vadd.f32 %v2127, %v2175
  %v2177 = vpop.f32.mrb[0].mxu0
  %v2178 = vpop.f32.mrb[0].mxu0
  %v2179 = vadd.f32 %v2130, %v2178
  %v2180 = vpop.f32.mrb[0].mxu0
  %2181 = vmatprep.mubr.bf16.mxu0 0
  %2182 = vmatmul.mubr.bf16.gmra.mrb[0].mxu0 %v2002
  %v2183 = vpop.f32.mrb[0].mxu0
  %v2184 = vadd.f32 %v2135, %v2183
  %v2185 = vpop.f32.mrb[0].mxu0
  %v2186 = vpop.f32.mrb[0].mxu0
  %v2187 = vadd.f32 %v2138, %v2186
  %v2188 = vpop.f32.mrb[0].mxu0
  %2189 = vdwg.mxu0
  %v2190 = vadd.f32 %v2176, %v2179
  %v2191 = vadd.f32 %v2190, %v2184
  %v2192 = vadd.f32 %v2191, %v2187
  %v2193 = vrot.slane %v2192, 4
  %v2194 = vadd.f32 %v2192, %v2193
  %v2195 = vrot.slane %v2194, 2
  %v2196 = vadd.f32 %v2194, %v2195
  %v2197 = vrot.slane %v2196, 1
  %v2198 = vadd.f32 %v2196, %v2197
  %v2199 = vmul.f32 %v2176, %v2176
  %v2200 = vmul.f32 %v2179, %v2179
  %v2201 = vmul.f32 %v2184, %v2184
  %v2202 = vmul.f32 %v2187, %v2187
  %v2203 = vadd.f32 %v2199, %v2200
  %v2204 = vadd.f32 %v2203, %v2201
  %v2205 = vadd.f32 %v2204, %v2202
  %v2206 = vrot.slane %v2205, 4
  %v2207 = vadd.f32 %v2205, %v2206
  %v2208 = vrot.slane %v2207, 2
  %v2209 = vadd.f32 %v2207, %v2208
  %v2210 = vrot.slane %v2209, 1
  %v2211 = vadd.f32 %v2209, %v2210
  %v2212 = vsel %vm1145, %v2198, %v2211
  %2213 = vrot.lane.b32.xlu0 %v2212, 64
  %v2214 = vpop.permute.xlu0 %2213
  %v2215 = vadd.f32 %v2212, %v2214
  %2216 = vrot.lane.b32.xlu0 %v2215, 32
  %v2217 = vpop.permute.xlu0 %2216
  %v2218 = vadd.f32 %v2215, %v2217
  %2219 = vrot.lane.b32.xlu0 %v2218, 16
  %v2220 = vpop.permute.xlu0 %2219
  %v2221 = vadd.f32 %v2218, %v2220
  %2222 = vrot.lane.b32.xlu0 %v2221, 8
  %v2223 = vpop.permute.xlu0 %2222
  %v2224 = vadd.f32 %v2221, %v2223
  %v2225 = vmul.f32 %v2224, 0.001953125
  %v2226 = vmul.f32 %v2225, %v2225
  %v2228 = vrot.slane %v2226, 7
  %v2230 = vsub.f32 %v2225, %v2228
  %s2231 = scalar_lea.vmem %s5, 3
  %v2232 = vld [vmem:[%s2231] sm:$0x1]
  %v2233 = vadd.f32 %v2230, 1e-05
  %v2234 = vrsqrt.pop %v2233
  %v2237 = vunpack.c.l.s4 1966171168
  %v2238 = vunpack.c.0.s8 %v2237
  %v2239 = vlaneseq
  %v2240 = vshrl.u32 %v2239, 7
  %v2241 = vsub.s32 %v2238, %v2240
  %v2242 = vrot.slane %v2234, %v2241
  %v2243 = vcombine.high %v2242, %v2242
  %v2245 = vunpack.c.l.s4 1966171168
  %v2246 = vunpack.c.0.s8 %v2245
  %v2247 = vlaneseq
  %v2248 = vshrl.u32 %v2247, 7
  %v2249 = vsub.s32 %v2246, %v2248
  %v2250 = vrot.slane %v2243, %v2249
  %v2252 = vmul.f32 %v2232, %v2250
  %v2253 = vlaneseq
  %v2254 = vshrl.u32 %v2253, 7
  %v2255 = vsub.s32 0, %v2254
  %v2256 = vrot.slane %v2225, %v2255
  %v2257 = vsub.f32 %v2176, %v2256
  %v2258 = vsub.f32 %v2179, %v2256
  %v2259 = vsub.f32 %v2184, %v2256
  %v2260 = vsub.f32 %v2187, %v2256
  %v2262 = vlaneseq
  %v2263 = vshrl.u32 %v2262, 7
  %v2264 = vsub.s32 0, %v2263
  %v2265 = vrot.slane %v2252, %v2264
  %v2267 = vmul.f32 %v2257, %v2265
  %v2268 = vmul.f32 %v2258, %v2265
  %v2269 = vmul.f32 %v2259, %v2265
  %v2270 = vmul.f32 %v2260, %v2265
  %s2271 = scalar_lea.vmem %s6, 3
  %v2272 = vld [vmem:[%s2271] sm:$0x1]
  %v2274 = vlaneseq
  %v2275 = vshrl.u32 %v2274, 7
  %v2276 = vsub.s32 0, %v2275
  %v2277 = vrot.slane %v2272, %v2276
  %v2279 = vadd.f32 %v2267, %v2277
  %v2280 = vadd.f32 %v2268, %v2277
  %v2281 = vadd.f32 %v2269, %v2277
  %v2282 = vadd.f32 %v2270, %v2277
  %2283 = vst [vmem:[%s8] sm:$0xff] %v2279
  %2284 = vst [vmem:[%s8 + $0x8] sm:$0xff] %v2280
  %2285 = vst [vmem:[%s8 + $0x10] sm:$0xff] %v2281
  %2286 = vst [vmem:[%s8 + $0x18] sm:$0xff] %v2282
  // Predicated region
  $region166: #{competitive_decoder_block.1} parent=0 // pred_check
    _
  $region167: #{competitive_decoder_block.1} parent=0 // pred_check_branch
    %2288 = sbr.rel (0) target = $region169
  $region168: #{competitive_decoder_block.1} parent=0 // pred_region
    _
  $region169: #{competitive_decoder_block.1} parent=0 // pred_fallthru
    _
  // Predicated region
  $region170: #{competitive_decoder_block.1} parent=0 // pred_check
    _
  $region171: #{competitive_decoder_block.1} parent=0 // pred_check_branch
    %2290 = sbr.rel (0) target = $region173
  $region172: #{competitive_decoder_block.1} parent=0 // pred_region
    _
  $region173: #{competitive_decoder_block.1} parent=0 // pred_fallthru
    _
  %2291 = vsyncmov [#allocation3]
  %s2292 = vpop.sfrf %2291
  %p2293 = scmp.eq.s32.totalorder %s2292, 0
  %p2294 = pneg %p2293
  %2296 = shalt.err (%p2294)
  %s2297 = scalar_lea.sflag [#allocation3], 1
  %2298 = vsyncmov %s2297
  %s2299 = vpop.sfrf %2298
  %p2300 = scmp.eq.s32.totalorder %s2299, 0
  %p2301 = pneg %p2300
  %2303 = shalt.err (%p2301)
  %s2304 = scalar_lea.sflag [#allocation3], 2
  %2305 = vsyncmov %s2304
  %s2306 = vpop.sfrf %2305
  %p2307 = scmp.eq.s32.totalorder %s2306, 0
  %p2308 = pneg %p2307
  %2310 = shalt.err (%p2308)
  %s2311 = scalar_lea.sflag [#allocation3], 3
  %2312 = vsyncmov %s2311
  %s2313 = vpop.sfrf %2312
  %p2314 = scmp.eq.s32.totalorder %s2313, 0
  %p2315 = pneg %p2314
  %2317 = shalt.err (%p2315)

</llo_original>
